<compile_context>
chip_gen: v7x
topology: tpu7x:2x2x1
jax: 0.10.0
libtpu: 0.0.40
codegen_flags: <defaults>
</compile_context>

<pallas_src>
import jax
import jax.numpy as jnp
from jax.experimental import pallas as pl
from jax.experimental.pallas import tpu as pltpu

INV_SQRT2 = 0.7071067811865475
LN_EPS = 1e-5


def _round_up(x, m):
    return ((x + m - 1) // m) * m


def mlp_proj_kernel(x_ref, w1_ref, b1_ref, w2_ref, b2_ref, g_ref, beta_ref, o_ref):
    # Linear 1 (clip_dim -> clip_dim): low-precision MXU inputs, f32 accumulation.
    h = jnp.dot(x_ref[...], w1_ref[...], preferred_element_type=jnp.float32)
    h = h + b1_ref[...].astype(jnp.float32)

    # Exact (erf-based) GELU -- matches torch.nn.GELU() default numerics.
    h = 0.5 * h * (1.0 + jax.lax.erf(h * INV_SQRT2))

    # Linear 2 (clip_dim -> cross_dim): cast activations down to weight dtype for the MXU.
    y = jnp.dot(h.astype(w2_ref.dtype), w2_ref[...], preferred_element_type=jnp.float32)
    y = y + b2_ref[...].astype(jnp.float32)

    # LayerNorm over the last (lane) dim, eps=1e-5 -- two-pass (centered) variance in f32.
    mean = jnp.mean(y, axis=-1, keepdims=True)
    yc = y - mean
    var = jnp.mean(yc * yc, axis=-1, keepdims=True)
    y = yc * jax.lax.rsqrt(var + LN_EPS)
    y = y * g_ref[...].astype(jnp.float32) + beta_ref[...].astype(jnp.float32)

    o_ref[...] = y.astype(o_ref.dtype)


def _vmem_estimate_bytes(tile_m, clip_dim, cross_dim, x_dt, p_dt, out_dt,
                         weight_bufs, stream_bufs):
    isz = lambda dt: jnp.dtype(dt).itemsize
    resident = weight_bufs * (
        clip_dim * clip_dim * isz(p_dt)            # W1
        + clip_dim * cross_dim * isz(p_dt)          # W2
        + 8 * (clip_dim + 3 * cross_dim) * isz(p_dt)  # b1,b2,gamma,beta (sublane-padded)
    )
    streamed = stream_bufs * tile_m * (clip_dim * isz(x_dt) + cross_dim * isz(out_dt))
    temps = 3 * tile_m * (clip_dim + cross_dim) * 4  # f32 intermediates (h, y, centered copy)
    return resident + streamed + temps


def mlp_proj(image_embeds, w1, b1, w2, b2, gamma, beta, *, block_m=512,
             out_dtype=None, vmem_budget_bytes=44 << 20):
    B, clip_dim = image_embeds.shape
    cross_dim = w2.shape[1]
    assert w1.shape == (clip_dim, clip_dim) and w2.shape[0] == clip_dim
    # Keep feature dims lane-dense (multiples of 128) so loads/stores are unmasked vld/vst.
    assert clip_dim % 128 == 0 and cross_dim % 128 == 0, "feature dims must be multiples of 128"
    if out_dtype is None:
        out_dtype = image_embeds.dtype  # default bf16-ish output halves HBM writeback

    x_dt, p_dt = image_embeds.dtype, w1.dtype

    # Batch tile: large (amortize per-step overhead + MXU RHS re-staging), sublane-aligned (x8),
    # capped so the grid has at least 2 steps (v7x dual-TC megacore sharding of "parallel" axis).
    tile_m = _round_up(min(block_m, max(pl.cdiv(B, 2), 1)), 8)
    # Shrink if the VMEM footprint would exceed the per-core budget (v7x: 64 MiB physical / TC).
    while tile_m > 8 and _vmem_estimate_bytes(tile_m, clip_dim, cross_dim, x_dt, p_dt,
                                              out_dtype, 1, 2) > vmem_budget_bytes:
        tile_m = _round_up(tile_m // 2, 8)
    grid = (pl.cdiv(B, tile_m),)

    def resident(shape, bufs):
        # Constant index_map -> block stays VMEM-resident across all grid steps.
        if bufs is None:
            return pl.BlockSpec(shape, lambda i: (0,) * len(shape))
        return pl.BlockSpec(shape, lambda i: (0,) * len(shape),
                            pipeline_mode=pl.Buffered(bufs))

    def build(weight_bufs):
        est = _vmem_estimate_bytes(tile_m, clip_dim, cross_dim, x_dt, p_dt, out_dtype,
                                   1 if weight_bufs else 2, 2)
        vmem_limit = min(max(int(est * 1.5) + (8 << 20), 16 << 20), 60 << 20)
        return pl.pallas_call(
            mlp_proj_kernel,
            out_shape=jax.ShapeDtypeStruct((B, cross_dim), out_dtype),
            grid=grid,
            in_specs=[
                pl.BlockSpec((tile_m, clip_dim), lambda i: (i, 0)),  # x streams over batch tiles
                resident((clip_dim, clip_dim), weight_bufs),         # W1
                resident((1, clip_dim), weight_bufs),                # b1
                resident((clip_dim, cross_dim), weight_bufs),        # W2
                resident((1, cross_dim), weight_bufs),               # b2
                resident((1, cross_dim), weight_bufs),               # gamma
                resident((1, cross_dim), weight_bufs),               # beta
            ],
            out_specs=pl.BlockSpec((tile_m, cross_dim), lambda i: (i, 0)),
            compiler_params=pltpu.CompilerParams(
                dimension_semantics=("parallel",),
                vmem_limit_bytes=vmem_limit,
            ),
        )

    try:
        return build(1)(image_embeds, w1, b1, w2, b2, gamma, beta)
    except Exception:
        # Fallback: default (double) buffering on the resident parameter blocks.
        return build(None)(image_embeds, w1, b1, w2, b2, gamma, beta)


def reference(image_embeds, w1, b1, w2, b2, gamma, beta):
    """Pure-JAX f32 reference of the PyTorch module (erf GELU, LayerNorm eps=1e-5)."""
    f32 = lambda a: a.astype(jnp.float32)
    x = f32(image_embeds)
    h = x @ f32(w1) + f32(b1)
    h = 0.5 * h * (1.0 + jax.lax.erf(h * INV_SQRT2))
    y = h @ f32(w2) + f32(b2)
    mean = jnp.mean(y, axis=-1, keepdims=True)
    var = jnp.mean((y - mean) ** 2, axis=-1, keepdims=True)
    y = (y - mean) * jax.lax.rsqrt(var + LN_EPS)
    return y * f32(gamma) + f32(beta)


if __name__ == "__main__":
    # Small shapes consistent with the module (scaled-down clip/cross dims). B=500 is
    # deliberately NOT a multiple of the tile to exercise the ragged-last-block masking path
    # (no wrapper-side pad/slice), while still giving a 2-step, pipelined, parallel grid.
    B = 500
    clip_embeddings_dim = 256
    cross_attention_dim = 128

    key = jax.random.PRNGKey(0)
    k_x, k_w1, k_b1, k_w2, k_b2, k_g, k_beta = jax.random.split(key, 7)

    # bf16 activations / parameters (MXU-native rate); kernel accumulates in f32.
    x = jax.random.normal(k_x, (B, clip_embeddings_dim), jnp.float32).astype(jnp.bfloat16)
    w1 = (jax.random.normal(k_w1, (clip_embeddings_dim, clip_embeddings_dim), jnp.float32)
          * 0.02).astype(jnp.bfloat16)
    b1 = (jax.random.normal(k_b1, (1, clip_embeddings_dim), jnp.float32) * 0.02).astype(jnp.bfloat16)
    w2 = (jax.random.normal(k_w2, (clip_embeddings_dim, cross_attention_dim), jnp.float32)
          * 0.02).astype(jnp.bfloat16)
    b2 = (jax.random.normal(k_b2, (1, cross_attention_dim), jnp.float32) * 0.02).astype(jnp.bfloat16)
    gamma = (1.0 + jax.random.normal(k_g, (1, cross_attention_dim), jnp.float32) * 0.01
             ).astype(jnp.bfloat16)
    beta = (jax.random.normal(k_beta, (1, cross_attention_dim), jnp.float32) * 0.01
            ).astype(jnp.bfloat16)

    out = jax.block_until_ready(mlp_proj(x, w1, b1, w2, b2, gamma, beta))
    ref = reference(x, w1, b1, w2, b2, gamma, beta)

    assert out.shape == (B, cross_attention_dim)
    assert out.dtype == x.dtype  # bf16 output: half the HBM writeback vs f32
    # bf16 MXU inputs + bf16 activation cast before the second matmul + bf16 output relax the
    # tolerance slightly vs the all-f32 reference (LayerNorm output is O(1)).
    assert jnp.allclose(out.astype(jnp.float32), ref, atol=5e-2, rtol=5e-2), \
        "mismatch vs pure-JAX reference"
    print("KERNEL_OK")
</pallas_src>

<mosaic_0001>
module attributes {stable_mosaic.version = 11 : i64} {
  func.func @mlp_proj_kernel(%arg0: i32, %arg1: memref<256x256xbf16, #tpu.memory_space<vmem>>, %arg2: memref<256x256xbf16, #tpu.memory_space<vmem>>, %arg3: memref<1x256xbf16, #tpu.memory_space<vmem>>, %arg4: memref<256x128xbf16, #tpu.memory_space<vmem>>, %arg5: memref<1x128xbf16, #tpu.memory_space<vmem>>, %arg6: memref<1x128xbf16, #tpu.memory_space<vmem>>, %arg7: memref<1x128xbf16, #tpu.memory_space<vmem>>, %arg8: memref<256x128xbf16, #tpu.memory_space<vmem>>) attributes {dimension_semantics = [#tpu.dimension_semantics<parallel>], iteration_bounds = array<i64: 2>, scalar_prefetch = 0 : i64, scratch_operands = 0 : i64, tpu.core_type = #tpu.core_type<tc>, window_params = [{transform_indices = @transform_0, window_bounds = array<i64: 256, 256>}, {pipeline_mode = #tpu.pipeline_mode<synchronous>, transform_indices = @transform_1, window_bounds = array<i64: 256, 256>}, {pipeline_mode = #tpu.pipeline_mode<synchronous>, transform_indices = @transform_2, window_bounds = array<i64: 1, 256>}, {pipeline_mode = #tpu.pipeline_mode<synchronous>, transform_indices = @transform_3, window_bounds = array<i64: 256, 128>}, {pipeline_mode = #tpu.pipeline_mode<synchronous>, transform_indices = @transform_4, window_bounds = array<i64: 1, 128>}, {pipeline_mode = #tpu.pipeline_mode<synchronous>, transform_indices = @transform_5, window_bounds = array<i64: 1, 128>}, {pipeline_mode = #tpu.pipeline_mode<synchronous>, transform_indices = @transform_6, window_bounds = array<i64: 1, 128>}, {transform_indices = @transform_7, window_bounds = array<i64: 256, 128>}]} {
    %c0 = arith.constant 0 : index
    %c0_0 = arith.constant 0 : index
    %0 = vector.load %arg1[%c0, %c0_0] : memref<256x256xbf16, #tpu.memory_space<vmem>>, vector<256x256xbf16>
    %c0_1 = arith.constant 0 : index
    %c0_2 = arith.constant 0 : index
    %1 = vector.load %arg2[%c0_1, %c0_2] : memref<256x256xbf16, #tpu.memory_space<vmem>>, vector<256x256xbf16>
    %cst = arith.constant dense<0.000000e+00> : vector<256x256xf32>
    %2 = tpu.matmul %0, %1, %cst {dimension_numbers = #tpu.dot_dimension_numbers<[1], [0], [0], [1], [0, 0, 1, 1], [], []>} : vector<256x256xbf16>, vector<256x256xbf16>, vector<256x256xf32> -> vector<256x256xf32>
    %c0_3 = arith.constant 0 : index
    %c0_4 = arith.constant 0 : index
    %3 = vector.load %arg3[%c0_3, %c0_4] : memref<1x256xbf16, #tpu.memory_space<vmem>>, vector<1x256xbf16>
    %4 = arith.extf %3 : vector<1x256xbf16> to vector<1x256xf32>
    %5 = vector.broadcast %4 : vector<1x256xf32> to vector<256x256xf32>
    %6 = arith.addf %2, %5 : vector<256x256xf32>
    %cst_5 = arith.constant 5.000000e-01 : f32
    %7 = vector.broadcast %cst_5 : f32 to vector<256x256xf32>
    %8 = arith.mulf %7, %6 : vector<256x256xf32>
    %cst_6 = arith.constant 0.707106769 : f32
    %9 = vector.broadcast %cst_6 : f32 to vector<256x256xf32>
    %10 = arith.mulf %6, %9 : vector<256x256xf32>
    %11 = math.erf %10 : vector<256x256xf32>
    %cst_7 = arith.constant 1.000000e+00 : f32
    %12 = vector.broadcast %cst_7 : f32 to vector<256x256xf32>
    %13 = arith.addf %12, %11 : vector<256x256xf32>
    %14 = arith.mulf %8, %13 : vector<256x256xf32>
    %15 = arith.truncf %14 : vector<256x256xf32> to vector<256x256xbf16>
    %c0_8 = arith.constant 0 : index
    %c0_9 = arith.constant 0 : index
    %16 = vector.load %arg4[%c0_8, %c0_9] : memref<256x128xbf16, #tpu.memory_space<vmem>>, vector<256x128xbf16>
    %cst_10 = arith.constant dense<0.000000e+00> : vector<256x128xf32>
    %17 = tpu.matmul %15, %16, %cst_10 {dimension_numbers = #tpu.dot_dimension_numbers<[1], [0], [0], [1], [0, 0, 1, 1], [], []>} : vector<256x256xbf16>, vector<256x128xbf16>, vector<256x128xf32> -> vector<256x128xf32>
    %c0_11 = arith.constant 0 : index
    %c0_12 = arith.constant 0 : index
    %18 = vector.load %arg5[%c0_11, %c0_12] : memref<1x128xbf16, #tpu.memory_space<vmem>>, vector<1x128xbf16>
    %19 = arith.extf %18 : vector<1x128xbf16> to vector<1x128xf32>
    %20 = vector.broadcast %19 : vector<1x128xf32> to vector<256x128xf32>
    %21 = arith.addf %17, %20 : vector<256x128xf32>
    %cst_13 = arith.constant dense<0.000000e+00> : vector<256xf32>
    %22 = vector.multi_reduction <add>, %21, %cst_13 [1] : vector<256x128xf32> to vector<256xf32>
    %23 = vector.shape_cast %22 : vector<256xf32> to vector<256x1xf32>
    %cst_14 = arith.constant 1.280000e+02 : f32
    %24 = vector.broadcast %cst_14 : f32 to vector<256x1xf32>
    %25 = arith.divf %23, %24 : vector<256x1xf32>
    %26 = vector.broadcast %25 : vector<256x1xf32> to vector<256x128xf32>
    %27 = arith.subf %21, %26 : vector<256x128xf32>
    %28 = arith.mulf %27, %27 : vector<256x128xf32>
    %cst_15 = arith.constant dense<0.000000e+00> : vector<256xf32>
    %29 = vector.multi_reduction <add>, %28, %cst_15 [1] : vector<256x128xf32> to vector<256xf32>
    %30 = vector.shape_cast %29 : vector<256xf32> to vector<256x1xf32>
    %cst_16 = arith.constant 1.280000e+02 : f32
    %31 = vector.broadcast %cst_16 : f32 to vector<256x1xf32>
    %32 = arith.divf %30, %31 : vector<256x1xf32>
    %cst_17 = arith.constant 9.99999974E-6 : f32
    %33 = vector.broadcast %cst_17 : f32 to vector<256x1xf32>
    %34 = arith.addf %32, %33 : vector<256x1xf32>
    %35 = math.rsqrt %34 : vector<256x1xf32>
    %36 = vector.broadcast %35 : vector<256x1xf32> to vector<256x128xf32>
    %37 = arith.mulf %27, %36 : vector<256x128xf32>
    %c0_18 = arith.constant 0 : index
    %c0_19 = arith.constant 0 : index
    %38 = vector.load %arg6[%c0_18, %c0_19] : memref<1x128xbf16, #tpu.memory_space<vmem>>, vector<1x128xbf16>
    %39 = arith.extf %38 : vector<1x128xbf16> to vector<1x128xf32>
    %40 = vector.broadcast %39 : vector<1x128xf32> to vector<256x128xf32>
    %41 = arith.mulf %37, %40 : vector<256x128xf32>
    %c0_20 = arith.constant 0 : index
    %c0_21 = arith.constant 0 : index
    %42 = vector.load %arg7[%c0_20, %c0_21] : memref<1x128xbf16, #tpu.memory_space<vmem>>, vector<1x128xbf16>
    %43 = arith.extf %42 : vector<1x128xbf16> to vector<1x128xf32>
    %44 = vector.broadcast %43 : vector<1x128xf32> to vector<256x128xf32>
    %45 = arith.addf %41, %44 : vector<256x128xf32>
    %46 = arith.truncf %45 : vector<256x128xf32> to vector<256x128xbf16>
    %c0_22 = arith.constant 0 : index
    %c0_23 = arith.constant 0 : index
    %47 = vector.load %arg8[%c0_22, %c0_23] : memref<256x128xbf16, #tpu.memory_space<vmem>>, vector<256x128xbf16>
    tpu.vector_store %arg8[%c0_22, %c0_23], %46 {strides = array<i32>} : memref<256x128xbf16, #tpu.memory_space<vmem>>, vector<256x128xbf16>,
    return
  }
  func.func @transform_0(%arg0: i32) -> (i32, i32) {
    %c0_i32 = arith.constant 0 : i32
    %c0_i32_0 = arith.constant 0 : i32
    return %arg0, %c0_i32 : i32, i32
  }
  func.func @transform_1(%arg0: i32) -> (i32, i32) {
    %c0_i32 = arith.constant 0 : i32
    %c0_i32_0 = arith.constant 0 : i32
    %c0_i32_1 = arith.constant 0 : i32
    return %c0_i32, %c0_i32_0 : i32, i32
  }
  func.func @transform_2(%arg0: i32) -> (i32, i32) {
    %c0_i32 = arith.constant 0 : i32
    %c0_i32_0 = arith.constant 0 : i32
    %c0_i32_1 = arith.constant 0 : i32
    return %c0_i32, %c0_i32_0 : i32, i32
  }
  func.func @transform_3(%arg0: i32) -> (i32, i32) {
    %c0_i32 = arith.constant 0 : i32
    %c0_i32_0 = arith.constant 0 : i32
    %c0_i32_1 = arith.constant 0 : i32
    return %c0_i32, %c0_i32_0 : i32, i32
  }
  func.func @transform_4(%arg0: i32) -> (i32, i32) {
    %c0_i32 = arith.constant 0 : i32
    %c0_i32_0 = arith.constant 0 : i32
    %c0_i32_1 = arith.constant 0 : i32
    return %c0_i32, %c0_i32_0 : i32, i32
  }
  func.func @transform_5(%arg0: i32) -> (i32, i32) {
    %c0_i32 = arith.constant 0 : i32
    %c0_i32_0 = arith.constant 0 : i32
    %c0_i32_1 = arith.constant 0 : i32
    return %c0_i32, %c0_i32_0 : i32, i32
  }
  func.func @transform_6(%arg0: i32) -> (i32, i32) {
    %c0_i32 = arith.constant 0 : i32
    %c0_i32_0 = arith.constant 0 : i32
    %c0_i32_1 = arith.constant 0 : i32
    return %c0_i32, %c0_i32_0 : i32, i32
  }
  func.func @transform_7(%arg0: i32) -> (i32, i32) {
    %c0_i32 = arith.constant 0 : i32
    %c0_i32_0 = arith.constant 0 : i32
    return %arg0, %c0_i32 : i32, i32
  }
}

module attributes {stable_mosaic.version = 11 : i64} {
  func.func @mlp_proj_kernel(%arg0: i32, %arg1: memref<256x256xbf16, #tpu.memory_space<vmem>>, %arg2: memref<256x256xbf16, #tpu.memory_space<vmem>>, %arg3: memref<1x256xbf16, #tpu.memory_space<vmem>>, %arg4: memref<256x128xbf16, #tpu.memory_space<vmem>>, %arg5: memref<1x128xbf16, #tpu.memory_space<vmem>>, %arg6: memref<1x128xbf16, #tpu.memory_space<vmem>>, %arg7: memref<1x128xbf16, #tpu.memory_space<vmem>>, %arg8: memref<256x128xbf16, #tpu.memory_space<vmem>>) attributes {dimension_semantics = [#tpu.dimension_semantics<parallel>], iteration_bounds = array<i64: 2>, scalar_prefetch = 0 : i64, scratch_operands = 0 : i64, tpu.core_type = #tpu.core_type<tc>, window_params = [{transform_indices = @transform_0, window_bounds = array<i64: 256, 256>}, {pipeline_mode = #tpu.pipeline_mode<synchronous>, transform_indices = @transform_1, window_bounds = array<i64: 256, 256>}, {pipeline_mode = #tpu.pipeline_mode<synchronous>, transform_indices = @transform_2, window_bounds = array<i64: 1, 256>}, {pipeline_mode = #tpu.pipeline_mode<synchronous>, transform_indices = @transform_3, window_bounds = array<i64: 256, 128>}, {pipeline_mode = #tpu.pipeline_mode<synchronous>, transform_indices = @transform_4, window_bounds = array<i64: 1, 128>}, {pipeline_mode = #tpu.pipeline_mode<synchronous>, transform_indices = @transform_5, window_bounds = array<i64: 1, 128>}, {pipeline_mode = #tpu.pipeline_mode<synchronous>, transform_indices = @transform_6, window_bounds = array<i64: 1, 128>}, {transform_indices = @transform_7, window_bounds = array<i64: 256, 128>}]} {
    %c0 = arith.constant 0 : index
    %c0_0 = arith.constant 0 : index
    %0 = vector.load %arg1[%c0, %c0_0] : memref<256x256xbf16, #tpu.memory_space<vmem>>, vector<256x256xbf16>
    %c0_1 = arith.constant 0 : index
    %c0_2 = arith.constant 0 : index
    %1 = vector.load %arg2[%c0_1, %c0_2] : memref<256x256xbf16, #tpu.memory_space<vmem>>, vector<256x256xbf16>
    %cst = arith.constant dense<0.000000e+00> : vector<256x256xf32>
    %2 = tpu.matmul %0, %1, %cst {dimension_numbers = #tpu.dot_dimension_numbers<[1], [0], [0], [1], [0, 0, 1, 1], [], []>} : vector<256x256xbf16>, vector<256x256xbf16>, vector<256x256xf32> -> vector<256x256xf32>
    %c0_3 = arith.constant 0 : index
    %c0_4 = arith.constant 0 : index
    %3 = vector.load %arg3[%c0_3, %c0_4] : memref<1x256xbf16, #tpu.memory_space<vmem>>, vector<1x256xbf16>
    %4 = arith.extf %3 : vector<1x256xbf16> to vector<1x256xf32>
    %5 = vector.broadcast %4 : vector<1x256xf32> to vector<256x256xf32>
    %6 = arith.addf %2, %5 : vector<256x256xf32>
    %cst_5 = arith.constant 5.000000e-01 : f32
    %7 = vector.broadcast %cst_5 : f32 to vector<256x256xf32>
    %8 = arith.mulf %7, %6 : vector<256x256xf32>
    %cst_6 = arith.constant 0.707106769 : f32
    %9 = vector.broadcast %cst_6 : f32 to vector<256x256xf32>
    %10 = arith.mulf %6, %9 : vector<256x256xf32>
    %11 = math.erf %10 : vector<256x256xf32>
    %cst_7 = arith.constant 1.000000e+00 : f32
    %12 = vector.broadcast %cst_7 : f32 to vector<256x256xf32>
    %13 = arith.addf %12, %11 : vector<256x256xf32>
    %14 = arith.mulf %8, %13 : vector<256x256xf32>
    %15 = arith.truncf %14 : vector<256x256xf32> to vector<256x256xbf16>
    %c0_8 = arith.constant 0 : index
    %c0_9 = arith.constant 0 : index
    %16 = vector.load %arg4[%c0_8, %c0_9] : memref<256x128xbf16, #tpu.memory_space<vmem>>, vector<256x128xbf16>
    %cst_10 = arith.constant dense<0.000000e+00> : vector<256x128xf32>
    %17 = tpu.matmul %15, %16, %cst_10 {dimension_numbers = #tpu.dot_dimension_numbers<[1], [0], [0], [1], [0, 0, 1, 1], [], []>} : vector<256x256xbf16>, vector<256x128xbf16>, vector<256x128xf32> -> vector<256x128xf32>
    %c0_11 = arith.constant 0 : index
    %c0_12 = arith.constant 0 : index
    %18 = vector.load %arg5[%c0_11, %c0_12] : memref<1x128xbf16, #tpu.memory_space<vmem>>, vector<1x128xbf16>
    %19 = arith.extf %18 : vector<1x128xbf16> to vector<1x128xf32>
    %20 = vector.broadcast %19 : vector<1x128xf32> to vector<256x128xf32>
    %21 = arith.addf %17, %20 : vector<256x128xf32>
    %cst_13 = arith.constant dense<0.000000e+00> : vector<256xf32>
    %22 = vector.multi_reduction <add>, %21, %cst_13 [1] : vector<256x128xf32> to vector<256xf32>
    %23 = vector.shape_cast %22 : vector<256xf32> to vector<256x1xf32>
    %cst_14 = arith.constant 1.280000e+02 : f32
    %24 = vector.broadcast %cst_14 : f32 to vector<256x1xf32>
    %25 = arith.divf %23, %24 : vector<256x1xf32>
    %26 = vector.broadcast %25 : vector<256x1xf32> to vector<256x128xf32>
    %27 = arith.subf %21, %26 : vector<256x128xf32>
    %28 = arith.mulf %27, %27 : vector<256x128xf32>
    %cst_15 = arith.constant dense<0.000000e+00> : vector<256xf32>
    %29 = vector.multi_reduction <add>, %28, %cst_15 [1] : vector<256x128xf32> to vector<256xf32>
    %30 = vector.shape_cast %29 : vector<256xf32> to vector<256x1xf32>
    %cst_16 = arith.constant 1.280000e+02 : f32
    %31 = vector.broadcast %cst_16 : f32 to vector<256x1xf32>
    %32 = arith.divf %30, %31 : vector<256x1xf32>
    %cst_17 = arith.constant 9.99999974E-6 : f32
    %33 = vector.broadcast %cst_17 : f32 to vector<256x1xf32>
    %34 = arith.addf %32, %33 : vector<256x1xf32>
    %35 = math.rsqrt %34 : vector<256x1xf32>
    %36 = vector.broadcast %35 : vector<256x1xf32> to vector<256x128xf32>
    %37 = arith.mulf %27, %36 : vector<256x128xf32>
    %c0_18 = arith.constant 0 : index
    %c0_19 = arith.constant 0 : index
    %38 = vector.load %arg6[%c0_18, %c0_19] : memref<1x128xbf16, #tpu.memory_space<vmem>>, vector<1x128xbf16>
    %39 = arith.extf %38 : vector<1x128xbf16> to vector<1x128xf32>
    %40 = vector.broadcast %39 : vector<1x128xf32> to vector<256x128xf32>
    %41 = arith.mulf %37, %40 : vector<256x128xf32>
    %c0_20 = arith.constant 0 : index
    %c0_21 = arith.constant 0 : index
    %42 = vector.load %arg7[%c0_20, %c0_21] : memref<1x128xbf16, #tpu.memory_space<vmem>>, vector<1x128xbf16>
    %43 = arith.extf %42 : vector<1x128xbf16> to vector<1x128xf32>
    %44 = vector.broadcast %43 : vector<1x128xf32> to vector<256x128xf32>
    %45 = arith.addf %41, %44 : vector<256x128xf32>
    %46 = arith.truncf %45 : vector<256x128xf32> to vector<256x128xbf16>
    %c0_22 = arith.constant 0 : index
    %c0_23 = arith.constant 0 : index
    %47 = vector.load %arg8[%c0_22, %c0_23] : memref<256x128xbf16, #tpu.memory_space<vmem>>, vector<256x128xbf16>
    tpu.vector_store %arg8[%c0_22, %c0_23], %46 {strides = array<i32>} : memref<256x128xbf16, #tpu.memory_space<vmem>>, vector<256x128xbf16>,
    return
  }
  func.func @transform_0(%arg0: i32) -> (i32, i32) {
    %c0_i32 = arith.constant 0 : i32
    %c0_i32_0 = arith.constant 0 : i32
    return %arg0, %c0_i32 : i32, i32
  }
  func.func @transform_1(%arg0: i32) -> (i32, i32) {
    %c0_i32 = arith.constant 0 : i32
    %c0_i32_0 = arith.constant 0 : i32
    %c0_i32_1 = arith.constant 0 : i32
    return %c0_i32, %c0_i32_0 : i32, i32
  }
  func.func @transform_2(%arg0: i32) -> (i32, i32) {
    %c0_i32 = arith.constant 0 : i32
    %c0_i32_0 = arith.constant 0 : i32
    %c0_i32_1 = arith.constant 0 : i32
    return %c0_i32, %c0_i32_0 : i32, i32
  }
  func.func @transform_3(%arg0: i32) -> (i32, i32) {
    %c0_i32 = arith.constant 0 : i32
    %c0_i32_0 = arith.constant 0 : i32
    %c0_i32_1 = arith.constant 0 : i32
    return %c0_i32, %c0_i32_0 : i32, i32
  }
  func.func @transform_4(%arg0: i32) -> (i32, i32) {
    %c0_i32 = arith.constant 0 : i32
    %c0_i32_0 = arith.constant 0 : i32
    %c0_i32_1 = arith.constant 0 : i32
    return %c0_i32, %c0_i32_0 : i32, i32
  }
  func.func @transform_5(%arg0: i32) -> (i32, i32) {
    %c0_i32 = arith.constant 0 : i32
    %c0_i32_0 = arith.constant 0 : i32
    %c0_i32_1 = arith.constant 0 : i32
    return %c0_i32, %c0_i32_0 : i32, i32
  }
  func.func @transform_6(%arg0: i32) -> (i32, i32) {
    %c0_i32 = arith.constant 0 : i32
    %c0_i32_0 = arith.constant 0 : i32
    %c0_i32_1 = arith.constant 0 : i32
    return %c0_i32, %c0_i32_0 : i32, i32
  }
  func.func @transform_7(%arg0: i32) -> (i32, i32) {
    %c0_i32 = arith.constant 0 : i32
    %c0_i32_0 = arith.constant 0 : i32
    return %arg0, %c0_i32 : i32, i32
  }
}

</mosaic_0001>

<llo_original>
// kernel: tpu_custom_call.1
$region0: #{tpu_custom_call.1}
  #allocation0 [shape = 'u32[]', space=smem, size = 0x4, offset = 0x4, fixed_abs, tag = 'smem constant byte address 0x4 - core index']
  #allocation1 [shape = 'u32[144,128]{1,0:T(1,128)}', space=vmem, size = 0x12000, scoped, tag = 'internal scratch']
  %s0 = inlined_call_operand.hbm [shape: bf16[500,256], index: 0, kind: input, shape index: {}]
  %s1 = inlined_call_operand.hbm [shape: bf16[256,256], index: 1, kind: input, shape index: {}]
  %s2 = inlined_call_operand.vmem [shape: bf16[1,256], index: 2, kind: input, shape index: {}]
  %s3 = inlined_call_operand.hbm [shape: bf16[256,128], index: 3, kind: input, shape index: {}]
  %s4 = inlined_call_operand.vmem [shape: bf16[1,128], index: 4, kind: input, shape index: {}]
  %s5 = inlined_call_operand.vmem [shape: bf16[1,128], index: 5, kind: input, shape index: {}]
  %s6 = inlined_call_operand.vmem [shape: bf16[1,128], index: 6, kind: input, shape index: {}]
  %s7 = inlined_call_operand.hbm [shape: bf16[500,128], index: 7, kind: output, shape index: {}]
  %s8 = sld [smem:[#allocation0]]
  $region73: #{tpu_custom_call.1} parent=0
    _
  %s10 = ssub.s32 1, %s8
  %s11 = scalar_select 0, %s10, %s8
  $region1: #{tpu_custom_call.1} parent=0
    #allocation2 [shape = 'u8[262144]{0}', space=vmem, size = 0x40000, scoped, tag = 'input window, operand 0']
    #allocation3 [shape = 's32[2]{0}', space=sflag, size = 0x8, scoped, tag = 'scoped memory for tpu_custom_call.1']
    #allocation4 [shape = 's32[2]{0}', space=sflag, size = 0x8, scoped, tag = 'scoped memory for tpu_custom_call.1']
    #allocation5 [shape = 'u8[131072]{0}', space=vmem, size = 0x20000, scoped, tag = 'input window, operand 1, single buffered']
    #allocation6 [shape = 's32[1]{0}', space=sflag, size = 0x4, scoped, tag = 'scoped memory for tpu_custom_call.1']
    #allocation7 [shape = 'u8[65536]{0}', space=vmem, size = 0x10000, scoped, tag = 'input window, operand 3, single buffered']
    #allocation8 [shape = 'u8[131072]{0}', space=vmem, size = 0x20000, scoped, tag = 'output window, operand 0']
    %12 = vsyncpa [#allocation3], 0
    %s13 = scalar_lea.sflag [#allocation3], 1
    %14 = vsyncpa %s13, 0
    %15 = vsyncpa [#allocation6], 0
    %16 = vsyncpa [#allocation4], 0
    %s17 = scalar_lea.sflag [#allocation4], 1
    %18 = vsyncpa %s17, 0
    loop: start=0, step=1, limit=4
    $region2: #{tpu_custom_call.1} parent=1 // loop_pre_header
      _
    $region3: #{tpu_custom_call.1} parent=1 // loop_header
      %s20 = sphi 0, %s24
      %p21 = scmp.ge.s32.totalorder %s20, 4
      %s30 = sphi 0, %s32
      %s33 = sphi 0, %s30
      %s34 = sphi 0, %s33
      %s50 = sphi 0, %s34
      %s54 = sphi 0, %s54
      %s56 = sphi 0, %s54
      %s57 = sphi 0, %s56
      %s71 = sphi 0, %s57
      %s75 = sphi 0, %s75
      %s77 = sphi 0, %s75
      %s78 = sphi 0, %s77
      %s92 = sphi 0, %s78
      %s96 = sphi 0, %s96
      %s98 = sphi 0, %s96
      %s99 = sphi 0, %s98
      %s113 = sphi 0, %s99
      %s117 = sphi 0, %s117
      %s119 = sphi 0, %s117
      %s120 = sphi 0, %s119
      %s134 = sphi 0, %s120
      %s138 = sphi 0, %s138
      %s140 = sphi 0, %s138
      %s141 = sphi 0, %s140
      %s155 = sphi 0, %s141
      %s159 = sphi 0, %s159
      %s161 = sphi 0, %s159
      %s162 = sphi 0, %s161
      %s176 = sphi 0, %s162
      %s182 = sphi 0, %s184
      %s185 = sphi 0, %s182
      %s186 = sphi 0, %s185
      %s202 = sphi 0, %s186
    $region4: #{tpu_custom_call.1} parent=1 // loop_header_branch
      %23 = sbr.rel (%p21) target = $region8
    $region5: #{tpu_custom_call.1} parent=1 // loop_body
      %s25 = ssub.s32 %s20, 1
      %s26 = ssub.s32 %s20, 2
      %s27 = sadd.s32 %s20, 1
      %s28 = ssub.s32 %s20, %s27
      %p29 = scmp.eq.s32.totalorder %s28, 0
      %s31 = sadd.s32 %s30, 1
      %s32 = scalar_select %p29, %s30, %s31
      %p35 = pneg %p29
      %p36 = scmp.eq.s32.totalorder %s20, 1
      %p37 = por %p35, %p36
      %p38 = scmp.ne.s32.totalorder %s30, %s33
      %p39 = scmp.eq.s32.totalorder %s20, 0
      %p40 = por %p38, %p39
      %p41 = scmp.ne.s32.totalorder %s30, %s33
      %p42 = scmp.eq.s32.totalorder %s25, 1
      %p43 = por %p41, %p42
      %p44 = scmp.ne.s32.totalorder %s33, %s34
      %p45 = scmp.eq.s32.totalorder %s25, 0
      %p46 = por %p44, %p45
      %p47 = scmp.ne.s32.totalorder %s33, %s34
      %p48 = scmp.eq.s32.totalorder %s26, 1
      %p49 = por %p47, %p48
      %p51 = scmp.ne.s32.totalorder %s34, %s50
      %p52 = scmp.eq.s32.totalorder %s26, 0
      %p53 = por %p51, %p52
      %s55 = sadd.s32 %s54, 1
      %p58 = scmp.eq.s32.totalorder %s20, 1
      %p59 = scmp.ne.s32.totalorder %s54, %s56
      %p60 = scmp.eq.s32.totalorder %s20, 0
      %p61 = por %p59, %p60
      %p62 = scmp.ne.s32.totalorder %s54, %s56
      %p63 = scmp.eq.s32.totalorder %s25, 1
      %p64 = por %p62, %p63
      %p65 = scmp.ne.s32.totalorder %s56, %s57
      %p66 = scmp.eq.s32.totalorder %s25, 0
      %p67 = por %p65, %p66
      %p68 = scmp.ne.s32.totalorder %s56, %s57
      %p69 = scmp.eq.s32.totalorder %s26, 1
      %p70 = por %p68, %p69
      %p72 = scmp.ne.s32.totalorder %s57, %s71
      %p73 = scmp.eq.s32.totalorder %s26, 0
      %p74 = por %p72, %p73
      %s76 = sadd.s32 %s75, 1
      %p79 = scmp.eq.s32.totalorder %s20, 1
      %p80 = scmp.ne.s32.totalorder %s75, %s77
      %p81 = scmp.eq.s32.totalorder %s20, 0
      %p82 = por %p80, %p81
      %p83 = scmp.ne.s32.totalorder %s75, %s77
      %p84 = scmp.eq.s32.totalorder %s25, 1
      %p85 = por %p83, %p84
      %p86 = scmp.ne.s32.totalorder %s77, %s78
      %p87 = scmp.eq.s32.totalorder %s25, 0
      %p88 = por %p86, %p87
      %p89 = scmp.ne.s32.totalorder %s77, %s78
      %p90 = scmp.eq.s32.totalorder %s26, 1
      %p91 = por %p89, %p90
      %p93 = scmp.ne.s32.totalorder %s78, %s92
      %p94 = scmp.eq.s32.totalorder %s26, 0
      %p95 = por %p93, %p94
      %s97 = sadd.s32 %s96, 1
      %p100 = scmp.eq.s32.totalorder %s20, 1
      %p101 = scmp.ne.s32.totalorder %s96, %s98
      %p102 = scmp.eq.s32.totalorder %s20, 0
      %p103 = por %p101, %p102
      %p104 = scmp.ne.s32.totalorder %s96, %s98
      %p105 = scmp.eq.s32.totalorder %s25, 1
      %p106 = por %p104, %p105
      %p107 = scmp.ne.s32.totalorder %s98, %s99
      %p108 = scmp.eq.s32.totalorder %s25, 0
      %p109 = por %p107, %p108
      %p110 = scmp.ne.s32.totalorder %s98, %s99
      %p111 = scmp.eq.s32.totalorder %s26, 1
      %p112 = por %p110, %p111
      %p114 = scmp.ne.s32.totalorder %s99, %s113
      %p115 = scmp.eq.s32.totalorder %s26, 0
      %p116 = por %p114, %p115
      %s118 = sadd.s32 %s117, 1
      %p121 = scmp.eq.s32.totalorder %s20, 1
      %p122 = scmp.ne.s32.totalorder %s117, %s119
      %p123 = scmp.eq.s32.totalorder %s20, 0
      %p124 = por %p122, %p123
      %p125 = scmp.ne.s32.totalorder %s117, %s119
      %p126 = scmp.eq.s32.totalorder %s25, 1
      %p127 = por %p125, %p126
      %p128 = scmp.ne.s32.totalorder %s119, %s120
      %p129 = scmp.eq.s32.totalorder %s25, 0
      %p130 = por %p128, %p129
      %p131 = scmp.ne.s32.totalorder %s119, %s120
      %p132 = scmp.eq.s32.totalorder %s26, 1
      %p133 = por %p131, %p132
      %p135 = scmp.ne.s32.totalorder %s120, %s134
      %p136 = scmp.eq.s32.totalorder %s26, 0
      %p137 = por %p135, %p136
      %s139 = sadd.s32 %s138, 1
      %p142 = scmp.eq.s32.totalorder %s20, 1
      %p143 = scmp.ne.s32.totalorder %s138, %s140
      %p144 = scmp.eq.s32.totalorder %s20, 0
      %p145 = por %p143, %p144
      %p146 = scmp.ne.s32.totalorder %s138, %s140
      %p147 = scmp.eq.s32.totalorder %s25, 1
      %p148 = por %p146, %p147
      %p149 = scmp.ne.s32.totalorder %s140, %s141
      %p150 = scmp.eq.s32.totalorder %s25, 0
      %p151 = por %p149, %p150
      %p152 = scmp.ne.s32.totalorder %s140, %s141
      %p153 = scmp.eq.s32.totalorder %s26, 1
      %p154 = por %p152, %p153
      %p156 = scmp.ne.s32.totalorder %s141, %s155
      %p157 = scmp.eq.s32.totalorder %s26, 0
      %p158 = por %p156, %p157
      %s160 = sadd.s32 %s159, 1
      %p163 = scmp.eq.s32.totalorder %s20, 1
      %p164 = scmp.ne.s32.totalorder %s159, %s161
      %p165 = scmp.eq.s32.totalorder %s20, 0
      %p166 = por %p164, %p165
      %p167 = scmp.ne.s32.totalorder %s159, %s161
      %p168 = scmp.eq.s32.totalorder %s25, 1
      %p169 = por %p167, %p168
      %p170 = scmp.ne.s32.totalorder %s161, %s162
      %p171 = scmp.eq.s32.totalorder %s25, 0
      %p172 = por %p170, %p171
      %p173 = scmp.ne.s32.totalorder %s161, %s162
      %p174 = scmp.eq.s32.totalorder %s26, 1
      %p175 = por %p173, %p174
      %p177 = scmp.ne.s32.totalorder %s162, %s176
      %p178 = scmp.eq.s32.totalorder %s26, 0
      %p179 = por %p177, %p178
      %s180 = ssub.s32 %s20, %s27
      %p181 = scmp.eq.s32.totalorder %s180, 0
      %s183 = sadd.s32 %s182, 1
      %s184 = scalar_select %p181, %s182, %s183
      %p187 = pneg %p181
      %p188 = scmp.eq.s32.totalorder %s20, 1
      %p189 = por %p187, %p188
      %p190 = scmp.ne.s32.totalorder %s182, %s185
      %p191 = scmp.eq.s32.totalorder %s20, 0
      %p192 = por %p190, %p191
      %p193 = scmp.ne.s32.totalorder %s182, %s185
      %p194 = scmp.eq.s32.totalorder %s25, 1
      %p195 = por %p193, %p194
      %p196 = scmp.ne.s32.totalorder %s185, %s186
      %p197 = scmp.eq.s32.totalorder %s25, 0
      %p198 = por %p196, %p197
      %p199 = scmp.ne.s32.totalorder %s185, %s186
      %p200 = scmp.eq.s32.totalorder %s26, 1
      %p201 = por %p199, %p200
      %p203 = scmp.ne.s32.totalorder %s186, %s202
      %p204 = scmp.eq.s32.totalorder %s26, 0
      %p205 = por %p203, %p204
      %p206 = scmp.le.s32.totalorder 1, %s20
      %p207 = scmp.lt.s32.totalorder %s20, 3
      %p208 = pnand %p206, %p207
      %p209 = pneg %p208
      // Predicated region
      $region9: #{tpu_custom_call.1} parent=5 // pred_check
        _
      $region10: #{tpu_custom_call.1} parent=5 // pred_check_branch
        %211 = sbr.rel (%p208) target = $region12
      $region11: #{tpu_custom_call.1} parent=5 // pred_region
        %s212 = ssub.s32 %s20, 1
        // Predicated region
        $region13: #{tpu_custom_call.1} parent=11 // pred_check
          %p213 = pneg %p67
        $region14: #{tpu_custom_call.1} parent=11 // pred_check_branch
          %215 = sbr.rel (%p213) target = $region16
        $region15: #{tpu_custom_call.1} parent=11 // pred_region
          %s217 = ssub.s32 4096, 4096
          %218 = vsyncadd [#allocation6], %s217
          %s219 = sshll.u32 [#allocation5], 4
          %s220 = int_to_ptr.vmem [resolvable:$true] %s219
          %225 = dma.hbm_to_vmem [thread:$0]  %s1, 4096, %s220, [#allocation6], 128, 128, 8
        $region16: #{tpu_custom_call.1} parent=11 // pred_fallthru
          _
        // Predicated region
        $region17: #{tpu_custom_call.1} parent=11 // pred_check
          %p226 = pneg %p88
        $region18: #{tpu_custom_call.1} parent=11 // pred_check_branch
          %228 = sbr.rel (%p226) target = $region20
        $region19: #{tpu_custom_call.1} parent=11 // pred_region
          _
        $region20: #{tpu_custom_call.1} parent=11 // pred_fallthru
          _
        // Predicated region
        $region21: #{tpu_custom_call.1} parent=11 // pred_check
          %p229 = pneg %p109
        $region22: #{tpu_custom_call.1} parent=11 // pred_check_branch
          %231 = sbr.rel (%p229) target = $region24
        $region23: #{tpu_custom_call.1} parent=11 // pred_region
          %s233 = ssub.s32 2048, 2048
          %234 = vsyncadd [#allocation6], %s233
          %s235 = sshll.u32 [#allocation7], 4
          %s236 = int_to_ptr.vmem [resolvable:$true] %s235
          %241 = dma.hbm_to_vmem [thread:$0]  %s3, 2048, %s236, [#allocation6], 64, 64, 4
        $region24: #{tpu_custom_call.1} parent=11 // pred_fallthru
          _
        // Predicated region
        $region25: #{tpu_custom_call.1} parent=11 // pred_check
          %p242 = pneg %p130
        $region26: #{tpu_custom_call.1} parent=11 // pred_check_branch
          %244 = sbr.rel (%p242) target = $region28
        $region27: #{tpu_custom_call.1} parent=11 // pred_region
          _
        $region28: #{tpu_custom_call.1} parent=11 // pred_fallthru
          _
        // Predicated region
        $region29: #{tpu_custom_call.1} parent=11 // pred_check
          %p245 = pneg %p151
        $region30: #{tpu_custom_call.1} parent=11 // pred_check_branch
          %247 = sbr.rel (%p245) target = $region32
        $region31: #{tpu_custom_call.1} parent=11 // pred_region
          _
        $region32: #{tpu_custom_call.1} parent=11 // pred_fallthru
          _
        // Predicated region
        $region33: #{tpu_custom_call.1} parent=11 // pred_check
          %p248 = pneg %p172
        $region34: #{tpu_custom_call.1} parent=11 // pred_check_branch
          %250 = sbr.rel (%p248) target = $region36
        $region35: #{tpu_custom_call.1} parent=11 // pred_region
          _
        $region36: #{tpu_custom_call.1} parent=11 // pred_fallthru
          _
      $region12: #{tpu_custom_call.1} parent=5 // pred_fallthru
        _
      %p251 = scmp.lt.s32.totalorder %s20, 2
      // Predicated region
      $region37: #{tpu_custom_call.1} parent=5 // pred_check
        %p252 = pneg %p251
      $region38: #{tpu_custom_call.1} parent=5 // pred_check_branch
        %254 = sbr.rel (%p252) target = $region40
      $region39: #{tpu_custom_call.1} parent=5 // pred_region
        // Predicated region
        $region41: #{tpu_custom_call.1} parent=39 // pred_check
          %p255 = pneg %p40
        $region42: #{tpu_custom_call.1} parent=39 // pred_check_branch
          %257 = sbr.rel (%p255) target = $region44
        $region43: #{tpu_custom_call.1} parent=39 // pred_region
          %s258 = sand.u32 %s30, 1
          %s259 = scalar_lea.sflag [#allocation3], %s258
          %s260 = sand.u32 %s30, 1
          %s261 = smul.addr %s260, 256
          %s262 = scalar_lea.vmem [#allocation2], %s261
          %s263 = smul.u32 32, %s20
          %s264 = ssub.s32 63, %s263
          %p265 = scmp.lt.s32.totalorder %s264, 32
          %s266 = scalar_select %p265, %s264, 32
          %s267 = smul.u32 64, %s266
          %s268 = smul.u32 %s267, 2
          %s270 = ssub.s32 4096, %s268
          %271 = vsyncadd %s259, %s270
          %p272 = scmp.ne.s32.totalorder 0, %s268
          %s273 = smul.addr %s263, 2
          %s274 = smul.addr %s273, 64
          %s275 = scalar_lea.hbm %s0, %s274
          %s276 = smul.u32 8, %s266
          %s277 = sshll.u32 %s262, 4
          %s278 = int_to_ptr.vmem [resolvable:$true] %s277
          %s279 = sshll.u32 %s276, 4
          %283 = dma.hbm_to_vmem [thread:$0]  (%p272), %s275, %s279, %s278, %s259, 128, 128, 8
        $region44: #{tpu_custom_call.1} parent=39 // pred_fallthru
          _
      $region40: #{tpu_custom_call.1} parent=5 // pred_fallthru
        _
      %p284 = scmp.le.s32.totalorder 1, %s20
      %p285 = scmp.lt.s32.totalorder %s20, 3
      %p286 = pnand %p284, %p285
      %p287 = pneg %p286
      // Predicated region
      $region45: #{tpu_custom_call.1} parent=5 // pred_check
        _
      $region46: #{tpu_custom_call.1} parent=5 // pred_check_branch
        %289 = sbr.rel (%p286) target = $region48
      $region47: #{tpu_custom_call.1} parent=5 // pred_region
        %s290 = ssub.s32 %s20, 1
        %s291 = sand.u32 %s33, 1
        %s292 = scalar_lea.sflag [#allocation3], %s291
        %s293 = sand.u32 %s33, 1
        %s294 = smul.addr %s293, 256
        %s295 = scalar_lea.vmem [#allocation2], %s294
        // Predicated region
        $region49: #{tpu_custom_call.1} parent=47 // pred_check
          %p296 = pneg %p46
        $region50: #{tpu_custom_call.1} parent=47 // pred_check_branch
          %298 = sbr.rel (%p296) target = $region52
        $region51: #{tpu_custom_call.1} parent=47 // pred_region
          %299 = dma.done %s292, 4096
        $region52: #{tpu_custom_call.1} parent=47 // pred_fallthru
          _
        // Predicated region
        $region53: #{tpu_custom_call.1} parent=47 // pred_check
          %p300 = pneg %p67
        $region54: #{tpu_custom_call.1} parent=47 // pred_check_branch
          %302 = sbr.rel (%p300) target = $region56
        $region55: #{tpu_custom_call.1} parent=47 // pred_region
          %303 = dma.done [#allocation6], 4096
        $region56: #{tpu_custom_call.1} parent=47 // pred_fallthru
          _
        // Predicated region
        $region57: #{tpu_custom_call.1} parent=47 // pred_check
          %p304 = pneg %p109
        $region58: #{tpu_custom_call.1} parent=47 // pred_check_branch
          %306 = sbr.rel (%p304) target = $region60
        $region59: #{tpu_custom_call.1} parent=47 // pred_region
          %307 = dma.done [#allocation6], 2048
        $region60: #{tpu_custom_call.1} parent=47 // pred_fallthru
          _
        %s308 = sand.u32 %s33, 1
        %s309 = scalar_lea.sflag [#allocation3], %s308
        %s310 = sand.u32 %s33, 1
        %s311 = smul.addr %s310, 256
        %s312 = scalar_lea.vmem [#allocation2], %s311
        %p313 = pneg %p46
        %p314 = pneg %p43
        %p315 = pneg %p67
        %p316 = pneg %p64
        %p317 = pneg %p88
        %p318 = pneg %p85
        %p319 = pneg %p109
        %p320 = pneg %p106
        %p321 = pneg %p130
        %p322 = pneg %p127
        %p323 = pneg %p151
        %p324 = pneg %p148
        %p325 = pneg %p172
        %p326 = pneg %p169
        %p327 = pneg %p198
        %p328 = pneg %p195
        %s329 = sand.u32 %s185, 1
        %s330 = scalar_lea.sflag [#allocation4], %s329
        %s331 = sand.u32 %s185, 1
        %s332 = smul.addr %s331, 128
        %s333 = scalar_lea.vmem [#allocation8], %s332
        %s334 = smul.u32 32, %s25
        %s335 = ssub.s32 63, %s334
        %p336 = scmp.lt.s32.totalorder %s335, 32
        %s337 = scalar_select %p336, %s335, 32
        %s338 = smul.u32 64, %s337
        %s339 = smul.u32 %s338, 2
        %s340 = smul.u32 32, %s25
        %s341 = ssub.s32 63, %s340
        %p342 = scmp.lt.s32.totalorder %s341, 32
        %s343 = scalar_select %p342, %s341, 32
        %s344 = smul.u32 64, %s343
        %v346 = vld [vmem:[%s295] sm:$0xff]
        %v347 = vld [vmem:[%s295 + $0x8] sm:$0xff]
        %v348 = vld [vmem:[%s295 + $0x10] sm:$0xff]
        %v349 = vld [vmem:[%s295 + $0x18] sm:$0xff]
        %v350 = vld [vmem:[%s295 + $0x20] sm:$0xff]
        %v351 = vld [vmem:[%s295 + $0x28] sm:$0xff]
        %v352 = vld [vmem:[%s295 + $0x30] sm:$0xff]
        %v353 = vld [vmem:[%s295 + $0x38] sm:$0xff]
        %v354 = vld [vmem:[%s295 + $0x40] sm:$0xff]
        %v355 = vld [vmem:[%s295 + $0x48] sm:$0xff]
        %v356 = vld [vmem:[%s295 + $0x50] sm:$0xff]
        %v357 = vld [vmem:[%s295 + $0x58] sm:$0xff]
        %v358 = vld [vmem:[%s295 + $0x60] sm:$0xff]
        %v359 = vld [vmem:[%s295 + $0x68] sm:$0xff]
        %v360 = vld [vmem:[%s295 + $0x70] sm:$0xff]
        %v361 = vld [vmem:[%s295 + $0x78] sm:$0xff]
        %v362 = vld [vmem:[%s295 + $0x80] sm:$0xff]
        %v363 = vld [vmem:[%s295 + $0x88] sm:$0xff]
        %v364 = vld [vmem:[%s295 + $0x90] sm:$0xff]
        %v365 = vld [vmem:[%s295 + $0x98] sm:$0xff]
        %v366 = vld [vmem:[%s295 + $0xa0] sm:$0xff]
        %v367 = vld [vmem:[%s295 + $0xa8] sm:$0xff]
        %v368 = vld [vmem:[%s295 + $0xb0] sm:$0xff]
        %v369 = vld [vmem:[%s295 + $0xb8] sm:$0xff]
        %v370 = vld [vmem:[%s295 + $0xc0] sm:$0xff]
        %v371 = vld [vmem:[%s295 + $0xc8] sm:$0xff]
        %v372 = vld [vmem:[%s295 + $0xd0] sm:$0xff]
        %v373 = vld [vmem:[%s295 + $0xd8] sm:$0xff]
        %v374 = vld [vmem:[%s295 + $0xe0] sm:$0xff]
        %v375 = vld [vmem:[%s295 + $0xe8] sm:$0xff]
        %v376 = vld [vmem:[%s295 + $0xf0] sm:$0xff]
        %v377 = vld [vmem:[%s295 + $0xf8] sm:$0xff]
        %v378 = vld [vmem:[#allocation5] sm:$0xff]
        %v379 = vld [vmem:[#allocation5 + $0x8] sm:$0xff]
        %v380 = vld [vmem:[#allocation5 + $0x10] sm:$0xff]
        %v381 = vld [vmem:[#allocation5 + $0x18] sm:$0xff]
        %v382 = vld [vmem:[#allocation5 + $0x20] sm:$0xff]
        %v383 = vld [vmem:[#allocation5 + $0x28] sm:$0xff]
        %v384 = vld [vmem:[#allocation5 + $0x30] sm:$0xff]
        %v385 = vld [vmem:[#allocation5 + $0x38] sm:$0xff]
        %v386 = vld [vmem:[#allocation5 + $0x40] sm:$0xff]
        %v387 = vld [vmem:[#allocation5 + $0x48] sm:$0xff]
        %v388 = vld [vmem:[#allocation5 + $0x50] sm:$0xff]
        %v389 = vld [vmem:[#allocation5 + $0x58] sm:$0xff]
        %v390 = vld [vmem:[#allocation5 + $0x60] sm:$0xff]
        %v391 = vld [vmem:[#allocation5 + $0x68] sm:$0xff]
        %v392 = vld [vmem:[#allocation5 + $0x70] sm:$0xff]
        %v393 = vld [vmem:[#allocation5 + $0x78] sm:$0xff]
        %v394 = vld [vmem:[#allocation5 + $0x80] sm:$0xff]
        %v395 = vld [vmem:[#allocation5 + $0x88] sm:$0xff]
        %v396 = vld [vmem:[#allocation5 + $0x90] sm:$0xff]
        %v397 = vld [vmem:[#allocation5 + $0x98] sm:$0xff]
        %v398 = vld [vmem:[#allocation5 + $0xa0] sm:$0xff]
        %v399 = vld [vmem:[#allocation5 + $0xa8] sm:$0xff]
        %v400 = vld [vmem:[#allocation5 + $0xb0] sm:$0xff]
        %v401 = vld [vmem:[#allocation5 + $0xb8] sm:$0xff]
        %v402 = vld [vmem:[#allocation5 + $0xc0] sm:$0xff]
        %v403 = vld [vmem:[#allocation5 + $0xc8] sm:$0xff]
        %v404 = vld [vmem:[#allocation5 + $0xd0] sm:$0xff]
        %v405 = vld [vmem:[#allocation5 + $0xd8] sm:$0xff]
        %v406 = vld [vmem:[#allocation5 + $0xe0] sm:$0xff]
        %v407 = vld [vmem:[#allocation5 + $0xe8] sm:$0xff]
        %v408 = vld [vmem:[#allocation5 + $0xf0] sm:$0xff]
        %v409 = vld [vmem:[#allocation5 + $0xf8] sm:$0xff]
        %v410 = vld [vmem:[%s2] sm:$0x3]
        %v411 = vunpack.c.l.bf16 %v410
        %v413 = vlaneseq
        %v414 = vshrl.u32 %v413, 7
        %v415 = vsub.s32 0, %v414
        %v416 = vrot.slane %v411, %v415
        %v417 = vlaneseq
        %v418 = vshrl.u32 %v417, 7
        %v419 = vsub.s32 2, %v418
        %v420 = vrot.slane %v411, %v419
        %v423 = vlaneseq
        %v424 = vshrl.u32 %v423, 7
        %v425 = vsub.s32 0, %v424
        %v426 = vrot.slane %v416, %v425
        %v427 = vlaneseq
        %v428 = vshrl.u32 %v427, 7
        %v429 = vsub.s32 0, %v428
        %v430 = vrot.slane %v420, %v429
        %v463 = vunpack.c.l.b16 %v346
        %v464 = vunpack.c.h.b16 %v346
        %v465 = vunpack.c.l.b16 %v347
        %v466 = vunpack.c.h.b16 %v347
        %v467 = vunpack.c.l.b16 %v348
        %v468 = vunpack.c.h.b16 %v348
        %v469 = vunpack.c.l.b16 %v349
        %v470 = vunpack.c.h.b16 %v349
        %v471 = vunpack.c.l.b16 %v350
        %v472 = vunpack.c.h.b16 %v350
        %v473 = vunpack.c.l.b16 %v351
        %v474 = vunpack.c.h.b16 %v351
        %v475 = vunpack.c.l.b16 %v352
        %v476 = vunpack.c.h.b16 %v352
        %v477 = vunpack.c.l.b16 %v353
        %v478 = vunpack.c.h.b16 %v353
        %v479 = vunpack.c.l.b16 %v354
        %v480 = vunpack.c.h.b16 %v354
        %v481 = vunpack.c.l.b16 %v355
        %v482 = vunpack.c.h.b16 %v355
        %v483 = vunpack.c.l.b16 %v356
        %v484 = vunpack.c.h.b16 %v356
        %v485 = vunpack.c.l.b16 %v357
        %v486 = vunpack.c.h.b16 %v357
        %v487 = vunpack.c.l.b16 %v358
        %v488 = vunpack.c.h.b16 %v358
        %v489 = vunpack.c.l.b16 %v359
        %v490 = vunpack.c.h.b16 %v359
        %v491 = vunpack.c.l.b16 %v360
        %v492 = vunpack.c.h.b16 %v360
        %v493 = vunpack.c.l.b16 %v361
        %v494 = vunpack.c.h.b16 %v361
        %v495 = vunpack.c.l.b16 %v362
        %v496 = vunpack.c.h.b16 %v362
        %v497 = vunpack.c.l.b16 %v363
        %v498 = vunpack.c.h.b16 %v363
        %v499 = vunpack.c.l.b16 %v364
        %v500 = vunpack.c.h.b16 %v364
        %v501 = vunpack.c.l.b16 %v365
        %v502 = vunpack.c.h.b16 %v365
        %v503 = vunpack.c.l.b16 %v366
        %v504 = vunpack.c.h.b16 %v366
        %v505 = vunpack.c.l.b16 %v367
        %v506 = vunpack.c.h.b16 %v367
        %v507 = vunpack.c.l.b16 %v368
        %v508 = vunpack.c.h.b16 %v368
        %v509 = vunpack.c.l.b16 %v369
        %v510 = vunpack.c.h.b16 %v369
        %v511 = vunpack.c.l.b16 %v370
        %v512 = vunpack.c.h.b16 %v370
        %v513 = vunpack.c.l.b16 %v371
        %v514 = vunpack.c.h.b16 %v371
        %v515 = vunpack.c.l.b16 %v372
        %v516 = vunpack.c.h.b16 %v372
        %v517 = vunpack.c.l.b16 %v373
        %v518 = vunpack.c.h.b16 %v373
        %v519 = vunpack.c.l.b16 %v374
        %v520 = vunpack.c.h.b16 %v374
        %v521 = vunpack.c.l.b16 %v375
        %v522 = vunpack.c.h.b16 %v375
        %v523 = vunpack.c.l.b16 %v376
        %v524 = vunpack.c.h.b16 %v376
        %v525 = vunpack.c.l.b16 %v377
        %v526 = vunpack.c.h.b16 %v377
        %v527 = vpack.c.b16 %v465, %v463
        %v528 = vpack.c.b16 %v466, %v464
        %v529 = vpack.c.b16 %v469, %v467
        %v530 = vpack.c.b16 %v470, %v468
        %v531 = vpack.c.b16 %v473, %v471
        %v532 = vpack.c.b16 %v474, %v472
        %v533 = vpack.c.b16 %v477, %v475
        %v534 = vpack.c.b16 %v478, %v476
        %v535 = vpack.c.b16 %v481, %v479
        %v536 = vpack.c.b16 %v482, %v480
        %v537 = vpack.c.b16 %v485, %v483
        %v538 = vpack.c.b16 %v486, %v484
        %v539 = vpack.c.b16 %v489, %v487
        %v540 = vpack.c.b16 %v490, %v488
        %v541 = vpack.c.b16 %v493, %v491
        %v542 = vpack.c.b16 %v494, %v492
        %v543 = vpack.c.b16 %v497, %v495
        %v544 = vpack.c.b16 %v498, %v496
        %v545 = vpack.c.b16 %v501, %v499
        %v546 = vpack.c.b16 %v502, %v500
        %v547 = vpack.c.b16 %v505, %v503
        %v548 = vpack.c.b16 %v506, %v504
        %v549 = vpack.c.b16 %v509, %v507
        %v550 = vpack.c.b16 %v510, %v508
        %v551 = vpack.c.b16 %v513, %v511
        %v552 = vpack.c.b16 %v514, %v512
        %v553 = vpack.c.b16 %v517, %v515
        %v554 = vpack.c.b16 %v518, %v516
        %v555 = vpack.c.b16 %v521, %v519
        %v556 = vpack.c.b16 %v522, %v520
        %v557 = vpack.c.b16 %v525, %v523
        %v558 = vpack.c.b16 %v526, %v524
        %v623 = vunpack.c.l.b16 %v378
        %v624 = vunpack.c.h.b16 %v378
        %v625 = vunpack.c.l.b16 %v379
        %v626 = vunpack.c.h.b16 %v379
        %v627 = vunpack.c.l.b16 %v380
        %v628 = vunpack.c.h.b16 %v380
        %v629 = vunpack.c.l.b16 %v381
        %v630 = vunpack.c.h.b16 %v381
        %v631 = vunpack.c.l.b16 %v382
        %v632 = vunpack.c.h.b16 %v382
        %v633 = vunpack.c.l.b16 %v383
        %v634 = vunpack.c.h.b16 %v383
        %v635 = vunpack.c.l.b16 %v384
        %v636 = vunpack.c.h.b16 %v384
        %v637 = vunpack.c.l.b16 %v385
        %v638 = vunpack.c.h.b16 %v385
        %v639 = vunpack.c.l.b16 %v386
        %v640 = vunpack.c.h.b16 %v386
        %v641 = vunpack.c.l.b16 %v387
        %v642 = vunpack.c.h.b16 %v387
        %v643 = vunpack.c.l.b16 %v388
        %v644 = vunpack.c.h.b16 %v388
        %v645 = vunpack.c.l.b16 %v389
        %v646 = vunpack.c.h.b16 %v389
        %v647 = vunpack.c.l.b16 %v390
        %v648 = vunpack.c.h.b16 %v390
        %v649 = vunpack.c.l.b16 %v391
        %v650 = vunpack.c.h.b16 %v391
        %v651 = vunpack.c.l.b16 %v392
        %v652 = vunpack.c.h.b16 %v392
        %v653 = vunpack.c.l.b16 %v393
        %v654 = vunpack.c.h.b16 %v393
        %v655 = vunpack.c.l.b16 %v394
        %v656 = vunpack.c.h.b16 %v394
        %v657 = vunpack.c.l.b16 %v395
        %v658 = vunpack.c.h.b16 %v395
        %v659 = vunpack.c.l.b16 %v396
        %v660 = vunpack.c.h.b16 %v396
        %v661 = vunpack.c.l.b16 %v397
        %v662 = vunpack.c.h.b16 %v397
        %v663 = vunpack.c.l.b16 %v398
        %v664 = vunpack.c.h.b16 %v398
        %v665 = vunpack.c.l.b16 %v399
        %v666 = vunpack.c.h.b16 %v399
        %v667 = vunpack.c.l.b16 %v400
        %v668 = vunpack.c.h.b16 %v400
        %v669 = vunpack.c.l.b16 %v401
        %v670 = vunpack.c.h.b16 %v401
        %v671 = vunpack.c.l.b16 %v402
        %v672 = vunpack.c.h.b16 %v402
        %v673 = vunpack.c.l.b16 %v403
        %v674 = vunpack.c.h.b16 %v403
        %v675 = vunpack.c.l.b16 %v404
        %v676 = vunpack.c.h.b16 %v404
        %v677 = vunpack.c.l.b16 %v405
        %v678 = vunpack.c.h.b16 %v405
        %v679 = vunpack.c.l.b16 %v406
        %v680 = vunpack.c.h.b16 %v406
        %v681 = vunpack.c.l.b16 %v407
        %v682 = vunpack.c.h.b16 %v407
        %v683 = vunpack.c.l.b16 %v408
        %v684 = vunpack.c.h.b16 %v408
        %v685 = vunpack.c.l.b16 %v409
        %v686 = vunpack.c.h.b16 %v409
        %v687 = vpack.c.b16 %v625, %v623
        %v688 = vpack.c.b16 %v626, %v624
        %v689 = vpack.c.b16 %v629, %v627
        %v690 = vpack.c.b16 %v630, %v628
        %v691 = vpack.c.b16 %v633, %v631
        %v692 = vpack.c.b16 %v634, %v632
        %v693 = vpack.c.b16 %v637, %v635
        %v694 = vpack.c.b16 %v638, %v636
        %v695 = vpack.c.b16 %v641, %v639
        %v696 = vpack.c.b16 %v642, %v640
        %v697 = vpack.c.b16 %v645, %v643
        %v698 = vpack.c.b16 %v646, %v644
        %v699 = vpack.c.b16 %v649, %v647
        %v700 = vpack.c.b16 %v650, %v648
        %v701 = vpack.c.b16 %v653, %v651
        %v702 = vpack.c.b16 %v654, %v652
        %v703 = vpack.c.b16 %v657, %v655
        %v704 = vpack.c.b16 %v658, %v656
        %v705 = vpack.c.b16 %v661, %v659
        %v706 = vpack.c.b16 %v662, %v660
        %v707 = vpack.c.b16 %v665, %v663
        %v708 = vpack.c.b16 %v666, %v664
        %v709 = vpack.c.b16 %v669, %v667
        %v710 = vpack.c.b16 %v670, %v668
        %v711 = vpack.c.b16 %v673, %v671
        %v712 = vpack.c.b16 %v674, %v672
        %v713 = vpack.c.b16 %v677, %v675
        %v714 = vpack.c.b16 %v678, %v676
        %v715 = vpack.c.b16 %v681, %v679
        %v716 = vpack.c.b16 %v682, %v680
        %v717 = vpack.c.b16 %v685, %v683
        %v718 = vpack.c.b16 %v686, %v684
        %751 = vmatprep.subr.bf16.mxu0 %v688
        %752 = vmatpush1.bf16.msra.mxu0 %v687
        %753 = vmatprep.subr.bf16.mxu0 %v690
        %754 = vmatpush1.bf16.msra.mxu0 %v689
        %755 = vmatprep.subr.bf16.mxu0 %v692
        %756 = vmatpush1.bf16.msra.mxu0 %v691
        %757 = vmatprep.subr.bf16.mxu0 %v694
        %758 = vmatpush1.bf16.msra.mxu0 %v693
        %759 = vmatprep.subr.bf16.mxu0 %v696
        %760 = vmatpush1.bf16.msra.mxu0 %v695
        %761 = vmatprep.subr.bf16.mxu0 %v698
        %762 = vmatpush1.bf16.msra.mxu0 %v697
        %763 = vmatprep.subr.bf16.mxu0 %v700
        %764 = vmatpush1.bf16.msra.mxu0 %v699
        %765 = vmatprep.subr.bf16.mxu0 %v702
        %766 = vmatpush1.bf16.msra.mxu0 %v701
        %767 = vmatprep.subr.bf16.mxu0 %v704
        %768 = vmatpush1.bf16.msra.mxu0 %v703
        %769 = vmatprep.subr.bf16.mxu0 %v706
        %770 = vmatpush1.bf16.msra.mxu0 %v705
        %771 = vmatprep.subr.bf16.mxu0 %v708
        %772 = vmatpush1.bf16.msra.mxu0 %v707
        %773 = vmatprep.subr.bf16.mxu0 %v710
        %774 = vmatpush1.bf16.msra.mxu0 %v709
        %775 = vmatprep.subr.bf16.mxu0 %v712
        %776 = vmatpush1.bf16.msra.mxu0 %v711
        %777 = vmatprep.subr.bf16.mxu0 %v714
        %778 = vmatpush1.bf16.msra.mxu0 %v713
        %779 = vmatprep.subr.bf16.mxu0 %v716
        %780 = vmatpush1.bf16.msra.mxu0 %v715
        %781 = vmatprep.subr.bf16.mxu0 %v718
        %782 = vmatpush1.bf16.msra.mxu0 %v717
        %783 = vmatprep.mubr.bf16.mxu0 %v528
        %784 = vmatmul.mubr.bf16.gmra.mrb[0].mxu0 %v527
        %v785 = vpop.f32.mrb[0].mxu0
        %v786 = vadd.f32 %v426, %v785
        %v787 = vpop.f32.mrb[0].mxu0
        %v788 = vadd.f32 %v430, %v787
        %v789 = vpop.f32.mrb[0].mxu0
        %v790 = vadd.f32 %v426, %v789
        %v791 = vpop.f32.mrb[0].mxu0
        %v792 = vadd.f32 %v430, %v791
        %793 = vmatprep.mubr.bf16.mxu0 %v530
        %794 = vmatmul.mubr.bf16.gmra.mrb[0].mxu0 %v529
        %v795 = vpop.f32.mrb[0].mxu0
        %v796 = vadd.f32 %v426, %v795
        %v797 = vpop.f32.mrb[0].mxu0
        %v798 = vadd.f32 %v430, %v797
        %v799 = vpop.f32.mrb[0].mxu0
        %v800 = vadd.f32 %v426, %v799
        %v801 = vpop.f32.mrb[0].mxu0
        %v802 = vadd.f32 %v430, %v801
        %803 = vmatprep.mubr.bf16.mxu0 %v532
        %804 = vmatmul.mubr.bf16.gmra.mrb[0].mxu0 %v531
        %v805 = vpop.f32.mrb[0].mxu0
        %v806 = vadd.f32 %v426, %v805
        %v807 = vpop.f32.mrb[0].mxu0
        %v808 = vadd.f32 %v430, %v807
        %v809 = vpop.f32.mrb[0].mxu0
        %v810 = vadd.f32 %v426, %v809
        %v811 = vpop.f32.mrb[0].mxu0
        %v812 = vadd.f32 %v430, %v811
        %813 = vmatprep.mubr.bf16.mxu0 %v534
        %814 = vmatmul.mubr.bf16.gmra.mrb[0].mxu0 %v533
        %v815 = vpop.f32.mrb[0].mxu0
        %v816 = vadd.f32 %v426, %v815
        %v817 = vpop.f32.mrb[0].mxu0
        %v818 = vadd.f32 %v430, %v817
        %v819 = vpop.f32.mrb[0].mxu0
        %v820 = vadd.f32 %v426, %v819
        %v821 = vpop.f32.mrb[0].mxu0
        %v822 = vadd.f32 %v430, %v821
        %823 = vmatprep.mubr.bf16.mxu0 %v536
        %824 = vmatmul.mubr.bf16.gmra.mrb[0].mxu0 %v535
        %v825 = vpop.f32.mrb[0].mxu0
        %v826 = vadd.f32 %v426, %v825
        %v827 = vpop.f32.mrb[0].mxu0
        %v828 = vadd.f32 %v430, %v827
        %v829 = vpop.f32.mrb[0].mxu0
        %v830 = vadd.f32 %v426, %v829
        %v831 = vpop.f32.mrb[0].mxu0
        %v832 = vadd.f32 %v430, %v831
        %833 = vmatprep.mubr.bf16.mxu0 %v538
        %834 = vmatmul.mubr.bf16.gmra.mrb[0].mxu0 %v537
        %v835 = vpop.f32.mrb[0].mxu0
        %v836 = vadd.f32 %v426, %v835
        %v837 = vpop.f32.mrb[0].mxu0
        %v838 = vadd.f32 %v430, %v837
        %v839 = vpop.f32.mrb[0].mxu0
        %v840 = vadd.f32 %v426, %v839
        %v841 = vpop.f32.mrb[0].mxu0
        %v842 = vadd.f32 %v430, %v841
        %843 = vmatprep.mubr.bf16.mxu0 %v540
        %844 = vmatmul.mubr.bf16.gmra.mrb[0].mxu0 %v539
        %v845 = vpop.f32.mrb[0].mxu0
        %v846 = vadd.f32 %v426, %v845
        %v847 = vpop.f32.mrb[0].mxu0
        %v848 = vadd.f32 %v430, %v847
        %v849 = vpop.f32.mrb[0].mxu0
        %v850 = vadd.f32 %v426, %v849
        %v851 = vpop.f32.mrb[0].mxu0
        %v852 = vadd.f32 %v430, %v851
        %853 = vmatprep.mubr.bf16.mxu0 %v542
        %854 = vmatmul.mubr.bf16.gmra.mrb[0].mxu0 %v541
        %v855 = vpop.f32.mrb[0].mxu0
        %v856 = vadd.f32 %v426, %v855
        %v857 = vpop.f32.mrb[0].mxu0
        %v858 = vadd.f32 %v430, %v857
        %v859 = vpop.f32.mrb[0].mxu0
        %v860 = vadd.f32 %v426, %v859
        %v861 = vpop.f32.mrb[0].mxu0
        %v862 = vadd.f32 %v430, %v861
        %863 = vmatprep.mubr.bf16.mxu0 %v544
        %864 = vmatmul.mubr.bf16.gmra.mrb[0].mxu0 %v543
        %v865 = vpop.f32.mrb[0].mxu0
        %v866 = vadd.f32 %v426, %v865
        %v867 = vpop.f32.mrb[0].mxu0
        %v868 = vadd.f32 %v430, %v867
        %v869 = vpop.f32.mrb[0].mxu0
        %v870 = vadd.f32 %v426, %v869
        %v871 = vpop.f32.mrb[0].mxu0
        %v872 = vadd.f32 %v430, %v871
        %873 = vmatprep.mubr.bf16.mxu0 %v546
        %874 = vmatmul.mubr.bf16.gmra.mrb[0].mxu0 %v545
        %v875 = vpop.f32.mrb[0].mxu0
        %v876 = vadd.f32 %v426, %v875
        %v877 = vpop.f32.mrb[0].mxu0
        %v878 = vadd.f32 %v430, %v877
        %v879 = vpop.f32.mrb[0].mxu0
        %v880 = vadd.f32 %v426, %v879
        %v881 = vpop.f32.mrb[0].mxu0
        %v882 = vadd.f32 %v430, %v881
        %883 = vmatprep.mubr.bf16.mxu0 %v548
        %884 = vmatmul.mubr.bf16.gmra.mrb[0].mxu0 %v547
        %v885 = vpop.f32.mrb[0].mxu0
        %v886 = vadd.f32 %v426, %v885
        %v887 = vpop.f32.mrb[0].mxu0
        %v888 = vadd.f32 %v430, %v887
        %v889 = vpop.f32.mrb[0].mxu0
        %v890 = vadd.f32 %v426, %v889
        %v891 = vpop.f32.mrb[0].mxu0
        %v892 = vadd.f32 %v430, %v891
        %893 = vmatprep.mubr.bf16.mxu0 %v550
        %894 = vmatmul.mubr.bf16.gmra.mrb[0].mxu0 %v549
        %v895 = vpop.f32.mrb[0].mxu0
        %v896 = vadd.f32 %v426, %v895
        %v897 = vpop.f32.mrb[0].mxu0
        %v898 = vadd.f32 %v430, %v897
        %v899 = vpop.f32.mrb[0].mxu0
        %v900 = vadd.f32 %v426, %v899
        %v901 = vpop.f32.mrb[0].mxu0
        %v902 = vadd.f32 %v430, %v901
        %903 = vmatprep.mubr.bf16.mxu0 %v552
        %904 = vmatmul.mubr.bf16.gmra.mrb[0].mxu0 %v551
        %v905 = vpop.f32.mrb[0].mxu0
        %v906 = vadd.f32 %v426, %v905
        %v907 = vpop.f32.mrb[0].mxu0
        %v908 = vadd.f32 %v430, %v907
        %v909 = vpop.f32.mrb[0].mxu0
        %v910 = vadd.f32 %v426, %v909
        %v911 = vpop.f32.mrb[0].mxu0
        %v912 = vadd.f32 %v430, %v911
        %913 = vmatprep.mubr.bf16.mxu0 %v554
        %914 = vmatmul.mubr.bf16.gmra.mrb[0].mxu0 %v553
        %v915 = vpop.f32.mrb[0].mxu0
        %v916 = vadd.f32 %v426, %v915
        %v917 = vpop.f32.mrb[0].mxu0
        %v918 = vadd.f32 %v430, %v917
        %v919 = vpop.f32.mrb[0].mxu0
        %v920 = vadd.f32 %v426, %v919
        %v921 = vpop.f32.mrb[0].mxu0
        %v922 = vadd.f32 %v430, %v921
        %923 = vmatprep.mubr.bf16.mxu0 %v556
        %924 = vmatmul.mubr.bf16.gmra.mrb[0].mxu0 %v555
        %v925 = vpop.f32.mrb[0].mxu0
        %v926 = vadd.f32 %v426, %v925
        %v927 = vpop.f32.mrb[0].mxu0
        %v928 = vadd.f32 %v430, %v927
        %v929 = vpop.f32.mrb[0].mxu0
        %v930 = vadd.f32 %v426, %v929
        %v931 = vpop.f32.mrb[0].mxu0
        %v932 = vadd.f32 %v430, %v931
        %933 = vmatprep.mubr.bf16.mxu0 %v558
        %934 = vmatmul.mubr.bf16.gmra.mrb[0].mxu0 %v557
        %v935 = vpop.f32.mrb[0].mxu0
        %v936 = vadd.f32 %v426, %v935
        %v937 = vpop.f32.mrb[0].mxu0
        %v938 = vadd.f32 %v430, %v937
        %v939 = vpop.f32.mrb[0].mxu0
        %v940 = vadd.f32 %v426, %v939
        %v941 = vpop.f32.mrb[0].mxu0
        %v942 = vadd.f32 %v430, %v941
        %943 = vdwg.mxu0
        %v944 = vmul.f32 %v786, 0.5
        %v945 = vmul.f32 %v788, 0.5
        %v946 = vmul.f32 %v790, 0.5
        %v947 = vmul.f32 %v792, 0.5
        %v948 = vmul.f32 %v796, 0.5
        %v949 = vmul.f32 %v798, 0.5
        %v950 = vmul.f32 %v800, 0.5
        %v951 = vmul.f32 %v802, 0.5
        %v952 = vmul.f32 %v806, 0.5
        %v953 = vmul.f32 %v808, 0.5
        %v954 = vmul.f32 %v810, 0.5
        %v955 = vmul.f32 %v812, 0.5
        %v956 = vmul.f32 %v816, 0.5
        %v957 = vmul.f32 %v818, 0.5
        %v958 = vmul.f32 %v820, 0.5
        %v959 = vmul.f32 %v822, 0.5
        %v960 = vmul.f32 %v826, 0.5
        %v961 = vmul.f32 %v828, 0.5
        %v962 = vmul.f32 %v830, 0.5
        %v963 = vmul.f32 %v832, 0.5
        %v964 = vmul.f32 %v836, 0.5
        %v965 = vmul.f32 %v838, 0.5
        %v966 = vmul.f32 %v840, 0.5
        %v967 = vmul.f32 %v842, 0.5
        %v968 = vmul.f32 %v846, 0.5
        %v969 = vmul.f32 %v848, 0.5
        %v970 = vmul.f32 %v850, 0.5
        %v971 = vmul.f32 %v852, 0.5
        %v972 = vmul.f32 %v856, 0.5
        %v973 = vmul.f32 %v858, 0.5
        %v974 = vmul.f32 %v860, 0.5
        %v975 = vmul.f32 %v862, 0.5
        %v976 = vmul.f32 %v866, 0.5
        %v977 = vmul.f32 %v868, 0.5
        %v978 = vmul.f32 %v870, 0.5
        %v979 = vmul.f32 %v872, 0.5
        %v980 = vmul.f32 %v876, 0.5
        %v981 = vmul.f32 %v878, 0.5
        %v982 = vmul.f32 %v880, 0.5
        %v983 = vmul.f32 %v882, 0.5
        %v984 = vmul.f32 %v886, 0.5
        %v985 = vmul.f32 %v888, 0.5
        %v986 = vmul.f32 %v890, 0.5
        %v987 = vmul.f32 %v892, 0.5
        %v988 = vmul.f32 %v896, 0.5
        %v989 = vmul.f32 %v898, 0.5
        %v990 = vmul.f32 %v900, 0.5
        %v991 = vmul.f32 %v902, 0.5
        %v992 = vmul.f32 %v906, 0.5
        %v993 = vmul.f32 %v908, 0.5
        %v994 = vmul.f32 %v910, 0.5
        %v995 = vmul.f32 %v912, 0.5
        %v996 = vmul.f32 %v916, 0.5
        %v997 = vmul.f32 %v918, 0.5
        %v998 = vmul.f32 %v920, 0.5
        %v999 = vmul.f32 %v922, 0.5
        %v1000 = vmul.f32 %v926, 0.5
        %v1001 = vmul.f32 %v928, 0.5
        %v1002 = vmul.f32 %v930, 0.5
        %v1003 = vmul.f32 %v932, 0.5
        %v1004 = vmul.f32 %v936, 0.5
        %v1005 = vmul.f32 %v938, 0.5
        %v1006 = vmul.f32 %v940, 0.5
        %v1007 = vmul.f32 %v942, 0.5
        %v1008 = vmul.f32 %v786, 0.70710677
        %v1009 = vmul.f32 %v788, 0.70710677
        %v1010 = vmul.f32 %v790, 0.70710677
        %v1011 = vmul.f32 %v792, 0.70710677
        %v1012 = vmul.f32 %v796, 0.70710677
        %v1013 = vmul.f32 %v798, 0.70710677
        %v1014 = vmul.f32 %v800, 0.70710677
        %v1015 = vmul.f32 %v802, 0.70710677
        %v1016 = vmul.f32 %v806, 0.70710677
        %v1017 = vmul.f32 %v808, 0.70710677
        %v1018 = vmul.f32 %v810, 0.70710677
        %v1019 = vmul.f32 %v812, 0.70710677
        %v1020 = vmul.f32 %v816, 0.70710677
        %v1021 = vmul.f32 %v818, 0.70710677
        %v1022 = vmul.f32 %v820, 0.70710677
        %v1023 = vmul.f32 %v822, 0.70710677
        %v1024 = vmul.f32 %v826, 0.70710677
        %v1025 = vmul.f32 %v828, 0.70710677
        %v1026 = vmul.f32 %v830, 0.70710677
        %v1027 = vmul.f32 %v832, 0.70710677
        %v1028 = vmul.f32 %v836, 0.70710677
        %v1029 = vmul.f32 %v838, 0.70710677
        %v1030 = vmul.f32 %v840, 0.70710677
        %v1031 = vmul.f32 %v842, 0.70710677
        %v1032 = vmul.f32 %v846, 0.70710677
        %v1033 = vmul.f32 %v848, 0.70710677
        %v1034 = vmul.f32 %v850, 0.70710677
        %v1035 = vmul.f32 %v852, 0.70710677
        %v1036 = vmul.f32 %v856, 0.70710677
        %v1037 = vmul.f32 %v858, 0.70710677
        %v1038 = vmul.f32 %v860, 0.70710677
        %v1039 = vmul.f32 %v862, 0.70710677
        %v1040 = vmul.f32 %v866, 0.70710677
        %v1041 = vmul.f32 %v868, 0.70710677
        %v1042 = vmul.f32 %v870, 0.70710677
        %v1043 = vmul.f32 %v872, 0.70710677
        %v1044 = vmul.f32 %v876, 0.70710677
        %v1045 = vmul.f32 %v878, 0.70710677
        %v1046 = vmul.f32 %v880, 0.70710677
        %v1047 = vmul.f32 %v882, 0.70710677
        %v1048 = vmul.f32 %v886, 0.70710677
        %v1049 = vmul.f32 %v888, 0.70710677
        %v1050 = vmul.f32 %v890, 0.70710677
        %v1051 = vmul.f32 %v892, 0.70710677
        %v1052 = vmul.f32 %v896, 0.70710677
        %v1053 = vmul.f32 %v898, 0.70710677
        %v1054 = vmul.f32 %v900, 0.70710677
        %v1055 = vmul.f32 %v902, 0.70710677
        %v1056 = vmul.f32 %v906, 0.70710677
        %v1057 = vmul.f32 %v908, 0.70710677
        %v1058 = vmul.f32 %v910, 0.70710677
        %v1059 = vmul.f32 %v912, 0.70710677
        %v1060 = vmul.f32 %v916, 0.70710677
        %v1061 = vmul.f32 %v918, 0.70710677
        %v1062 = vmul.f32 %v920, 0.70710677
        %v1063 = vmul.f32 %v922, 0.70710677
        %v1064 = vmul.f32 %v926, 0.70710677
        %v1065 = vmul.f32 %v928, 0.70710677
        %v1066 = vmul.f32 %v930, 0.70710677
        %v1067 = vmul.f32 %v932, 0.70710677
        %v1068 = vmul.f32 %v936, 0.70710677
        %v1069 = vmul.f32 %v938, 0.70710677
        %v1070 = vmul.f32 %v940, 0.70710677
        %v1071 = vmul.f32 %v942, 0.70710677
        %v1072 = verf.f32.pop %v1008
        %v1073 = verf.f32.pop %v1009
        %v1074 = verf.f32.pop %v1010
        %v1075 = verf.f32.pop %v1011
        %v1076 = verf.f32.pop %v1012
        %v1077 = verf.f32.pop %v1013
        %v1078 = verf.f32.pop %v1014
        %v1079 = verf.f32.pop %v1015
        %v1080 = verf.f32.pop %v1016
        %v1081 = verf.f32.pop %v1017
        %v1082 = verf.f32.pop %v1018
        %v1083 = verf.f32.pop %v1019
        %v1084 = verf.f32.pop %v1020
        %v1085 = verf.f32.pop %v1021
        %v1086 = verf.f32.pop %v1022
        %v1087 = verf.f32.pop %v1023
        %v1088 = verf.f32.pop %v1024
        %v1089 = verf.f32.pop %v1025
        %v1090 = verf.f32.pop %v1026
        %v1091 = verf.f32.pop %v1027
        %v1092 = verf.f32.pop %v1028
        %v1093 = verf.f32.pop %v1029
        %v1094 = verf.f32.pop %v1030
        %v1095 = verf.f32.pop %v1031
        %v1096 = verf.f32.pop %v1032
        %v1097 = verf.f32.pop %v1033
        %v1098 = verf.f32.pop %v1034
        %v1099 = verf.f32.pop %v1035
        %v1100 = verf.f32.pop %v1036
        %v1101 = verf.f32.pop %v1037
        %v1102 = verf.f32.pop %v1038
        %v1103 = verf.f32.pop %v1039
        %v1104 = verf.f32.pop %v1040
        %v1105 = verf.f32.pop %v1041
        %v1106 = verf.f32.pop %v1042
        %v1107 = verf.f32.pop %v1043
        %v1108 = verf.f32.pop %v1044
        %v1109 = verf.f32.pop %v1045
        %v1110 = verf.f32.pop %v1046
        %v1111 = verf.f32.pop %v1047
        %v1112 = verf.f32.pop %v1048
        %v1113 = verf.f32.pop %v1049
        %v1114 = verf.f32.pop %v1050
        %v1115 = verf.f32.pop %v1051
        %v1116 = verf.f32.pop %v1052
        %v1117 = verf.f32.pop %v1053
        %v1118 = verf.f32.pop %v1054
        %v1119 = verf.f32.pop %v1055
        %v1120 = verf.f32.pop %v1056
        %v1121 = verf.f32.pop %v1057
        %v1122 = verf.f32.pop %v1058
        %v1123 = verf.f32.pop %v1059
        %v1124 = verf.f32.pop %v1060
        %v1125 = verf.f32.pop %v1061
        %v1126 = verf.f32.pop %v1062
        %v1127 = verf.f32.pop %v1063
        %v1128 = verf.f32.pop %v1064
        %v1129 = verf.f32.pop %v1065
        %v1130 = verf.f32.pop %v1066
        %v1131 = verf.f32.pop %v1067
        %v1132 = verf.f32.pop %v1068
        %v1133 = verf.f32.pop %v1069
        %v1134 = verf.f32.pop %v1070
        %v1135 = verf.f32.pop %v1071
        %v1136 = vadd.f32 %v1072, 1.0
        %v1137 = vadd.f32 %v1073, 1.0
        %v1138 = vadd.f32 %v1074, 1.0
        %v1139 = vadd.f32 %v1075, 1.0
        %v1140 = vadd.f32 %v1076, 1.0
        %v1141 = vadd.f32 %v1077, 1.0
        %v1142 = vadd.f32 %v1078, 1.0
        %v1143 = vadd.f32 %v1079, 1.0
        %v1144 = vadd.f32 %v1080, 1.0
        %v1145 = vadd.f32 %v1081, 1.0
        %v1146 = vadd.f32 %v1082, 1.0
        %v1147 = vadd.f32 %v1083, 1.0
        %v1148 = vadd.f32 %v1084, 1.0
        %v1149 = vadd.f32 %v1085, 1.0
        %v1150 = vadd.f32 %v1086, 1.0
        %v1151 = vadd.f32 %v1087, 1.0
        %v1152 = vadd.f32 %v1088, 1.0
        %v1153 = vadd.f32 %v1089, 1.0
        %v1154 = vadd.f32 %v1090, 1.0
        %v1155 = vadd.f32 %v1091, 1.0
        %v1156 = vadd.f32 %v1092, 1.0
        %v1157 = vadd.f32 %v1093, 1.0
        %v1158 = vadd.f32 %v1094, 1.0
        %v1159 = vadd.f32 %v1095, 1.0
        %v1160 = vadd.f32 %v1096, 1.0
        %v1161 = vadd.f32 %v1097, 1.0
        %v1162 = vadd.f32 %v1098, 1.0
        %v1163 = vadd.f32 %v1099, 1.0
        %v1164 = vadd.f32 %v1100, 1.0
        %v1165 = vadd.f32 %v1101, 1.0
        %v1166 = vadd.f32 %v1102, 1.0
        %v1167 = vadd.f32 %v1103, 1.0
        %v1168 = vadd.f32 %v1104, 1.0
        %v1169 = vadd.f32 %v1105, 1.0
        %v1170 = vadd.f32 %v1106, 1.0
        %v1171 = vadd.f32 %v1107, 1.0
        %v1172 = vadd.f32 %v1108, 1.0
        %v1173 = vadd.f32 %v1109, 1.0
        %v1174 = vadd.f32 %v1110, 1.0
        %v1175 = vadd.f32 %v1111, 1.0
        %v1176 = vadd.f32 %v1112, 1.0
        %v1177 = vadd.f32 %v1113, 1.0
        %v1178 = vadd.f32 %v1114, 1.0
        %v1179 = vadd.f32 %v1115, 1.0
        %v1180 = vadd.f32 %v1116, 1.0
        %v1181 = vadd.f32 %v1117, 1.0
        %v1182 = vadd.f32 %v1118, 1.0
        %v1183 = vadd.f32 %v1119, 1.0
        %v1184 = vadd.f32 %v1120, 1.0
        %v1185 = vadd.f32 %v1121, 1.0
        %v1186 = vadd.f32 %v1122, 1.0
        %v1187 = vadd.f32 %v1123, 1.0
        %v1188 = vadd.f32 %v1124, 1.0
        %v1189 = vadd.f32 %v1125, 1.0
        %v1190 = vadd.f32 %v1126, 1.0
        %v1191 = vadd.f32 %v1127, 1.0
        %v1192 = vadd.f32 %v1128, 1.0
        %v1193 = vadd.f32 %v1129, 1.0
        %v1194 = vadd.f32 %v1130, 1.0
        %v1195 = vadd.f32 %v1131, 1.0
        %v1196 = vadd.f32 %v1132, 1.0
        %v1197 = vadd.f32 %v1133, 1.0
        %v1198 = vadd.f32 %v1134, 1.0
        %v1199 = vadd.f32 %v1135, 1.0
        %v1200 = vmul.f32 %v944, %v1136
        %v1201 = vmul.f32 %v945, %v1137
        %v1202 = vmul.f32 %v946, %v1138
        %v1203 = vmul.f32 %v947, %v1139
        %v1204 = vmul.f32 %v948, %v1140
        %v1205 = vmul.f32 %v949, %v1141
        %v1206 = vmul.f32 %v950, %v1142
        %v1207 = vmul.f32 %v951, %v1143
        %v1208 = vmul.f32 %v952, %v1144
        %v1209 = vmul.f32 %v953, %v1145
        %v1210 = vmul.f32 %v954, %v1146
        %v1211 = vmul.f32 %v955, %v1147
        %v1212 = vmul.f32 %v956, %v1148
        %v1213 = vmul.f32 %v957, %v1149
        %v1214 = vmul.f32 %v958, %v1150
        %v1215 = vmul.f32 %v959, %v1151
        %v1216 = vmul.f32 %v960, %v1152
        %v1217 = vmul.f32 %v961, %v1153
        %v1218 = vmul.f32 %v962, %v1154
        %v1219 = vmul.f32 %v963, %v1155
        %v1220 = vmul.f32 %v964, %v1156
        %v1221 = vmul.f32 %v965, %v1157
        %v1222 = vmul.f32 %v966, %v1158
        %v1223 = vmul.f32 %v967, %v1159
        %v1224 = vmul.f32 %v968, %v1160
        %v1225 = vmul.f32 %v969, %v1161
        %v1226 = vmul.f32 %v970, %v1162
        %v1227 = vmul.f32 %v971, %v1163
        %v1228 = vmul.f32 %v972, %v1164
        %v1229 = vmul.f32 %v973, %v1165
        %v1230 = vmul.f32 %v974, %v1166
        %v1231 = vmul.f32 %v975, %v1167
        %v1232 = vmul.f32 %v976, %v1168
        %v1233 = vmul.f32 %v977, %v1169
        %v1234 = vmul.f32 %v978, %v1170
        %v1235 = vmul.f32 %v979, %v1171
        %v1236 = vmul.f32 %v980, %v1172
        %v1237 = vmul.f32 %v981, %v1173
        %v1238 = vmul.f32 %v982, %v1174
        %v1239 = vmul.f32 %v983, %v1175
        %v1240 = vmul.f32 %v984, %v1176
        %v1241 = vmul.f32 %v985, %v1177
        %v1242 = vmul.f32 %v986, %v1178
        %v1243 = vmul.f32 %v987, %v1179
        %v1244 = vmul.f32 %v988, %v1180
        %v1245 = vmul.f32 %v989, %v1181
        %v1246 = vmul.f32 %v990, %v1182
        %v1247 = vmul.f32 %v991, %v1183
        %v1248 = vmul.f32 %v992, %v1184
        %v1249 = vmul.f32 %v993, %v1185
        %v1250 = vmul.f32 %v994, %v1186
        %v1251 = vmul.f32 %v995, %v1187
        %v1252 = vmul.f32 %v996, %v1188
        %v1253 = vmul.f32 %v997, %v1189
        %v1254 = vmul.f32 %v998, %v1190
        %v1255 = vmul.f32 %v999, %v1191
        %v1256 = vmul.f32 %v1000, %v1192
        %v1257 = vmul.f32 %v1001, %v1193
        %v1258 = vmul.f32 %v1002, %v1194
        %v1259 = vmul.f32 %v1003, %v1195
        %v1260 = vmul.f32 %v1004, %v1196
        %v1261 = vmul.f32 %v1005, %v1197
        %v1262 = vmul.f32 %v1006, %v1198
        %v1263 = vmul.f32 %v1007, %v1199
        %v1264 = vpack.c.bf16 %v1202, %v1200
        %v1265 = vpack.c.bf16 %v1203, %v1201
        %v1266 = vpack.c.bf16 %v1206, %v1204
        %v1267 = vpack.c.bf16 %v1207, %v1205
        %v1268 = vpack.c.bf16 %v1210, %v1208
        %v1269 = vpack.c.bf16 %v1211, %v1209
        %v1270 = vpack.c.bf16 %v1214, %v1212
        %v1271 = vpack.c.bf16 %v1215, %v1213
        %v1272 = vpack.c.bf16 %v1218, %v1216
        %v1273 = vpack.c.bf16 %v1219, %v1217
        %v1274 = vpack.c.bf16 %v1222, %v1220
        %v1275 = vpack.c.bf16 %v1223, %v1221
        %v1276 = vpack.c.bf16 %v1226, %v1224
        %v1277 = vpack.c.bf16 %v1227, %v1225
        %v1278 = vpack.c.bf16 %v1230, %v1228
        %v1279 = vpack.c.bf16 %v1231, %v1229
        %v1280 = vpack.c.bf16 %v1234, %v1232
        %v1281 = vpack.c.bf16 %v1235, %v1233
        %v1282 = vpack.c.bf16 %v1238, %v1236
        %v1283 = vpack.c.bf16 %v1239, %v1237
        %v1284 = vpack.c.bf16 %v1242, %v1240
        %v1285 = vpack.c.bf16 %v1243, %v1241
        %v1286 = vpack.c.bf16 %v1246, %v1244
        %v1287 = vpack.c.bf16 %v1247, %v1245
        %v1288 = vpack.c.bf16 %v1250, %v1248
        %v1289 = vpack.c.bf16 %v1251, %v1249
        %v1290 = vpack.c.bf16 %v1254, %v1252
        %v1291 = vpack.c.bf16 %v1255, %v1253
        %v1292 = vpack.c.bf16 %v1258, %v1256
        %v1293 = vpack.c.bf16 %v1259, %v1257
        %v1294 = vpack.c.bf16 %v1262, %v1260
        %v1295 = vpack.c.bf16 %v1263, %v1261
        %v1296 = vld [vmem:[#allocation7] sm:$0xf]
        %v1297 = vld [vmem:[#allocation7 + $0x4] sm:$0xf]
        %v1298 = vld [vmem:[#allocation7 + $0x8] sm:$0xf]
        %v1299 = vld [vmem:[#allocation7 + $0xc] sm:$0xf]
        %v1300 = vld [vmem:[#allocation7 + $0x10] sm:$0xf]
        %v1301 = vld [vmem:[#allocation7 + $0x14] sm:$0xf]
        %v1302 = vld [vmem:[#allocation7 + $0x18] sm:$0xf]
        %v1303 = vld [vmem:[#allocation7 + $0x1c] sm:$0xf]
        %v1304 = vld [vmem:[#allocation7 + $0x20] sm:$0xf]
        %v1305 = vld [vmem:[#allocation7 + $0x24] sm:$0xf]
        %v1306 = vld [vmem:[#allocation7 + $0x28] sm:$0xf]
        %v1307 = vld [vmem:[#allocation7 + $0x2c] sm:$0xf]
        %v1308 = vld [vmem:[#allocation7 + $0x30] sm:$0xf]
        %v1309 = vld [vmem:[#allocation7 + $0x34] sm:$0xf]
        %v1310 = vld [vmem:[#allocation7 + $0x38] sm:$0xf]
        %v1311 = vld [vmem:[#allocation7 + $0x3c] sm:$0xf]
        %v1312 = vld [vmem:[#allocation7 + $0x40] sm:$0xf]
        %v1313 = vld [vmem:[#allocation7 + $0x44] sm:$0xf]
        %v1314 = vld [vmem:[#allocation7 + $0x48] sm:$0xf]
        %v1315 = vld [vmem:[#allocation7 + $0x4c] sm:$0xf]
        %v1316 = vld [vmem:[#allocation7 + $0x50] sm:$0xf]
        %v1317 = vld [vmem:[#allocation7 + $0x54] sm:$0xf]
        %v1318 = vld [vmem:[#allocation7 + $0x58] sm:$0xf]
        %v1319 = vld [vmem:[#allocation7 + $0x5c] sm:$0xf]
        %v1320 = vld [vmem:[#allocation7 + $0x60] sm:$0xf]
        %v1321 = vld [vmem:[#allocation7 + $0x64] sm:$0xf]
        %v1322 = vld [vmem:[#allocation7 + $0x68] sm:$0xf]
        %v1323 = vld [vmem:[#allocation7 + $0x6c] sm:$0xf]
        %v1324 = vld [vmem:[#allocation7 + $0x70] sm:$0xf]
        %v1325 = vld [vmem:[#allocation7 + $0x74] sm:$0xf]
        %v1326 = vld [vmem:[#allocation7 + $0x78] sm:$0xf]
        %v1327 = vld [vmem:[#allocation7 + $0x7c] sm:$0xf]
        %v1328 = vld [vmem:[%s4] sm:$0x1]
        %v1329 = vunpack.c.l.bf16 %v1328
        %v1330 = vlaneseq
        %v1331 = vshrl.u32 %v1330, 7
        %v1332 = vsub.s32 0, %v1331
        %v1333 = vrot.slane %v1329, %v1332
        %v1366 = vunpack.c.l.b16 %v1296
        %v1367 = vunpack.c.l.b16 %v1297
        %v1368 = vunpack.c.l.b16 %v1298
        %v1369 = vunpack.c.l.b16 %v1299
        %v1370 = vunpack.c.l.b16 %v1300
        %v1371 = vunpack.c.l.b16 %v1301
        %v1372 = vunpack.c.l.b16 %v1302
        %v1373 = vunpack.c.l.b16 %v1303
        %v1374 = vunpack.c.l.b16 %v1304
        %v1375 = vunpack.c.l.b16 %v1305
        %v1376 = vunpack.c.l.b16 %v1306
        %v1377 = vunpack.c.l.b16 %v1307
        %v1378 = vunpack.c.l.b16 %v1308
        %v1379 = vunpack.c.l.b16 %v1309
        %v1380 = vunpack.c.l.b16 %v1310
        %v1381 = vunpack.c.l.b16 %v1311
        %v1382 = vunpack.c.l.b16 %v1312
        %v1383 = vunpack.c.l.b16 %v1313
        %v1384 = vunpack.c.l.b16 %v1314
        %v1385 = vunpack.c.l.b16 %v1315
        %v1386 = vunpack.c.l.b16 %v1316
        %v1387 = vunpack.c.l.b16 %v1317
        %v1388 = vunpack.c.l.b16 %v1318
        %v1389 = vunpack.c.l.b16 %v1319
        %v1390 = vunpack.c.l.b16 %v1320
        %v1391 = vunpack.c.l.b16 %v1321
        %v1392 = vunpack.c.l.b16 %v1322
        %v1393 = vunpack.c.l.b16 %v1323
        %v1394 = vunpack.c.l.b16 %v1324
        %v1395 = vunpack.c.l.b16 %v1325
        %v1396 = vunpack.c.l.b16 %v1326
        %v1397 = vunpack.c.l.b16 %v1327
        %v1398 = vpack.c.b16 %v1367, %v1366
        %v1399 = vpack.c.b16 %v1369, %v1368
        %v1400 = vpack.c.b16 %v1371, %v1370
        %v1401 = vpack.c.b16 %v1373, %v1372
        %v1402 = vpack.c.b16 %v1375, %v1374
        %v1403 = vpack.c.b16 %v1377, %v1376
        %v1404 = vpack.c.b16 %v1379, %v1378
        %v1405 = vpack.c.b16 %v1381, %v1380
        %v1406 = vpack.c.b16 %v1383, %v1382
        %v1407 = vpack.c.b16 %v1385, %v1384
        %v1408 = vpack.c.b16 %v1387, %v1386
        %v1409 = vpack.c.b16 %v1389, %v1388
        %v1410 = vpack.c.b16 %v1391, %v1390
        %v1411 = vpack.c.b16 %v1393, %v1392
        %v1412 = vpack.c.b16 %v1395, %v1394
        %v1413 = vpack.c.b16 %v1397, %v1396
        %1430 = vmatprep.subr.bf16.mxu0 0
        %1431 = vmatpush1.bf16.msra.mxu0 %v1398
        %1432 = vmatprep.subr.bf16.mxu0 0
        %1433 = vmatpush1.bf16.msra.mxu0 %v1399
        %1434 = vmatprep.subr.bf16.mxu0 0
        %1435 = vmatpush1.bf16.msra.mxu0 %v1400
        %1436 = vmatprep.subr.bf16.mxu0 0
        %1437 = vmatpush1.bf16.msra.mxu0 %v1401
        %1438 = vmatprep.subr.bf16.mxu0 0
        %1439 = vmatpush1.bf16.msra.mxu0 %v1402
        %1440 = vmatprep.subr.bf16.mxu0 0
        %1441 = vmatpush1.bf16.msra.mxu0 %v1403
        %1442 = vmatprep.subr.bf16.mxu0 0
        %1443 = vmatpush1.bf16.msra.mxu0 %v1404
        %1444 = vmatprep.subr.bf16.mxu0 0
        %1445 = vmatpush1.bf16.msra.mxu0 %v1405
        %1446 = vmatprep.subr.bf16.mxu0 0
        %1447 = vmatpush1.bf16.msra.mxu0 %v1406
        %1448 = vmatprep.subr.bf16.mxu0 0
        %1449 = vmatpush1.bf16.msra.mxu0 %v1407
        %1450 = vmatprep.subr.bf16.mxu0 0
        %1451 = vmatpush1.bf16.msra.mxu0 %v1408
        %1452 = vmatprep.subr.bf16.mxu0 0
        %1453 = vmatpush1.bf16.msra.mxu0 %v1409
        %1454 = vmatprep.subr.bf16.mxu0 0
        %1455 = vmatpush1.bf16.msra.mxu0 %v1410
        %1456 = vmatprep.subr.bf16.mxu0 0
        %1457 = vmatpush1.bf16.msra.mxu0 %v1411
        %1458 = vmatprep.subr.bf16.mxu0 0
        %1459 = vmatpush1.bf16.msra.mxu0 %v1412
        %1460 = vmatprep.subr.bf16.mxu0 0
        %1461 = vmatpush1.bf16.msra.mxu0 %v1413
        %1462 = vmatprep.mubr.bf16.mxu0 %v1265
        %1463 = vmatmul.mubr.bf16.gmra.mrb[0].mxu0 %v1264
        %v1464 = vpop.f32.mrb[0].mxu0
        %v1465 = vadd.f32 %v1333, %v1464
        %v1466 = vpop.f32.mrb[0].mxu0
        %v1467 = vpop.f32.mrb[0].mxu0
        %v1468 = vadd.f32 %v1333, %v1467
        %v1469 = vpop.f32.mrb[0].mxu0
        %1470 = vmatprep.mubr.bf16.mxu0 %v1267
        %1471 = vmatmul.mubr.bf16.gmra.mrb[0].mxu0 %v1266
        %v1472 = vpop.f32.mrb[0].mxu0
        %v1473 = vadd.f32 %v1333, %v1472
        %v1474 = vpop.f32.mrb[0].mxu0
        %v1475 = vpop.f32.mrb[0].mxu0
        %v1476 = vadd.f32 %v1333, %v1475
        %v1477 = vpop.f32.mrb[0].mxu0
        %1478 = vmatprep.mubr.bf16.mxu0 %v1269
        %1479 = vmatmul.mubr.bf16.gmra.mrb[0].mxu0 %v1268
        %v1480 = vpop.f32.mrb[0].mxu0
        %v1481 = vadd.f32 %v1333, %v1480
        %v1482 = vpop.f32.mrb[0].mxu0
        %v1483 = vpop.f32.mrb[0].mxu0
        %v1484 = vadd.f32 %v1333, %v1483
        %v1485 = vpop.f32.mrb[0].mxu0
        %1486 = vmatprep.mubr.bf16.mxu0 %v1271
        %1487 = vmatmul.mubr.bf16.gmra.mrb[0].mxu0 %v1270
        %v1488 = vpop.f32.mrb[0].mxu0
        %v1489 = vadd.f32 %v1333, %v1488
        %v1490 = vpop.f32.mrb[0].mxu0
        %v1491 = vpop.f32.mrb[0].mxu0
        %v1492 = vadd.f32 %v1333, %v1491
        %v1493 = vpop.f32.mrb[0].mxu0
        %1494 = vmatprep.mubr.bf16.mxu0 %v1273
        %1495 = vmatmul.mubr.bf16.gmra.mrb[0].mxu0 %v1272
        %v1496 = vpop.f32.mrb[0].mxu0
        %v1497 = vadd.f32 %v1333, %v1496
        %v1498 = vpop.f32.mrb[0].mxu0
        %v1499 = vpop.f32.mrb[0].mxu0
        %v1500 = vadd.f32 %v1333, %v1499
        %v1501 = vpop.f32.mrb[0].mxu0
        %1502 = vmatprep.mubr.bf16.mxu0 %v1275
        %1503 = vmatmul.mubr.bf16.gmra.mrb[0].mxu0 %v1274
        %v1504 = vpop.f32.mrb[0].mxu0
        %v1505 = vadd.f32 %v1333, %v1504
        %v1506 = vpop.f32.mrb[0].mxu0
        %v1507 = vpop.f32.mrb[0].mxu0
        %v1508 = vadd.f32 %v1333, %v1507
        %v1509 = vpop.f32.mrb[0].mxu0
        %1510 = vmatprep.mubr.bf16.mxu0 %v1277
        %1511 = vmatmul.mubr.bf16.gmra.mrb[0].mxu0 %v1276
        %v1512 = vpop.f32.mrb[0].mxu0
        %v1513 = vadd.f32 %v1333, %v1512
        %v1514 = vpop.f32.mrb[0].mxu0
        %v1515 = vpop.f32.mrb[0].mxu0
        %v1516 = vadd.f32 %v1333, %v1515
        %v1517 = vpop.f32.mrb[0].mxu0
        %1518 = vmatprep.mubr.bf16.mxu0 %v1279
        %1519 = vmatmul.mubr.bf16.gmra.mrb[0].mxu0 %v1278
        %v1520 = vpop.f32.mrb[0].mxu0
        %v1521 = vadd.f32 %v1333, %v1520
        %v1522 = vpop.f32.mrb[0].mxu0
        %v1523 = vpop.f32.mrb[0].mxu0
        %v1524 = vadd.f32 %v1333, %v1523
        %v1525 = vpop.f32.mrb[0].mxu0
        %1526 = vmatprep.mubr.bf16.mxu0 %v1281
        %1527 = vmatmul.mubr.bf16.gmra.mrb[0].mxu0 %v1280
        %v1528 = vpop.f32.mrb[0].mxu0
        %v1529 = vadd.f32 %v1333, %v1528
        %v1530 = vpop.f32.mrb[0].mxu0
        %v1531 = vpop.f32.mrb[0].mxu0
        %v1532 = vadd.f32 %v1333, %v1531
        %v1533 = vpop.f32.mrb[0].mxu0
        %1534 = vmatprep.mubr.bf16.mxu0 %v1283
        %1535 = vmatmul.mubr.bf16.gmra.mrb[0].mxu0 %v1282
        %v1536 = vpop.f32.mrb[0].mxu0
        %v1537 = vadd.f32 %v1333, %v1536
        %v1538 = vpop.f32.mrb[0].mxu0
        %v1539 = vpop.f32.mrb[0].mxu0
        %v1540 = vadd.f32 %v1333, %v1539
        %v1541 = vpop.f32.mrb[0].mxu0
        %1542 = vmatprep.mubr.bf16.mxu0 %v1285
        %1543 = vmatmul.mubr.bf16.gmra.mrb[0].mxu0 %v1284
        %v1544 = vpop.f32.mrb[0].mxu0
        %v1545 = vadd.f32 %v1333, %v1544
        %v1546 = vpop.f32.mrb[0].mxu0
        %v1547 = vpop.f32.mrb[0].mxu0
        %v1548 = vadd.f32 %v1333, %v1547
        %v1549 = vpop.f32.mrb[0].mxu0
        %1550 = vmatprep.mubr.bf16.mxu0 %v1287
        %1551 = vmatmul.mubr.bf16.gmra.mrb[0].mxu0 %v1286
        %v1552 = vpop.f32.mrb[0].mxu0
        %v1553 = vadd.f32 %v1333, %v1552
        %v1554 = vpop.f32.mrb[0].mxu0
        %v1555 = vpop.f32.mrb[0].mxu0
        %v1556 = vadd.f32 %v1333, %v1555
        %v1557 = vpop.f32.mrb[0].mxu0
        %1558 = vmatprep.mubr.bf16.mxu0 %v1289
        %1559 = vmatmul.mubr.bf16.gmra.mrb[0].mxu0 %v1288
        %v1560 = vpop.f32.mrb[0].mxu0
        %v1561 = vadd.f32 %v1333, %v1560
        %v1562 = vpop.f32.mrb[0].mxu0
        %v1563 = vpop.f32.mrb[0].mxu0
        %v1564 = vadd.f32 %v1333, %v1563
        %v1565 = vpop.f32.mrb[0].mxu0
        %1566 = vmatprep.mubr.bf16.mxu0 %v1291
        %1567 = vmatmul.mubr.bf16.gmra.mrb[0].mxu0 %v1290
        %v1568 = vpop.f32.mrb[0].mxu0
        %v1569 = vadd.f32 %v1333, %v1568
        %v1570 = vpop.f32.mrb[0].mxu0
        %v1571 = vpop.f32.mrb[0].mxu0
        %v1572 = vadd.f32 %v1333, %v1571
        %v1573 = vpop.f32.mrb[0].mxu0
        %1574 = vmatprep.mubr.bf16.mxu0 %v1293
        %1575 = vmatmul.mubr.bf16.gmra.mrb[0].mxu0 %v1292
        %v1576 = vpop.f32.mrb[0].mxu0
        %v1577 = vadd.f32 %v1333, %v1576
        %v1578 = vpop.f32.mrb[0].mxu0
        %v1579 = vpop.f32.mrb[0].mxu0
        %v1580 = vadd.f32 %v1333, %v1579
        %v1581 = vpop.f32.mrb[0].mxu0
        %1582 = vmatprep.mubr.bf16.mxu0 %v1295
        %1583 = vmatmul.mubr.bf16.gmra.mrb[0].mxu0 %v1294
        %v1584 = vpop.f32.mrb[0].mxu0
        %v1585 = vadd.f32 %v1333, %v1584
        %v1586 = vpop.f32.mrb[0].mxu0
        %v1587 = vpop.f32.mrb[0].mxu0
        %v1588 = vadd.f32 %v1333, %v1587
        %v1589 = vpop.f32.mrb[0].mxu0
        %1590 = vdwg.mxu0
        %1591 = vadd.xlane.f32.xlu0 %v1465
        %v1592 = vpop.xlane.xlu0 %1591
        %1593 = vadd.xlane.f32.xlu0 %v1468
        %v1594 = vpop.xlane.xlu0 %1593
        %1595 = vadd.xlane.f32.xlu0 %v1473
        %v1596 = vpop.xlane.xlu0 %1595
        %1597 = vadd.xlane.f32.xlu0 %v1476
        %v1598 = vpop.xlane.xlu0 %1597
        %1599 = vadd.xlane.f32.xlu0 %v1481
        %v1600 = vpop.xlane.xlu0 %1599
        %1601 = vadd.xlane.f32.xlu0 %v1484
        %v1602 = vpop.xlane.xlu0 %1601
        %1603 = vadd.xlane.f32.xlu0 %v1489
        %v1604 = vpop.xlane.xlu0 %1603
        %1605 = vadd.xlane.f32.xlu0 %v1492
        %v1606 = vpop.xlane.xlu0 %1605
        %1607 = vadd.xlane.f32.xlu0 %v1497
        %v1608 = vpop.xlane.xlu0 %1607
        %1609 = vadd.xlane.f32.xlu0 %v1500
        %v1610 = vpop.xlane.xlu0 %1609
        %1611 = vadd.xlane.f32.xlu0 %v1505
        %v1612 = vpop.xlane.xlu0 %1611
        %1613 = vadd.xlane.f32.xlu0 %v1508
        %v1614 = vpop.xlane.xlu0 %1613
        %1615 = vadd.xlane.f32.xlu0 %v1513
        %v1616 = vpop.xlane.xlu0 %1615
        %1617 = vadd.xlane.f32.xlu0 %v1516
        %v1618 = vpop.xlane.xlu0 %1617
        %1619 = vadd.xlane.f32.xlu0 %v1521
        %v1620 = vpop.xlane.xlu0 %1619
        %1621 = vadd.xlane.f32.xlu0 %v1524
        %v1622 = vpop.xlane.xlu0 %1621
        %1623 = vadd.xlane.f32.xlu0 %v1529
        %v1624 = vpop.xlane.xlu0 %1623
        %1625 = vadd.xlane.f32.xlu0 %v1532
        %v1626 = vpop.xlane.xlu0 %1625
        %1627 = vadd.xlane.f32.xlu0 %v1537
        %v1628 = vpop.xlane.xlu0 %1627
        %1629 = vadd.xlane.f32.xlu0 %v1540
        %v1630 = vpop.xlane.xlu0 %1629
        %1631 = vadd.xlane.f32.xlu0 %v1545
        %v1632 = vpop.xlane.xlu0 %1631
        %1633 = vadd.xlane.f32.xlu0 %v1548
        %v1634 = vpop.xlane.xlu0 %1633
        %1635 = vadd.xlane.f32.xlu0 %v1553
        %v1636 = vpop.xlane.xlu0 %1635
        %1637 = vadd.xlane.f32.xlu0 %v1556
        %v1638 = vpop.xlane.xlu0 %1637
        %1639 = vadd.xlane.f32.xlu0 %v1561
        %v1640 = vpop.xlane.xlu0 %1639
        %1641 = vadd.xlane.f32.xlu0 %v1564
        %v1642 = vpop.xlane.xlu0 %1641
        %1643 = vadd.xlane.f32.xlu0 %v1569
        %v1644 = vpop.xlane.xlu0 %1643
        %1645 = vadd.xlane.f32.xlu0 %v1572
        %v1646 = vpop.xlane.xlu0 %1645
        %1647 = vadd.xlane.f32.xlu0 %v1577
        %v1648 = vpop.xlane.xlu0 %1647
        %1649 = vadd.xlane.f32.xlu0 %v1580
        %v1650 = vpop.xlane.xlu0 %1649
        %1651 = vadd.xlane.f32.xlu0 %v1585
        %v1652 = vpop.xlane.xlu0 %1651
        %1653 = vadd.xlane.f32.xlu0 %v1588
        %v1654 = vpop.xlane.xlu0 %1653
        %v1655 = vrcp.pop 128.0
        %v1656 = vmul.f32 %v1592, %v1655
        %v1657 = vmul.f32 %v1594, %v1655
        %v1658 = vmul.f32 %v1596, %v1655
        %v1659 = vmul.f32 %v1598, %v1655
        %v1660 = vmul.f32 %v1600, %v1655
        %v1661 = vmul.f32 %v1602, %v1655
        %v1662 = vmul.f32 %v1604, %v1655
        %v1663 = vmul.f32 %v1606, %v1655
        %v1664 = vmul.f32 %v1608, %v1655
        %v1665 = vmul.f32 %v1610, %v1655
        %v1666 = vmul.f32 %v1612, %v1655
        %v1667 = vmul.f32 %v1614, %v1655
        %v1668 = vmul.f32 %v1616, %v1655
        %v1669 = vmul.f32 %v1618, %v1655
        %v1670 = vmul.f32 %v1620, %v1655
        %v1671 = vmul.f32 %v1622, %v1655
        %v1672 = vmul.f32 %v1624, %v1655
        %v1673 = vmul.f32 %v1626, %v1655
        %v1674 = vmul.f32 %v1628, %v1655
        %v1675 = vmul.f32 %v1630, %v1655
        %v1676 = vmul.f32 %v1632, %v1655
        %v1677 = vmul.f32 %v1634, %v1655
        %v1678 = vmul.f32 %v1636, %v1655
        %v1679 = vmul.f32 %v1638, %v1655
        %v1680 = vmul.f32 %v1640, %v1655
        %v1681 = vmul.f32 %v1642, %v1655
        %v1682 = vmul.f32 %v1644, %v1655
        %v1683 = vmul.f32 %v1646, %v1655
        %v1684 = vmul.f32 %v1648, %v1655
        %v1685 = vmul.f32 %v1650, %v1655
        %v1686 = vmul.f32 %v1652, %v1655
        %v1687 = vmul.f32 %v1654, %v1655
        %v1688 = vsub.f32 %v1465, %v1656
        %v1689 = vsub.f32 %v1468, %v1657
        %v1690 = vsub.f32 %v1473, %v1658
        %v1691 = vsub.f32 %v1476, %v1659
        %v1692 = vsub.f32 %v1481, %v1660
        %v1693 = vsub.f32 %v1484, %v1661
        %v1694 = vsub.f32 %v1489, %v1662
        %v1695 = vsub.f32 %v1492, %v1663
        %v1696 = vsub.f32 %v1497, %v1664
        %v1697 = vsub.f32 %v1500, %v1665
        %v1698 = vsub.f32 %v1505, %v1666
        %v1699 = vsub.f32 %v1508, %v1667
        %v1700 = vsub.f32 %v1513, %v1668
        %v1701 = vsub.f32 %v1516, %v1669
        %v1702 = vsub.f32 %v1521, %v1670
        %v1703 = vsub.f32 %v1524, %v1671
        %v1704 = vsub.f32 %v1529, %v1672
        %v1705 = vsub.f32 %v1532, %v1673
        %v1706 = vsub.f32 %v1537, %v1674
        %v1707 = vsub.f32 %v1540, %v1675
        %v1708 = vsub.f32 %v1545, %v1676
        %v1709 = vsub.f32 %v1548, %v1677
        %v1710 = vsub.f32 %v1553, %v1678
        %v1711 = vsub.f32 %v1556, %v1679
        %v1712 = vsub.f32 %v1561, %v1680
        %v1713 = vsub.f32 %v1564, %v1681
        %v1714 = vsub.f32 %v1569, %v1682
        %v1715 = vsub.f32 %v1572, %v1683
        %v1716 = vsub.f32 %v1577, %v1684
        %v1717 = vsub.f32 %v1580, %v1685
        %v1718 = vsub.f32 %v1585, %v1686
        %v1719 = vsub.f32 %v1588, %v1687
        %v1720 = vmul.f32 %v1688, %v1688
        %v1721 = vmul.f32 %v1689, %v1689
        %v1722 = vmul.f32 %v1690, %v1690
        %v1723 = vmul.f32 %v1691, %v1691
        %v1724 = vmul.f32 %v1692, %v1692
        %v1725 = vmul.f32 %v1693, %v1693
        %v1726 = vmul.f32 %v1694, %v1694
        %v1727 = vmul.f32 %v1695, %v1695
        %v1728 = vmul.f32 %v1696, %v1696
        %v1729 = vmul.f32 %v1697, %v1697
        %v1730 = vmul.f32 %v1698, %v1698
        %v1731 = vmul.f32 %v1699, %v1699
        %v1732 = vmul.f32 %v1700, %v1700
        %v1733 = vmul.f32 %v1701, %v1701
        %v1734 = vmul.f32 %v1702, %v1702
        %v1735 = vmul.f32 %v1703, %v1703
        %v1736 = vmul.f32 %v1704, %v1704
        %v1737 = vmul.f32 %v1705, %v1705
        %v1738 = vmul.f32 %v1706, %v1706
        %v1739 = vmul.f32 %v1707, %v1707
        %v1740 = vmul.f32 %v1708, %v1708
        %v1741 = vmul.f32 %v1709, %v1709
        %v1742 = vmul.f32 %v1710, %v1710
        %v1743 = vmul.f32 %v1711, %v1711
        %v1744 = vmul.f32 %v1712, %v1712
        %v1745 = vmul.f32 %v1713, %v1713
        %v1746 = vmul.f32 %v1714, %v1714
        %v1747 = vmul.f32 %v1715, %v1715
        %v1748 = vmul.f32 %v1716, %v1716
        %v1749 = vmul.f32 %v1717, %v1717
        %v1750 = vmul.f32 %v1718, %v1718
        %v1751 = vmul.f32 %v1719, %v1719
        %1752 = vadd.xlane.f32.xlu0 %v1720
        %v1753 = vpop.xlane.xlu0 %1752
        %1754 = vadd.xlane.f32.xlu0 %v1721
        %v1755 = vpop.xlane.xlu0 %1754
        %1756 = vadd.xlane.f32.xlu0 %v1722
        %v1757 = vpop.xlane.xlu0 %1756
        %1758 = vadd.xlane.f32.xlu0 %v1723
        %v1759 = vpop.xlane.xlu0 %1758
        %1760 = vadd.xlane.f32.xlu0 %v1724
        %v1761 = vpop.xlane.xlu0 %1760
        %1762 = vadd.xlane.f32.xlu0 %v1725
        %v1763 = vpop.xlane.xlu0 %1762
        %1764 = vadd.xlane.f32.xlu0 %v1726
        %v1765 = vpop.xlane.xlu0 %1764
        %1766 = vadd.xlane.f32.xlu0 %v1727
        %v1767 = vpop.xlane.xlu0 %1766
        %1768 = vadd.xlane.f32.xlu0 %v1728
        %v1769 = vpop.xlane.xlu0 %1768
        %1770 = vadd.xlane.f32.xlu0 %v1729
        %v1771 = vpop.xlane.xlu0 %1770
        %1772 = vadd.xlane.f32.xlu0 %v1730
        %v1773 = vpop.xlane.xlu0 %1772
        %1774 = vadd.xlane.f32.xlu0 %v1731
        %v1775 = vpop.xlane.xlu0 %1774
        %1776 = vadd.xlane.f32.xlu0 %v1732
        %v1777 = vpop.xlane.xlu0 %1776
        %1778 = vadd.xlane.f32.xlu0 %v1733
        %v1779 = vpop.xlane.xlu0 %1778
        %1780 = vadd.xlane.f32.xlu0 %v1734
        %v1781 = vpop.xlane.xlu0 %1780
        %1782 = vadd.xlane.f32.xlu0 %v1735
        %v1783 = vpop.xlane.xlu0 %1782
        %1784 = vadd.xlane.f32.xlu0 %v1736
        %v1785 = vpop.xlane.xlu0 %1784
        %1786 = vadd.xlane.f32.xlu0 %v1737
        %v1787 = vpop.xlane.xlu0 %1786
        %1788 = vadd.xlane.f32.xlu0 %v1738
        %v1789 = vpop.xlane.xlu0 %1788
        %1790 = vadd.xlane.f32.xlu0 %v1739
        %v1791 = vpop.xlane.xlu0 %1790
        %1792 = vadd.xlane.f32.xlu0 %v1740
        %v1793 = vpop.xlane.xlu0 %1792
        %1794 = vadd.xlane.f32.xlu0 %v1741
        %v1795 = vpop.xlane.xlu0 %1794
        %1796 = vadd.xlane.f32.xlu0 %v1742
        %v1797 = vpop.xlane.xlu0 %1796
        %1798 = vadd.xlane.f32.xlu0 %v1743
        %v1799 = vpop.xlane.xlu0 %1798
        %1800 = vadd.xlane.f32.xlu0 %v1744
        %v1801 = vpop.xlane.xlu0 %1800
        %1802 = vadd.xlane.f32.xlu0 %v1745
        %v1803 = vpop.xlane.xlu0 %1802
        %1804 = vadd.xlane.f32.xlu0 %v1746
        %v1805 = vpop.xlane.xlu0 %1804
        %1806 = vadd.xlane.f32.xlu0 %v1747
        %v1807 = vpop.xlane.xlu0 %1806
        %1808 = vadd.xlane.f32.xlu0 %v1748
        %v1809 = vpop.xlane.xlu0 %1808
        %1810 = vadd.xlane.f32.xlu0 %v1749
        %v1811 = vpop.xlane.xlu0 %1810
        %1812 = vadd.xlane.f32.xlu0 %v1750
        %v1813 = vpop.xlane.xlu0 %1812
        %1814 = vadd.xlane.f32.xlu0 %v1751
        %v1815 = vpop.xlane.xlu0 %1814
        %v1816 = vmul.f32 %v1753, %v1655
        %v1817 = vmul.f32 %v1755, %v1655
        %v1818 = vmul.f32 %v1757, %v1655
        %v1819 = vmul.f32 %v1759, %v1655
        %v1820 = vmul.f32 %v1761, %v1655
        %v1821 = vmul.f32 %v1763, %v1655
        %v1822 = vmul.f32 %v1765, %v1655
        %v1823 = vmul.f32 %v1767, %v1655
        %v1824 = vmul.f32 %v1769, %v1655
        %v1825 = vmul.f32 %v1771, %v1655
        %v1826 = vmul.f32 %v1773, %v1655
        %v1827 = vmul.f32 %v1775, %v1655
        %v1828 = vmul.f32 %v1777, %v1655
        %v1829 = vmul.f32 %v1779, %v1655
        %v1830 = vmul.f32 %v1781, %v1655
        %v1831 = vmul.f32 %v1783, %v1655
        %v1832 = vmul.f32 %v1785, %v1655
        %v1833 = vmul.f32 %v1787, %v1655
        %v1834 = vmul.f32 %v1789, %v1655
        %v1835 = vmul.f32 %v1791, %v1655
        %v1836 = vmul.f32 %v1793, %v1655
        %v1837 = vmul.f32 %v1795, %v1655
        %v1838 = vmul.f32 %v1797, %v1655
        %v1839 = vmul.f32 %v1799, %v1655
        %v1840 = vmul.f32 %v1801, %v1655
        %v1841 = vmul.f32 %v1803, %v1655
        %v1842 = vmul.f32 %v1805, %v1655
        %v1843 = vmul.f32 %v1807, %v1655
        %v1844 = vmul.f32 %v1809, %v1655
        %v1845 = vmul.f32 %v1811, %v1655
        %v1846 = vmul.f32 %v1813, %v1655
        %v1847 = vmul.f32 %v1815, %v1655
        %v1848 = vadd.f32 %v1816, 1e-05
        %v1849 = vadd.f32 %v1817, 1e-05
        %v1850 = vadd.f32 %v1818, 1e-05
        %v1851 = vadd.f32 %v1819, 1e-05
        %v1852 = vadd.f32 %v1820, 1e-05
        %v1853 = vadd.f32 %v1821, 1e-05
        %v1854 = vadd.f32 %v1822, 1e-05
        %v1855 = vadd.f32 %v1823, 1e-05
        %v1856 = vadd.f32 %v1824, 1e-05
        %v1857 = vadd.f32 %v1825, 1e-05
        %v1858 = vadd.f32 %v1826, 1e-05
        %v1859 = vadd.f32 %v1827, 1e-05
        %v1860 = vadd.f32 %v1828, 1e-05
        %v1861 = vadd.f32 %v1829, 1e-05
        %v1862 = vadd.f32 %v1830, 1e-05
        %v1863 = vadd.f32 %v1831, 1e-05
        %v1864 = vadd.f32 %v1832, 1e-05
        %v1865 = vadd.f32 %v1833, 1e-05
        %v1866 = vadd.f32 %v1834, 1e-05
        %v1867 = vadd.f32 %v1835, 1e-05
        %v1868 = vadd.f32 %v1836, 1e-05
        %v1869 = vadd.f32 %v1837, 1e-05
        %v1870 = vadd.f32 %v1838, 1e-05
        %v1871 = vadd.f32 %v1839, 1e-05
        %v1872 = vadd.f32 %v1840, 1e-05
        %v1873 = vadd.f32 %v1841, 1e-05
        %v1874 = vadd.f32 %v1842, 1e-05
        %v1875 = vadd.f32 %v1843, 1e-05
        %v1876 = vadd.f32 %v1844, 1e-05
        %v1877 = vadd.f32 %v1845, 1e-05
        %v1878 = vadd.f32 %v1846, 1e-05
        %v1879 = vadd.f32 %v1847, 1e-05
        %v1880 = vrsqrt.pop %v1848
        %v1881 = vrsqrt.pop %v1849
        %v1882 = vrsqrt.pop %v1850
        %v1883 = vrsqrt.pop %v1851
        %v1884 = vrsqrt.pop %v1852
        %v1885 = vrsqrt.pop %v1853
        %v1886 = vrsqrt.pop %v1854
        %v1887 = vrsqrt.pop %v1855
        %v1888 = vrsqrt.pop %v1856
        %v1889 = vrsqrt.pop %v1857
        %v1890 = vrsqrt.pop %v1858
        %v1891 = vrsqrt.pop %v1859
        %v1892 = vrsqrt.pop %v1860
        %v1893 = vrsqrt.pop %v1861
        %v1894 = vrsqrt.pop %v1862
        %v1895 = vrsqrt.pop %v1863
        %v1896 = vrsqrt.pop %v1864
        %v1897 = vrsqrt.pop %v1865
        %v1898 = vrsqrt.pop %v1866
        %v1899 = vrsqrt.pop %v1867
        %v1900 = vrsqrt.pop %v1868
        %v1901 = vrsqrt.pop %v1869
        %v1902 = vrsqrt.pop %v1870
        %v1903 = vrsqrt.pop %v1871
        %v1904 = vrsqrt.pop %v1872
        %v1905 = vrsqrt.pop %v1873
        %v1906 = vrsqrt.pop %v1874
        %v1907 = vrsqrt.pop %v1875
        %v1908 = vrsqrt.pop %v1876
        %v1909 = vrsqrt.pop %v1877
        %v1910 = vrsqrt.pop %v1878
        %v1911 = vrsqrt.pop %v1879
        %v1912 = vmul.f32 %v1688, %v1880
        %v1913 = vmul.f32 %v1689, %v1881
        %v1914 = vmul.f32 %v1690, %v1882
        %v1915 = vmul.f32 %v1691, %v1883
        %v1916 = vmul.f32 %v1692, %v1884
        %v1917 = vmul.f32 %v1693, %v1885
        %v1918 = vmul.f32 %v1694, %v1886
        %v1919 = vmul.f32 %v1695, %v1887
        %v1920 = vmul.f32 %v1696, %v1888
        %v1921 = vmul.f32 %v1697, %v1889
        %v1922 = vmul.f32 %v1698, %v1890
        %v1923 = vmul.f32 %v1699, %v1891
        %v1924 = vmul.f32 %v1700, %v1892
        %v1925 = vmul.f32 %v1701, %v1893
        %v1926 = vmul.f32 %v1702, %v1894
        %v1927 = vmul.f32 %v1703, %v1895
        %v1928 = vmul.f32 %v1704, %v1896
        %v1929 = vmul.f32 %v1705, %v1897
        %v1930 = vmul.f32 %v1706, %v1898
        %v1931 = vmul.f32 %v1707, %v1899
        %v1932 = vmul.f32 %v1708, %v1900
        %v1933 = vmul.f32 %v1709, %v1901
        %v1934 = vmul.f32 %v1710, %v1902
        %v1935 = vmul.f32 %v1711, %v1903
        %v1936 = vmul.f32 %v1712, %v1904
        %v1937 = vmul.f32 %v1713, %v1905
        %v1938 = vmul.f32 %v1714, %v1906
        %v1939 = vmul.f32 %v1715, %v1907
        %v1940 = vmul.f32 %v1716, %v1908
        %v1941 = vmul.f32 %v1717, %v1909
        %v1942 = vmul.f32 %v1718, %v1910
        %v1943 = vmul.f32 %v1719, %v1911
        %v1944 = vld [vmem:[%s5] sm:$0x1]
        %v1945 = vunpack.c.l.bf16 %v1944
        %v1946 = vlaneseq
        %v1947 = vshrl.u32 %v1946, 7
        %v1948 = vsub.s32 0, %v1947
        %v1949 = vrot.slane %v1945, %v1948
        %v1950 = vmul.f32 %v1912, %v1949
        %v1951 = vmul.f32 %v1913, %v1949
        %v1952 = vmul.f32 %v1914, %v1949
        %v1953 = vmul.f32 %v1915, %v1949
        %v1954 = vmul.f32 %v1916, %v1949
        %v1955 = vmul.f32 %v1917, %v1949
        %v1956 = vmul.f32 %v1918, %v1949
        %v1957 = vmul.f32 %v1919, %v1949
        %v1958 = vmul.f32 %v1920, %v1949
        %v1959 = vmul.f32 %v1921, %v1949
        %v1960 = vmul.f32 %v1922, %v1949
        %v1961 = vmul.f32 %v1923, %v1949
        %v1962 = vmul.f32 %v1924, %v1949
        %v1963 = vmul.f32 %v1925, %v1949
        %v1964 = vmul.f32 %v1926, %v1949
        %v1965 = vmul.f32 %v1927, %v1949
        %v1966 = vmul.f32 %v1928, %v1949
        %v1967 = vmul.f32 %v1929, %v1949
        %v1968 = vmul.f32 %v1930, %v1949
        %v1969 = vmul.f32 %v1931, %v1949
        %v1970 = vmul.f32 %v1932, %v1949
        %v1971 = vmul.f32 %v1933, %v1949
        %v1972 = vmul.f32 %v1934, %v1949
        %v1973 = vmul.f32 %v1935, %v1949
        %v1974 = vmul.f32 %v1936, %v1949
        %v1975 = vmul.f32 %v1937, %v1949
        %v1976 = vmul.f32 %v1938, %v1949
        %v1977 = vmul.f32 %v1939, %v1949
        %v1978 = vmul.f32 %v1940, %v1949
        %v1979 = vmul.f32 %v1941, %v1949
        %v1980 = vmul.f32 %v1942, %v1949
        %v1981 = vmul.f32 %v1943, %v1949
        %v1982 = vld [vmem:[%s6] sm:$0x1]
        %v1983 = vunpack.c.l.bf16 %v1982
        %v1984 = vlaneseq
        %v1985 = vshrl.u32 %v1984, 7
        %v1986 = vsub.s32 0, %v1985
        %v1987 = vrot.slane %v1983, %v1986
        %v1988 = vadd.f32 %v1950, %v1987
        %v1989 = vadd.f32 %v1951, %v1987
        %v1990 = vadd.f32 %v1952, %v1987
        %v1991 = vadd.f32 %v1953, %v1987
        %v1992 = vadd.f32 %v1954, %v1987
        %v1993 = vadd.f32 %v1955, %v1987
        %v1994 = vadd.f32 %v1956, %v1987
        %v1995 = vadd.f32 %v1957, %v1987
        %v1996 = vadd.f32 %v1958, %v1987
        %v1997 = vadd.f32 %v1959, %v1987
        %v1998 = vadd.f32 %v1960, %v1987
        %v1999 = vadd.f32 %v1961, %v1987
        %v2000 = vadd.f32 %v1962, %v1987
        %v2001 = vadd.f32 %v1963, %v1987
        %v2002 = vadd.f32 %v1964, %v1987
        %v2003 = vadd.f32 %v1965, %v1987
        %v2004 = vadd.f32 %v1966, %v1987
        %v2005 = vadd.f32 %v1967, %v1987
        %v2006 = vadd.f32 %v1968, %v1987
        %v2007 = vadd.f32 %v1969, %v1987
        %v2008 = vadd.f32 %v1970, %v1987
        %v2009 = vadd.f32 %v1971, %v1987
        %v2010 = vadd.f32 %v1972, %v1987
        %v2011 = vadd.f32 %v1973, %v1987
        %v2012 = vadd.f32 %v1974, %v1987
        %v2013 = vadd.f32 %v1975, %v1987
        %v2014 = vadd.f32 %v1976, %v1987
        %v2015 = vadd.f32 %v1977, %v1987
        %v2016 = vadd.f32 %v1978, %v1987
        %v2017 = vadd.f32 %v1979, %v1987
        %v2018 = vadd.f32 %v1980, %v1987
        %v2019 = vadd.f32 %v1981, %v1987
        %v2020 = vpack.c.bf16 %v1989, %v1988
        %v2021 = vpack.c.bf16 %v1991, %v1990
        %v2022 = vpack.c.bf16 %v1993, %v1992
        %v2023 = vpack.c.bf16 %v1995, %v1994
        %v2024 = vpack.c.bf16 %v1997, %v1996
        %v2025 = vpack.c.bf16 %v1999, %v1998
        %v2026 = vpack.c.bf16 %v2001, %v2000
        %v2027 = vpack.c.bf16 %v2003, %v2002
        %v2028 = vpack.c.bf16 %v2005, %v2004
        %v2029 = vpack.c.bf16 %v2007, %v2006
        %v2030 = vpack.c.bf16 %v2009, %v2008
        %v2031 = vpack.c.bf16 %v2011, %v2010
        %v2032 = vpack.c.bf16 %v2013, %v2012
        %v2033 = vpack.c.bf16 %v2015, %v2014
        %v2034 = vpack.c.bf16 %v2017, %v2016
        %v2035 = vpack.c.bf16 %v2019, %v2018
        %v2052 = vunpack.c.l.b16 %v2020
        %v2053 = vunpack.c.h.b16 %v2020
        %v2054 = vunpack.c.l.b16 %v2021
        %v2055 = vunpack.c.h.b16 %v2021
        %v2056 = vunpack.c.l.b16 %v2022
        %v2057 = vunpack.c.h.b16 %v2022
        %v2058 = vunpack.c.l.b16 %v2023
        %v2059 = vunpack.c.h.b16 %v2023
        %v2060 = vunpack.c.l.b16 %v2024
        %v2061 = vunpack.c.h.b16 %v2024
        %v2062 = vunpack.c.l.b16 %v2025
        %v2063 = vunpack.c.h.b16 %v2025
        %v2064 = vunpack.c.l.b16 %v2026
        %v2065 = vunpack.c.h.b16 %v2026
        %v2066 = vunpack.c.l.b16 %v2027
        %v2067 = vunpack.c.h.b16 %v2027
        %v2068 = vunpack.c.l.b16 %v2028
        %v2069 = vunpack.c.h.b16 %v2028
        %v2070 = vunpack.c.l.b16 %v2029
        %v2071 = vunpack.c.h.b16 %v2029
        %v2072 = vunpack.c.l.b16 %v2030
        %v2073 = vunpack.c.h.b16 %v2030
        %v2074 = vunpack.c.l.b16 %v2031
        %v2075 = vunpack.c.h.b16 %v2031
        %v2076 = vunpack.c.l.b16 %v2032
        %v2077 = vunpack.c.h.b16 %v2032
        %v2078 = vunpack.c.l.b16 %v2033
        %v2079 = vunpack.c.h.b16 %v2033
        %v2080 = vunpack.c.l.b16 %v2034
        %v2081 = vunpack.c.h.b16 %v2034
        %v2082 = vunpack.c.l.b16 %v2035
        %v2083 = vunpack.c.h.b16 %v2035
        %v2084 = vpack.c.b16 %v2052, %v2052
        %v2085 = vpack.c.b16 %v2053, %v2053
        %v2086 = vpack.c.b16 %v2054, %v2054
        %v2087 = vpack.c.b16 %v2055, %v2055
        %v2088 = vpack.c.b16 %v2056, %v2056
        %v2089 = vpack.c.b16 %v2057, %v2057
        %v2090 = vpack.c.b16 %v2058, %v2058
        %v2091 = vpack.c.b16 %v2059, %v2059
        %v2092 = vpack.c.b16 %v2060, %v2060
        %v2093 = vpack.c.b16 %v2061, %v2061
        %v2094 = vpack.c.b16 %v2062, %v2062
        %v2095 = vpack.c.b16 %v2063, %v2063
        %v2096 = vpack.c.b16 %v2064, %v2064
        %v2097 = vpack.c.b16 %v2065, %v2065
        %v2098 = vpack.c.b16 %v2066, %v2066
        %v2099 = vpack.c.b16 %v2067, %v2067
        %v2100 = vpack.c.b16 %v2068, %v2068
        %v2101 = vpack.c.b16 %v2069, %v2069
        %v2102 = vpack.c.b16 %v2070, %v2070
        %v2103 = vpack.c.b16 %v2071, %v2071
        %v2104 = vpack.c.b16 %v2072, %v2072
        %v2105 = vpack.c.b16 %v2073, %v2073
        %v2106 = vpack.c.b16 %v2074, %v2074
        %v2107 = vpack.c.b16 %v2075, %v2075
        %v2108 = vpack.c.b16 %v2076, %v2076
        %v2109 = vpack.c.b16 %v2077, %v2077
        %v2110 = vpack.c.b16 %v2078, %v2078
        %v2111 = vpack.c.b16 %v2079, %v2079
        %v2112 = vpack.c.b16 %v2080, %v2080
        %v2113 = vpack.c.b16 %v2081, %v2081
        %v2114 = vpack.c.b16 %v2082, %v2082
        %v2115 = vpack.c.b16 %v2083, %v2083
        %2148 = vst [vmem:[%s333] sm:$0xf] %v2084
        %2149 = vst [vmem:[%s333 + $0x4] sm:$0xf] %v2085
        %2150 = vst [vmem:[%s333 + $0x8] sm:$0xf] %v2086
        %2151 = vst [vmem:[%s333 + $0xc] sm:$0xf] %v2087
        %2152 = vst [vmem:[%s333 + $0x10] sm:$0xf] %v2088
        %2153 = vst [vmem:[%s333 + $0x14] sm:$0xf] %v2089
        %2154 = vst [vmem:[%s333 + $0x18] sm:$0xf] %v2090
        %2155 = vst [vmem:[%s333 + $0x1c] sm:$0xf] %v2091
        %2156 = vst [vmem:[%s333 + $0x20] sm:$0xf] %v2092
        %2157 = vst [vmem:[%s333 + $0x24] sm:$0xf] %v2093
        %2158 = vst [vmem:[%s333 + $0x28] sm:$0xf] %v2094
        %2159 = vst [vmem:[%s333 + $0x2c] sm:$0xf] %v2095
        %2160 = vst [vmem:[%s333 + $0x30] sm:$0xf] %v2096
        %2161 = vst [vmem:[%s333 + $0x34] sm:$0xf] %v2097
        %2162 = vst [vmem:[%s333 + $0x38] sm:$0xf] %v2098
        %2163 = vst [vmem:[%s333 + $0x3c] sm:$0xf] %v2099
        %2164 = vst [vmem:[%s333 + $0x40] sm:$0xf] %v2100
        %2165 = vst [vmem:[%s333 + $0x44] sm:$0xf] %v2101
        %2166 = vst [vmem:[%s333 + $0x48] sm:$0xf] %v2102
        %2167 = vst [vmem:[%s333 + $0x4c] sm:$0xf] %v2103
        %2168 = vst [vmem:[%s333 + $0x50] sm:$0xf] %v2104
        %2169 = vst [vmem:[%s333 + $0x54] sm:$0xf] %v2105
        %2170 = vst [vmem:[%s333 + $0x58] sm:$0xf] %v2106
        %2171 = vst [vmem:[%s333 + $0x5c] sm:$0xf] %v2107
        %2172 = vst [vmem:[%s333 + $0x60] sm:$0xf] %v2108
        %2173 = vst [vmem:[%s333 + $0x64] sm:$0xf] %v2109
        %2174 = vst [vmem:[%s333 + $0x68] sm:$0xf] %v2110
        %2175 = vst [vmem:[%s333 + $0x6c] sm:$0xf] %v2111
        %2176 = vst [vmem:[%s333 + $0x70] sm:$0xf] %v2112
        %2177 = vst [vmem:[%s333 + $0x74] sm:$0xf] %v2113
        %2178 = vst [vmem:[%s333 + $0x78] sm:$0xf] %v2114
        %2179 = vst [vmem:[%s333 + $0x7c] sm:$0xf] %v2115
        %s2180 = sand.u32 %s185, 1
        %s2181 = scalar_lea.sflag [#allocation4], %s2180
        %s2182 = sand.u32 %s185, 1
        %s2183 = smul.addr %s2182, 128
        %s2184 = scalar_lea.vmem [#allocation8], %s2183
        // Predicated region
        $region61: #{tpu_custom_call.1} parent=47 // pred_check
          %p2185 = pneg %p195
        $region62: #{tpu_custom_call.1} parent=47 // pred_check_branch
          %2187 = sbr.rel (%p2185) target = $region64
        $region63: #{tpu_custom_call.1} parent=47 // pred_region
          %s2188 = smul.u32 32, %s25
          %s2189 = ssub.s32 63, %s2188
          %p2190 = scmp.lt.s32.totalorder %s2189, 32
          %s2191 = scalar_select %p2190, %s2189, 32
          %s2192 = smul.u32 64, %s2191
          %s2194 = ssub.s32 2048, %s2192
          %2195 = vsyncadd %s2181, %s2194
          %p2196 = scmp.ne.s32.totalorder 0, %s2192
          %s2197 = smul.addr %s2188, 64
          %s2198 = scalar_lea.hbm %s7, %s2197
          %s2199 = smul.u32 4, %s2191
          %s2200 = sshll.u32 %s2184, 4
          %s2201 = int_to_ptr.vmem [resolvable:$true] %s2200
          %s2202 = sshll.u32 %s2199, 4
          %2206 = dma.vmem_to_hbm [thread:$0]  (%p2196), %s2201, %s2202, %s2198, %s2181, 64, 64, 4
        $region64: #{tpu_custom_call.1} parent=47 // pred_fallthru
          _
      $region48: #{tpu_custom_call.1} parent=5 // pred_fallthru
        _
      %p2207 = scmp.le.s32.totalorder 2, %s20
      // Predicated region
      $region65: #{tpu_custom_call.1} parent=5 // pred_check
        %p2208 = pneg %p2207
      $region66: #{tpu_custom_call.1} parent=5 // pred_check_branch
        %2210 = sbr.rel (%p2208) target = $region68
      $region67: #{tpu_custom_call.1} parent=5 // pred_region
        %s2211 = ssub.s32 %s20, 2
        // Predicated region
        $region69: #{tpu_custom_call.1} parent=67 // pred_check
          %p2212 = pneg %p201
        $region70: #{tpu_custom_call.1} parent=67 // pred_check_branch
          %2214 = sbr.rel (%p2212) target = $region72
        $region71: #{tpu_custom_call.1} parent=67 // pred_region
          %s2215 = sand.u32 %s186, 1
          %s2216 = scalar_lea.sflag [#allocation4], %s2215
          %s2217 = sand.u32 %s186, 1
          %s2218 = smul.addr %s2217, 128
          %s2219 = scalar_lea.vmem [#allocation8], %s2218
          %2220 = dma.done %s2216, 2048
        $region72: #{tpu_custom_call.1} parent=67 // pred_fallthru
          _
      $region68: #{tpu_custom_call.1} parent=5 // pred_fallthru
        _
    $region6: #{tpu_custom_call.1} parent=1 // loop_footer
      %s24 = sadd.s32 1, %s20
    $region7: #{tpu_custom_call.1} parent=1 // loop_footer_branch
      %19 = sbr.rel target = $region3
    $region8: #{tpu_custom_call.1} parent=1 // loop_exit
      _
    %2221 = vsyncpa [#allocation3], 1
    %s2222 = scalar_lea.sflag [#allocation3], 1
    %2223 = vsyncpa %s2222, 1
    %2224 = vsyncpa [#allocation6], 1
    %2225 = vsyncpa [#allocation4], 1
    %s2226 = scalar_lea.sflag [#allocation4], 1
    %2227 = vsyncpa %s2226, 1

// kernel: tpu_custom_call.1
$region0: #{tpu_custom_call.1}
  #allocation0 [shape = 'u32[]', space=smem, size = 0x4, offset = 0x4, fixed_abs, tag = 'smem constant byte address 0x4 - core index']
  #allocation1 [shape = 'u32[144,128]{1,0:T(1,128)}', space=vmem, size = 0x12000, scoped, tag = 'internal scratch']
  %s0 = inlined_call_operand.hbm [shape: bf16[500,256], index: 0, kind: input, shape index: {}]
  %s1 = inlined_call_operand.hbm [shape: bf16[256,256], index: 1, kind: input, shape index: {}]
  %s2 = inlined_call_operand.vmem [shape: bf16[1,256], index: 2, kind: input, shape index: {}]
  %s3 = inlined_call_operand.hbm [shape: bf16[256,128], index: 3, kind: input, shape index: {}]
  %s4 = inlined_call_operand.vmem [shape: bf16[1,128], index: 4, kind: input, shape index: {}]
  %s5 = inlined_call_operand.vmem [shape: bf16[1,128], index: 5, kind: input, shape index: {}]
  %s6 = inlined_call_operand.vmem [shape: bf16[1,128], index: 6, kind: input, shape index: {}]
  %s7 = inlined_call_operand.hbm [shape: bf16[500,128], index: 7, kind: output, shape index: {}]
  %s8 = sld [smem:[#allocation0]]
  $region73: #{tpu_custom_call.1} parent=0
    _
  %s10 = ssub.s32 1, %s8
  %s11 = scalar_select 0, %s10, %s8
  $region1: #{tpu_custom_call.1} parent=0
    #allocation2 [shape = 'u8[262144]{0}', space=vmem, size = 0x40000, scoped, tag = 'input window, operand 0']
    #allocation3 [shape = 's32[2]{0}', space=sflag, size = 0x8, scoped, tag = 'scoped memory for tpu_custom_call.1']
    #allocation4 [shape = 's32[2]{0}', space=sflag, size = 0x8, scoped, tag = 'scoped memory for tpu_custom_call.1']
    #allocation5 [shape = 'u8[131072]{0}', space=vmem, size = 0x20000, scoped, tag = 'input window, operand 1, single buffered']
    #allocation6 [shape = 's32[1]{0}', space=sflag, size = 0x4, scoped, tag = 'scoped memory for tpu_custom_call.1']
    #allocation7 [shape = 'u8[65536]{0}', space=vmem, size = 0x10000, scoped, tag = 'input window, operand 3, single buffered']
    #allocation8 [shape = 'u8[131072]{0}', space=vmem, size = 0x20000, scoped, tag = 'output window, operand 0']
    %12 = vsyncpa [#allocation3], 0
    %s13 = scalar_lea.sflag [#allocation3], 1
    %14 = vsyncpa %s13, 0
    %15 = vsyncpa [#allocation6], 0
    %16 = vsyncpa [#allocation4], 0
    %s17 = scalar_lea.sflag [#allocation4], 1
    %18 = vsyncpa %s17, 0
    loop: start=0, step=1, limit=4
    $region2: #{tpu_custom_call.1} parent=1 // loop_pre_header
      _
    $region3: #{tpu_custom_call.1} parent=1 // loop_header
      %s20 = sphi 0, %s24
      %p21 = scmp.ge.s32.totalorder %s20, 4
      %s30 = sphi 0, %s32
      %s33 = sphi 0, %s30
      %s34 = sphi 0, %s33
      %s50 = sphi 0, %s34
      %s54 = sphi 0, %s54
      %s56 = sphi 0, %s54
      %s57 = sphi 0, %s56
      %s71 = sphi 0, %s57
      %s75 = sphi 0, %s75
      %s77 = sphi 0, %s75
      %s78 = sphi 0, %s77
      %s92 = sphi 0, %s78
      %s96 = sphi 0, %s96
      %s98 = sphi 0, %s96
      %s99 = sphi 0, %s98
      %s113 = sphi 0, %s99
      %s117 = sphi 0, %s117
      %s119 = sphi 0, %s117
      %s120 = sphi 0, %s119
      %s134 = sphi 0, %s120
      %s138 = sphi 0, %s138
      %s140 = sphi 0, %s138
      %s141 = sphi 0, %s140
      %s155 = sphi 0, %s141
      %s159 = sphi 0, %s159
      %s161 = sphi 0, %s159
      %s162 = sphi 0, %s161
      %s176 = sphi 0, %s162
      %s182 = sphi 0, %s184
      %s185 = sphi 0, %s182
      %s186 = sphi 0, %s185
      %s202 = sphi 0, %s186
    $region4: #{tpu_custom_call.1} parent=1 // loop_header_branch
      %23 = sbr.rel (%p21) target = $region8
    $region5: #{tpu_custom_call.1} parent=1 // loop_body
      %s25 = ssub.s32 %s20, 1
      %s26 = ssub.s32 %s20, 2
      %s27 = sadd.s32 %s20, 1
      %s28 = ssub.s32 %s20, %s27
      %p29 = scmp.eq.s32.totalorder %s28, 0
      %s31 = sadd.s32 %s30, 1
      %s32 = scalar_select %p29, %s30, %s31
      %p35 = pneg %p29
      %p36 = scmp.eq.s32.totalorder %s20, 1
      %p37 = por %p35, %p36
      %p38 = scmp.ne.s32.totalorder %s30, %s33
      %p39 = scmp.eq.s32.totalorder %s20, 0
      %p40 = por %p38, %p39
      %p41 = scmp.ne.s32.totalorder %s30, %s33
      %p42 = scmp.eq.s32.totalorder %s25, 1
      %p43 = por %p41, %p42
      %p44 = scmp.ne.s32.totalorder %s33, %s34
      %p45 = scmp.eq.s32.totalorder %s25, 0
      %p46 = por %p44, %p45
      %p47 = scmp.ne.s32.totalorder %s33, %s34
      %p48 = scmp.eq.s32.totalorder %s26, 1
      %p49 = por %p47, %p48
      %p51 = scmp.ne.s32.totalorder %s34, %s50
      %p52 = scmp.eq.s32.totalorder %s26, 0
      %p53 = por %p51, %p52
      %s55 = sadd.s32 %s54, 1
      %p58 = scmp.eq.s32.totalorder %s20, 1
      %p59 = scmp.ne.s32.totalorder %s54, %s56
      %p60 = scmp.eq.s32.totalorder %s20, 0
      %p61 = por %p59, %p60
      %p62 = scmp.ne.s32.totalorder %s54, %s56
      %p63 = scmp.eq.s32.totalorder %s25, 1
      %p64 = por %p62, %p63
      %p65 = scmp.ne.s32.totalorder %s56, %s57
      %p66 = scmp.eq.s32.totalorder %s25, 0
      %p67 = por %p65, %p66
      %p68 = scmp.ne.s32.totalorder %s56, %s57
      %p69 = scmp.eq.s32.totalorder %s26, 1
      %p70 = por %p68, %p69
      %p72 = scmp.ne.s32.totalorder %s57, %s71
      %p73 = scmp.eq.s32.totalorder %s26, 0
      %p74 = por %p72, %p73
      %s76 = sadd.s32 %s75, 1
      %p79 = scmp.eq.s32.totalorder %s20, 1
      %p80 = scmp.ne.s32.totalorder %s75, %s77
      %p81 = scmp.eq.s32.totalorder %s20, 0
      %p82 = por %p80, %p81
      %p83 = scmp.ne.s32.totalorder %s75, %s77
      %p84 = scmp.eq.s32.totalorder %s25, 1
      %p85 = por %p83, %p84
      %p86 = scmp.ne.s32.totalorder %s77, %s78
      %p87 = scmp.eq.s32.totalorder %s25, 0
      %p88 = por %p86, %p87
      %p89 = scmp.ne.s32.totalorder %s77, %s78
      %p90 = scmp.eq.s32.totalorder %s26, 1
      %p91 = por %p89, %p90
      %p93 = scmp.ne.s32.totalorder %s78, %s92
      %p94 = scmp.eq.s32.totalorder %s26, 0
      %p95 = por %p93, %p94
      %s97 = sadd.s32 %s96, 1
      %p100 = scmp.eq.s32.totalorder %s20, 1
      %p101 = scmp.ne.s32.totalorder %s96, %s98
      %p102 = scmp.eq.s32.totalorder %s20, 0
      %p103 = por %p101, %p102
      %p104 = scmp.ne.s32.totalorder %s96, %s98
      %p105 = scmp.eq.s32.totalorder %s25, 1
      %p106 = por %p104, %p105
      %p107 = scmp.ne.s32.totalorder %s98, %s99
      %p108 = scmp.eq.s32.totalorder %s25, 0
      %p109 = por %p107, %p108
      %p110 = scmp.ne.s32.totalorder %s98, %s99
      %p111 = scmp.eq.s32.totalorder %s26, 1
      %p112 = por %p110, %p111
      %p114 = scmp.ne.s32.totalorder %s99, %s113
      %p115 = scmp.eq.s32.totalorder %s26, 0
      %p116 = por %p114, %p115
      %s118 = sadd.s32 %s117, 1
      %p121 = scmp.eq.s32.totalorder %s20, 1
      %p122 = scmp.ne.s32.totalorder %s117, %s119
      %p123 = scmp.eq.s32.totalorder %s20, 0
      %p124 = por %p122, %p123
      %p125 = scmp.ne.s32.totalorder %s117, %s119
      %p126 = scmp.eq.s32.totalorder %s25, 1
      %p127 = por %p125, %p126
      %p128 = scmp.ne.s32.totalorder %s119, %s120
      %p129 = scmp.eq.s32.totalorder %s25, 0
      %p130 = por %p128, %p129
      %p131 = scmp.ne.s32.totalorder %s119, %s120
      %p132 = scmp.eq.s32.totalorder %s26, 1
      %p133 = por %p131, %p132
      %p135 = scmp.ne.s32.totalorder %s120, %s134
      %p136 = scmp.eq.s32.totalorder %s26, 0
      %p137 = por %p135, %p136
      %s139 = sadd.s32 %s138, 1
      %p142 = scmp.eq.s32.totalorder %s20, 1
      %p143 = scmp.ne.s32.totalorder %s138, %s140
      %p144 = scmp.eq.s32.totalorder %s20, 0
      %p145 = por %p143, %p144
      %p146 = scmp.ne.s32.totalorder %s138, %s140
      %p147 = scmp.eq.s32.totalorder %s25, 1
      %p148 = por %p146, %p147
      %p149 = scmp.ne.s32.totalorder %s140, %s141
      %p150 = scmp.eq.s32.totalorder %s25, 0
      %p151 = por %p149, %p150
      %p152 = scmp.ne.s32.totalorder %s140, %s141
      %p153 = scmp.eq.s32.totalorder %s26, 1
      %p154 = por %p152, %p153
      %p156 = scmp.ne.s32.totalorder %s141, %s155
      %p157 = scmp.eq.s32.totalorder %s26, 0
      %p158 = por %p156, %p157
      %s160 = sadd.s32 %s159, 1
      %p163 = scmp.eq.s32.totalorder %s20, 1
      %p164 = scmp.ne.s32.totalorder %s159, %s161
      %p165 = scmp.eq.s32.totalorder %s20, 0
      %p166 = por %p164, %p165
      %p167 = scmp.ne.s32.totalorder %s159, %s161
      %p168 = scmp.eq.s32.totalorder %s25, 1
      %p169 = por %p167, %p168
      %p170 = scmp.ne.s32.totalorder %s161, %s162
      %p171 = scmp.eq.s32.totalorder %s25, 0
      %p172 = por %p170, %p171
      %p173 = scmp.ne.s32.totalorder %s161, %s162
      %p174 = scmp.eq.s32.totalorder %s26, 1
      %p175 = por %p173, %p174
      %p177 = scmp.ne.s32.totalorder %s162, %s176
      %p178 = scmp.eq.s32.totalorder %s26, 0
      %p179 = por %p177, %p178
      %s180 = ssub.s32 %s20, %s27
      %p181 = scmp.eq.s32.totalorder %s180, 0
      %s183 = sadd.s32 %s182, 1
      %s184 = scalar_select %p181, %s182, %s183
      %p187 = pneg %p181
      %p188 = scmp.eq.s32.totalorder %s20, 1
      %p189 = por %p187, %p188
      %p190 = scmp.ne.s32.totalorder %s182, %s185
      %p191 = scmp.eq.s32.totalorder %s20, 0
      %p192 = por %p190, %p191
      %p193 = scmp.ne.s32.totalorder %s182, %s185
      %p194 = scmp.eq.s32.totalorder %s25, 1
      %p195 = por %p193, %p194
      %p196 = scmp.ne.s32.totalorder %s185, %s186
      %p197 = scmp.eq.s32.totalorder %s25, 0
      %p198 = por %p196, %p197
      %p199 = scmp.ne.s32.totalorder %s185, %s186
      %p200 = scmp.eq.s32.totalorder %s26, 1
      %p201 = por %p199, %p200
      %p203 = scmp.ne.s32.totalorder %s186, %s202
      %p204 = scmp.eq.s32.totalorder %s26, 0
      %p205 = por %p203, %p204
      %p206 = scmp.le.s32.totalorder 1, %s20
      %p207 = scmp.lt.s32.totalorder %s20, 3
      %p208 = pnand %p206, %p207
      %p209 = pneg %p208
      // Predicated region
      $region9: #{tpu_custom_call.1} parent=5 // pred_check
        _
      $region10: #{tpu_custom_call.1} parent=5 // pred_check_branch
        %211 = sbr.rel (%p208) target = $region12
      $region11: #{tpu_custom_call.1} parent=5 // pred_region
        %s212 = ssub.s32 %s20, 1
        // Predicated region
        $region13: #{tpu_custom_call.1} parent=11 // pred_check
          %p213 = pneg %p67
        $region14: #{tpu_custom_call.1} parent=11 // pred_check_branch
          %215 = sbr.rel (%p213) target = $region16
        $region15: #{tpu_custom_call.1} parent=11 // pred_region
          %s217 = ssub.s32 4096, 4096
          %218 = vsyncadd [#allocation6], %s217
          %s219 = sshll.u32 [#allocation5], 4
          %s220 = int_to_ptr.vmem [resolvable:$true] %s219
          %225 = dma.hbm_to_vmem [thread:$0]  %s1, 4096, %s220, [#allocation6], 128, 128, 8
        $region16: #{tpu_custom_call.1} parent=11 // pred_fallthru
          _
        // Predicated region
        $region17: #{tpu_custom_call.1} parent=11 // pred_check
          %p226 = pneg %p88
        $region18: #{tpu_custom_call.1} parent=11 // pred_check_branch
          %228 = sbr.rel (%p226) target = $region20
        $region19: #{tpu_custom_call.1} parent=11 // pred_region
          _
        $region20: #{tpu_custom_call.1} parent=11 // pred_fallthru
          _
        // Predicated region
        $region21: #{tpu_custom_call.1} parent=11 // pred_check
          %p229 = pneg %p109
        $region22: #{tpu_custom_call.1} parent=11 // pred_check_branch
          %231 = sbr.rel (%p229) target = $region24
        $region23: #{tpu_custom_call.1} parent=11 // pred_region
          %s233 = ssub.s32 2048, 2048
          %234 = vsyncadd [#allocation6], %s233
          %s235 = sshll.u32 [#allocation7], 4
          %s236 = int_to_ptr.vmem [resolvable:$true] %s235
          %241 = dma.hbm_to_vmem [thread:$0]  %s3, 2048, %s236, [#allocation6], 64, 64, 4
        $region24: #{tpu_custom_call.1} parent=11 // pred_fallthru
          _
        // Predicated region
        $region25: #{tpu_custom_call.1} parent=11 // pred_check
          %p242 = pneg %p130
        $region26: #{tpu_custom_call.1} parent=11 // pred_check_branch
          %244 = sbr.rel (%p242) target = $region28
        $region27: #{tpu_custom_call.1} parent=11 // pred_region
          _
        $region28: #{tpu_custom_call.1} parent=11 // pred_fallthru
          _
        // Predicated region
        $region29: #{tpu_custom_call.1} parent=11 // pred_check
          %p245 = pneg %p151
        $region30: #{tpu_custom_call.1} parent=11 // pred_check_branch
          %247 = sbr.rel (%p245) target = $region32
        $region31: #{tpu_custom_call.1} parent=11 // pred_region
          _
        $region32: #{tpu_custom_call.1} parent=11 // pred_fallthru
          _
        // Predicated region
        $region33: #{tpu_custom_call.1} parent=11 // pred_check
          %p248 = pneg %p172
        $region34: #{tpu_custom_call.1} parent=11 // pred_check_branch
          %250 = sbr.rel (%p248) target = $region36
        $region35: #{tpu_custom_call.1} parent=11 // pred_region
          _
        $region36: #{tpu_custom_call.1} parent=11 // pred_fallthru
          _
      $region12: #{tpu_custom_call.1} parent=5 // pred_fallthru
        _
      %p251 = scmp.lt.s32.totalorder %s20, 2
      // Predicated region
      $region37: #{tpu_custom_call.1} parent=5 // pred_check
        %p252 = pneg %p251
      $region38: #{tpu_custom_call.1} parent=5 // pred_check_branch
        %254 = sbr.rel (%p252) target = $region40
      $region39: #{tpu_custom_call.1} parent=5 // pred_region
        // Predicated region
        $region41: #{tpu_custom_call.1} parent=39 // pred_check
          %p255 = pneg %p40
        $region42: #{tpu_custom_call.1} parent=39 // pred_check_branch
          %257 = sbr.rel (%p255) target = $region44
        $region43: #{tpu_custom_call.1} parent=39 // pred_region
          %s258 = sand.u32 %s30, 1
          %s259 = scalar_lea.sflag [#allocation3], %s258
          %s260 = sand.u32 %s30, 1
          %s261 = smul.addr %s260, 256
          %s262 = scalar_lea.vmem [#allocation2], %s261
          %s263 = smul.u32 32, %s20
          %s264 = ssub.s32 63, %s263
          %p265 = scmp.lt.s32.totalorder %s264, 32
          %s266 = scalar_select %p265, %s264, 32
          %s267 = smul.u32 64, %s266
          %s268 = smul.u32 %s267, 2
          %s270 = ssub.s32 4096, %s268
          %271 = vsyncadd %s259, %s270
          %p272 = scmp.ne.s32.totalorder 0, %s268
          %s273 = smul.addr %s263, 2
          %s274 = smul.addr %s273, 64
          %s275 = scalar_lea.hbm %s0, %s274
          %s276 = smul.u32 8, %s266
          %s277 = sshll.u32 %s262, 4
          %s278 = int_to_ptr.vmem [resolvable:$true] %s277
          %s279 = sshll.u32 %s276, 4
          %283 = dma.hbm_to_vmem [thread:$0]  (%p272), %s275, %s279, %s278, %s259, 128, 128, 8
        $region44: #{tpu_custom_call.1} parent=39 // pred_fallthru
          _
      $region40: #{tpu_custom_call.1} parent=5 // pred_fallthru
        _
      %p284 = scmp.le.s32.totalorder 1, %s20
      %p285 = scmp.lt.s32.totalorder %s20, 3
      %p286 = pnand %p284, %p285
      %p287 = pneg %p286
      // Predicated region
      $region45: #{tpu_custom_call.1} parent=5 // pred_check
        _
      $region46: #{tpu_custom_call.1} parent=5 // pred_check_branch
        %289 = sbr.rel (%p286) target = $region48
      $region47: #{tpu_custom_call.1} parent=5 // pred_region
        %s290 = ssub.s32 %s20, 1
        %s291 = sand.u32 %s33, 1
        %s292 = scalar_lea.sflag [#allocation3], %s291
        %s293 = sand.u32 %s33, 1
        %s294 = smul.addr %s293, 256
        %s295 = scalar_lea.vmem [#allocation2], %s294
        // Predicated region
        $region49: #{tpu_custom_call.1} parent=47 // pred_check
          %p296 = pneg %p46
        $region50: #{tpu_custom_call.1} parent=47 // pred_check_branch
          %298 = sbr.rel (%p296) target = $region52
        $region51: #{tpu_custom_call.1} parent=47 // pred_region
          %299 = dma.done %s292, 4096
        $region52: #{tpu_custom_call.1} parent=47 // pred_fallthru
          _
        // Predicated region
        $region53: #{tpu_custom_call.1} parent=47 // pred_check
          %p300 = pneg %p67
        $region54: #{tpu_custom_call.1} parent=47 // pred_check_branch
          %302 = sbr.rel (%p300) target = $region56
        $region55: #{tpu_custom_call.1} parent=47 // pred_region
          %303 = dma.done [#allocation6], 4096
        $region56: #{tpu_custom_call.1} parent=47 // pred_fallthru
          _
        // Predicated region
        $region57: #{tpu_custom_call.1} parent=47 // pred_check
          %p304 = pneg %p109
        $region58: #{tpu_custom_call.1} parent=47 // pred_check_branch
          %306 = sbr.rel (%p304) target = $region60
        $region59: #{tpu_custom_call.1} parent=47 // pred_region
          %307 = dma.done [#allocation6], 2048
        $region60: #{tpu_custom_call.1} parent=47 // pred_fallthru
          _
        %s308 = sand.u32 %s33, 1
        %s309 = scalar_lea.sflag [#allocation3], %s308
        %s310 = sand.u32 %s33, 1
        %s311 = smul.addr %s310, 256
        %s312 = scalar_lea.vmem [#allocation2], %s311
        %p313 = pneg %p46
        %p314 = pneg %p43
        %p315 = pneg %p67
        %p316 = pneg %p64
        %p317 = pneg %p88
        %p318 = pneg %p85
        %p319 = pneg %p109
        %p320 = pneg %p106
        %p321 = pneg %p130
        %p322 = pneg %p127
        %p323 = pneg %p151
        %p324 = pneg %p148
        %p325 = pneg %p172
        %p326 = pneg %p169
        %p327 = pneg %p198
        %p328 = pneg %p195
        %s329 = sand.u32 %s185, 1
        %s330 = scalar_lea.sflag [#allocation4], %s329
        %s331 = sand.u32 %s185, 1
        %s332 = smul.addr %s331, 128
        %s333 = scalar_lea.vmem [#allocation8], %s332
        %s334 = smul.u32 32, %s25
        %s335 = ssub.s32 63, %s334
        %p336 = scmp.lt.s32.totalorder %s335, 32
        %s337 = scalar_select %p336, %s335, 32
        %s338 = smul.u32 64, %s337
        %s339 = smul.u32 %s338, 2
        %s340 = smul.u32 32, %s25
        %s341 = ssub.s32 63, %s340
        %p342 = scmp.lt.s32.totalorder %s341, 32
        %s343 = scalar_select %p342, %s341, 32
        %s344 = smul.u32 64, %s343
        %v346 = vld [vmem:[%s295] sm:$0xff]
        %v347 = vld [vmem:[%s295 + $0x8] sm:$0xff]
        %v348 = vld [vmem:[%s295 + $0x10] sm:$0xff]
        %v349 = vld [vmem:[%s295 + $0x18] sm:$0xff]
        %v350 = vld [vmem:[%s295 + $0x20] sm:$0xff]
        %v351 = vld [vmem:[%s295 + $0x28] sm:$0xff]
        %v352 = vld [vmem:[%s295 + $0x30] sm:$0xff]
        %v353 = vld [vmem:[%s295 + $0x38] sm:$0xff]
        %v354 = vld [vmem:[%s295 + $0x40] sm:$0xff]
        %v355 = vld [vmem:[%s295 + $0x48] sm:$0xff]
        %v356 = vld [vmem:[%s295 + $0x50] sm:$0xff]
        %v357 = vld [vmem:[%s295 + $0x58] sm:$0xff]
        %v358 = vld [vmem:[%s295 + $0x60] sm:$0xff]
        %v359 = vld [vmem:[%s295 + $0x68] sm:$0xff]
        %v360 = vld [vmem:[%s295 + $0x70] sm:$0xff]
        %v361 = vld [vmem:[%s295 + $0x78] sm:$0xff]
        %v362 = vld [vmem:[%s295 + $0x80] sm:$0xff]
        %v363 = vld [vmem:[%s295 + $0x88] sm:$0xff]
        %v364 = vld [vmem:[%s295 + $0x90] sm:$0xff]
        %v365 = vld [vmem:[%s295 + $0x98] sm:$0xff]
        %v366 = vld [vmem:[%s295 + $0xa0] sm:$0xff]
        %v367 = vld [vmem:[%s295 + $0xa8] sm:$0xff]
        %v368 = vld [vmem:[%s295 + $0xb0] sm:$0xff]
        %v369 = vld [vmem:[%s295 + $0xb8] sm:$0xff]
        %v370 = vld [vmem:[%s295 + $0xc0] sm:$0xff]
        %v371 = vld [vmem:[%s295 + $0xc8] sm:$0xff]
        %v372 = vld [vmem:[%s295 + $0xd0] sm:$0xff]
        %v373 = vld [vmem:[%s295 + $0xd8] sm:$0xff]
        %v374 = vld [vmem:[%s295 + $0xe0] sm:$0xff]
        %v375 = vld [vmem:[%s295 + $0xe8] sm:$0xff]
        %v376 = vld [vmem:[%s295 + $0xf0] sm:$0xff]
        %v377 = vld [vmem:[%s295 + $0xf8] sm:$0xff]
        %v378 = vld [vmem:[#allocation5] sm:$0xff]
        %v379 = vld [vmem:[#allocation5 + $0x8] sm:$0xff]
        %v380 = vld [vmem:[#allocation5 + $0x10] sm:$0xff]
        %v381 = vld [vmem:[#allocation5 + $0x18] sm:$0xff]
        %v382 = vld [vmem:[#allocation5 + $0x20] sm:$0xff]
        %v383 = vld [vmem:[#allocation5 + $0x28] sm:$0xff]
        %v384 = vld [vmem:[#allocation5 + $0x30] sm:$0xff]
        %v385 = vld [vmem:[#allocation5 + $0x38] sm:$0xff]
        %v386 = vld [vmem:[#allocation5 + $0x40] sm:$0xff]
        %v387 = vld [vmem:[#allocation5 + $0x48] sm:$0xff]
        %v388 = vld [vmem:[#allocation5 + $0x50] sm:$0xff]
        %v389 = vld [vmem:[#allocation5 + $0x58] sm:$0xff]
        %v390 = vld [vmem:[#allocation5 + $0x60] sm:$0xff]
        %v391 = vld [vmem:[#allocation5 + $0x68] sm:$0xff]
        %v392 = vld [vmem:[#allocation5 + $0x70] sm:$0xff]
        %v393 = vld [vmem:[#allocation5 + $0x78] sm:$0xff]
        %v394 = vld [vmem:[#allocation5 + $0x80] sm:$0xff]
        %v395 = vld [vmem:[#allocation5 + $0x88] sm:$0xff]
        %v396 = vld [vmem:[#allocation5 + $0x90] sm:$0xff]
        %v397 = vld [vmem:[#allocation5 + $0x98] sm:$0xff]
        %v398 = vld [vmem:[#allocation5 + $0xa0] sm:$0xff]
        %v399 = vld [vmem:[#allocation5 + $0xa8] sm:$0xff]
        %v400 = vld [vmem:[#allocation5 + $0xb0] sm:$0xff]
        %v401 = vld [vmem:[#allocation5 + $0xb8] sm:$0xff]
        %v402 = vld [vmem:[#allocation5 + $0xc0] sm:$0xff]
        %v403 = vld [vmem:[#allocation5 + $0xc8] sm:$0xff]
        %v404 = vld [vmem:[#allocation5 + $0xd0] sm:$0xff]
        %v405 = vld [vmem:[#allocation5 + $0xd8] sm:$0xff]
        %v406 = vld [vmem:[#allocation5 + $0xe0] sm:$0xff]
        %v407 = vld [vmem:[#allocation5 + $0xe8] sm:$0xff]
        %v408 = vld [vmem:[#allocation5 + $0xf0] sm:$0xff]
        %v409 = vld [vmem:[#allocation5 + $0xf8] sm:$0xff]
        %v410 = vld [vmem:[%s2] sm:$0x3]
        %v411 = vunpack.c.l.bf16 %v410
        %v413 = vlaneseq
        %v414 = vshrl.u32 %v413, 7
        %v415 = vsub.s32 0, %v414
        %v416 = vrot.slane %v411, %v415
        %v417 = vlaneseq
        %v418 = vshrl.u32 %v417, 7
        %v419 = vsub.s32 2, %v418
        %v420 = vrot.slane %v411, %v419
        %v423 = vlaneseq
        %v424 = vshrl.u32 %v423, 7
        %v425 = vsub.s32 0, %v424
        %v426 = vrot.slane %v416, %v425
        %v427 = vlaneseq
        %v428 = vshrl.u32 %v427, 7
        %v429 = vsub.s32 0, %v428
        %v430 = vrot.slane %v420, %v429
        %v463 = vunpack.c.l.b16 %v346
        %v464 = vunpack.c.h.b16 %v346
        %v465 = vunpack.c.l.b16 %v347
        %v466 = vunpack.c.h.b16 %v347
        %v467 = vunpack.c.l.b16 %v348
        %v468 = vunpack.c.h.b16 %v348
        %v469 = vunpack.c.l.b16 %v349
        %v470 = vunpack.c.h.b16 %v349
        %v471 = vunpack.c.l.b16 %v350
        %v472 = vunpack.c.h.b16 %v350
        %v473 = vunpack.c.l.b16 %v351
        %v474 = vunpack.c.h.b16 %v351
        %v475 = vunpack.c.l.b16 %v352
        %v476 = vunpack.c.h.b16 %v352
        %v477 = vunpack.c.l.b16 %v353
        %v478 = vunpack.c.h.b16 %v353
        %v479 = vunpack.c.l.b16 %v354
        %v480 = vunpack.c.h.b16 %v354
        %v481 = vunpack.c.l.b16 %v355
        %v482 = vunpack.c.h.b16 %v355
        %v483 = vunpack.c.l.b16 %v356
        %v484 = vunpack.c.h.b16 %v356
        %v485 = vunpack.c.l.b16 %v357
        %v486 = vunpack.c.h.b16 %v357
        %v487 = vunpack.c.l.b16 %v358
        %v488 = vunpack.c.h.b16 %v358
        %v489 = vunpack.c.l.b16 %v359
        %v490 = vunpack.c.h.b16 %v359
        %v491 = vunpack.c.l.b16 %v360
        %v492 = vunpack.c.h.b16 %v360
        %v493 = vunpack.c.l.b16 %v361
        %v494 = vunpack.c.h.b16 %v361
        %v495 = vunpack.c.l.b16 %v362
        %v496 = vunpack.c.h.b16 %v362
        %v497 = vunpack.c.l.b16 %v363
        %v498 = vunpack.c.h.b16 %v363
        %v499 = vunpack.c.l.b16 %v364
        %v500 = vunpack.c.h.b16 %v364
        %v501 = vunpack.c.l.b16 %v365
        %v502 = vunpack.c.h.b16 %v365
        %v503 = vunpack.c.l.b16 %v366
        %v504 = vunpack.c.h.b16 %v366
        %v505 = vunpack.c.l.b16 %v367
        %v506 = vunpack.c.h.b16 %v367
        %v507 = vunpack.c.l.b16 %v368
        %v508 = vunpack.c.h.b16 %v368
        %v509 = vunpack.c.l.b16 %v369
        %v510 = vunpack.c.h.b16 %v369
        %v511 = vunpack.c.l.b16 %v370
        %v512 = vunpack.c.h.b16 %v370
        %v513 = vunpack.c.l.b16 %v371
        %v514 = vunpack.c.h.b16 %v371
        %v515 = vunpack.c.l.b16 %v372
        %v516 = vunpack.c.h.b16 %v372
        %v517 = vunpack.c.l.b16 %v373
        %v518 = vunpack.c.h.b16 %v373
        %v519 = vunpack.c.l.b16 %v374
        %v520 = vunpack.c.h.b16 %v374
        %v521 = vunpack.c.l.b16 %v375
        %v522 = vunpack.c.h.b16 %v375
        %v523 = vunpack.c.l.b16 %v376
        %v524 = vunpack.c.h.b16 %v376
        %v525 = vunpack.c.l.b16 %v377
        %v526 = vunpack.c.h.b16 %v377
        %v527 = vpack.c.b16 %v465, %v463
        %v528 = vpack.c.b16 %v466, %v464
        %v529 = vpack.c.b16 %v469, %v467
        %v530 = vpack.c.b16 %v470, %v468
        %v531 = vpack.c.b16 %v473, %v471
        %v532 = vpack.c.b16 %v474, %v472
        %v533 = vpack.c.b16 %v477, %v475
        %v534 = vpack.c.b16 %v478, %v476
        %v535 = vpack.c.b16 %v481, %v479
        %v536 = vpack.c.b16 %v482, %v480
        %v537 = vpack.c.b16 %v485, %v483
        %v538 = vpack.c.b16 %v486, %v484
        %v539 = vpack.c.b16 %v489, %v487
        %v540 = vpack.c.b16 %v490, %v488
        %v541 = vpack.c.b16 %v493, %v491
        %v542 = vpack.c.b16 %v494, %v492
        %v543 = vpack.c.b16 %v497, %v495
        %v544 = vpack.c.b16 %v498, %v496
        %v545 = vpack.c.b16 %v501, %v499
        %v546 = vpack.c.b16 %v502, %v500
        %v547 = vpack.c.b16 %v505, %v503
        %v548 = vpack.c.b16 %v506, %v504
        %v549 = vpack.c.b16 %v509, %v507
        %v550 = vpack.c.b16 %v510, %v508
        %v551 = vpack.c.b16 %v513, %v511
        %v552 = vpack.c.b16 %v514, %v512
        %v553 = vpack.c.b16 %v517, %v515
        %v554 = vpack.c.b16 %v518, %v516
        %v555 = vpack.c.b16 %v521, %v519
        %v556 = vpack.c.b16 %v522, %v520
        %v557 = vpack.c.b16 %v525, %v523
        %v558 = vpack.c.b16 %v526, %v524
        %v623 = vunpack.c.l.b16 %v378
        %v624 = vunpack.c.h.b16 %v378
        %v625 = vunpack.c.l.b16 %v379
        %v626 = vunpack.c.h.b16 %v379
        %v627 = vunpack.c.l.b16 %v380
        %v628 = vunpack.c.h.b16 %v380
        %v629 = vunpack.c.l.b16 %v381
        %v630 = vunpack.c.h.b16 %v381
        %v631 = vunpack.c.l.b16 %v382
        %v632 = vunpack.c.h.b16 %v382
        %v633 = vunpack.c.l.b16 %v383
        %v634 = vunpack.c.h.b16 %v383
        %v635 = vunpack.c.l.b16 %v384
        %v636 = vunpack.c.h.b16 %v384
        %v637 = vunpack.c.l.b16 %v385
        %v638 = vunpack.c.h.b16 %v385
        %v639 = vunpack.c.l.b16 %v386
        %v640 = vunpack.c.h.b16 %v386
        %v641 = vunpack.c.l.b16 %v387
        %v642 = vunpack.c.h.b16 %v387
        %v643 = vunpack.c.l.b16 %v388
        %v644 = vunpack.c.h.b16 %v388
        %v645 = vunpack.c.l.b16 %v389
        %v646 = vunpack.c.h.b16 %v389
        %v647 = vunpack.c.l.b16 %v390
        %v648 = vunpack.c.h.b16 %v390
        %v649 = vunpack.c.l.b16 %v391
        %v650 = vunpack.c.h.b16 %v391
        %v651 = vunpack.c.l.b16 %v392
        %v652 = vunpack.c.h.b16 %v392
        %v653 = vunpack.c.l.b16 %v393
        %v654 = vunpack.c.h.b16 %v393
        %v655 = vunpack.c.l.b16 %v394
        %v656 = vunpack.c.h.b16 %v394
        %v657 = vunpack.c.l.b16 %v395
        %v658 = vunpack.c.h.b16 %v395
        %v659 = vunpack.c.l.b16 %v396
        %v660 = vunpack.c.h.b16 %v396
        %v661 = vunpack.c.l.b16 %v397
        %v662 = vunpack.c.h.b16 %v397
        %v663 = vunpack.c.l.b16 %v398
        %v664 = vunpack.c.h.b16 %v398
        %v665 = vunpack.c.l.b16 %v399
        %v666 = vunpack.c.h.b16 %v399
        %v667 = vunpack.c.l.b16 %v400
        %v668 = vunpack.c.h.b16 %v400
        %v669 = vunpack.c.l.b16 %v401
        %v670 = vunpack.c.h.b16 %v401
        %v671 = vunpack.c.l.b16 %v402
        %v672 = vunpack.c.h.b16 %v402
        %v673 = vunpack.c.l.b16 %v403
        %v674 = vunpack.c.h.b16 %v403
        %v675 = vunpack.c.l.b16 %v404
        %v676 = vunpack.c.h.b16 %v404
        %v677 = vunpack.c.l.b16 %v405
        %v678 = vunpack.c.h.b16 %v405
        %v679 = vunpack.c.l.b16 %v406
        %v680 = vunpack.c.h.b16 %v406
        %v681 = vunpack.c.l.b16 %v407
        %v682 = vunpack.c.h.b16 %v407
        %v683 = vunpack.c.l.b16 %v408
        %v684 = vunpack.c.h.b16 %v408
        %v685 = vunpack.c.l.b16 %v409
        %v686 = vunpack.c.h.b16 %v409
        %v687 = vpack.c.b16 %v625, %v623
        %v688 = vpack.c.b16 %v626, %v624
        %v689 = vpack.c.b16 %v629, %v627
        %v690 = vpack.c.b16 %v630, %v628
        %v691 = vpack.c.b16 %v633, %v631
        %v692 = vpack.c.b16 %v634, %v632
        %v693 = vpack.c.b16 %v637, %v635
        %v694 = vpack.c.b16 %v638, %v636
        %v695 = vpack.c.b16 %v641, %v639
        %v696 = vpack.c.b16 %v642, %v640
        %v697 = vpack.c.b16 %v645, %v643
        %v698 = vpack.c.b16 %v646, %v644
        %v699 = vpack.c.b16 %v649, %v647
        %v700 = vpack.c.b16 %v650, %v648
        %v701 = vpack.c.b16 %v653, %v651
        %v702 = vpack.c.b16 %v654, %v652
        %v703 = vpack.c.b16 %v657, %v655
        %v704 = vpack.c.b16 %v658, %v656
        %v705 = vpack.c.b16 %v661, %v659
        %v706 = vpack.c.b16 %v662, %v660
        %v707 = vpack.c.b16 %v665, %v663
        %v708 = vpack.c.b16 %v666, %v664
        %v709 = vpack.c.b16 %v669, %v667
        %v710 = vpack.c.b16 %v670, %v668
        %v711 = vpack.c.b16 %v673, %v671
        %v712 = vpack.c.b16 %v674, %v672
        %v713 = vpack.c.b16 %v677, %v675
        %v714 = vpack.c.b16 %v678, %v676
        %v715 = vpack.c.b16 %v681, %v679
        %v716 = vpack.c.b16 %v682, %v680
        %v717 = vpack.c.b16 %v685, %v683
        %v718 = vpack.c.b16 %v686, %v684
        %751 = vmatprep.subr.bf16.mxu0 %v688
        %752 = vmatpush1.bf16.msra.mxu0 %v687
        %753 = vmatprep.subr.bf16.mxu0 %v690
        %754 = vmatpush1.bf16.msra.mxu0 %v689
        %755 = vmatprep.subr.bf16.mxu0 %v692
        %756 = vmatpush1.bf16.msra.mxu0 %v691
        %757 = vmatprep.subr.bf16.mxu0 %v694
        %758 = vmatpush1.bf16.msra.mxu0 %v693
        %759 = vmatprep.subr.bf16.mxu0 %v696
        %760 = vmatpush1.bf16.msra.mxu0 %v695
        %761 = vmatprep.subr.bf16.mxu0 %v698
        %762 = vmatpush1.bf16.msra.mxu0 %v697
        %763 = vmatprep.subr.bf16.mxu0 %v700
        %764 = vmatpush1.bf16.msra.mxu0 %v699
        %765 = vmatprep.subr.bf16.mxu0 %v702
        %766 = vmatpush1.bf16.msra.mxu0 %v701
        %767 = vmatprep.subr.bf16.mxu0 %v704
        %768 = vmatpush1.bf16.msra.mxu0 %v703
        %769 = vmatprep.subr.bf16.mxu0 %v706
        %770 = vmatpush1.bf16.msra.mxu0 %v705
        %771 = vmatprep.subr.bf16.mxu0 %v708
        %772 = vmatpush1.bf16.msra.mxu0 %v707
        %773 = vmatprep.subr.bf16.mxu0 %v710
        %774 = vmatpush1.bf16.msra.mxu0 %v709
        %775 = vmatprep.subr.bf16.mxu0 %v712
        %776 = vmatpush1.bf16.msra.mxu0 %v711
        %777 = vmatprep.subr.bf16.mxu0 %v714
        %778 = vmatpush1.bf16.msra.mxu0 %v713
        %779 = vmatprep.subr.bf16.mxu0 %v716
        %780 = vmatpush1.bf16.msra.mxu0 %v715
        %781 = vmatprep.subr.bf16.mxu0 %v718
        %782 = vmatpush1.bf16.msra.mxu0 %v717
        %783 = vmatprep.mubr.bf16.mxu0 %v528
        %784 = vmatmul.mubr.bf16.gmra.mrb[0].mxu0 %v527
        %v785 = vpop.f32.mrb[0].mxu0
        %v786 = vadd.f32 %v426, %v785
        %v787 = vpop.f32.mrb[0].mxu0
        %v788 = vadd.f32 %v430, %v787
        %v789 = vpop.f32.mrb[0].mxu0
        %v790 = vadd.f32 %v426, %v789
        %v791 = vpop.f32.mrb[0].mxu0
        %v792 = vadd.f32 %v430, %v791
        %793 = vmatprep.mubr.bf16.mxu0 %v530
        %794 = vmatmul.mubr.bf16.gmra.mrb[0].mxu0 %v529
        %v795 = vpop.f32.mrb[0].mxu0
        %v796 = vadd.f32 %v426, %v795
        %v797 = vpop.f32.mrb[0].mxu0
        %v798 = vadd.f32 %v430, %v797
        %v799 = vpop.f32.mrb[0].mxu0
        %v800 = vadd.f32 %v426, %v799
        %v801 = vpop.f32.mrb[0].mxu0
        %v802 = vadd.f32 %v430, %v801
        %803 = vmatprep.mubr.bf16.mxu0 %v532
        %804 = vmatmul.mubr.bf16.gmra.mrb[0].mxu0 %v531
        %v805 = vpop.f32.mrb[0].mxu0
        %v806 = vadd.f32 %v426, %v805
        %v807 = vpop.f32.mrb[0].mxu0
        %v808 = vadd.f32 %v430, %v807
        %v809 = vpop.f32.mrb[0].mxu0
        %v810 = vadd.f32 %v426, %v809
        %v811 = vpop.f32.mrb[0].mxu0
        %v812 = vadd.f32 %v430, %v811
        %813 = vmatprep.mubr.bf16.mxu0 %v534
        %814 = vmatmul.mubr.bf16.gmra.mrb[0].mxu0 %v533
        %v815 = vpop.f32.mrb[0].mxu0
        %v816 = vadd.f32 %v426, %v815
        %v817 = vpop.f32.mrb[0].mxu0
        %v818 = vadd.f32 %v430, %v817
        %v819 = vpop.f32.mrb[0].mxu0
        %v820 = vadd.f32 %v426, %v819
        %v821 = vpop.f32.mrb[0].mxu0
        %v822 = vadd.f32 %v430, %v821
        %823 = vmatprep.mubr.bf16.mxu0 %v536
        %824 = vmatmul.mubr.bf16.gmra.mrb[0].mxu0 %v535
        %v825 = vpop.f32.mrb[0].mxu0
        %v826 = vadd.f32 %v426, %v825
        %v827 = vpop.f32.mrb[0].mxu0
        %v828 = vadd.f32 %v430, %v827
        %v829 = vpop.f32.mrb[0].mxu0
        %v830 = vadd.f32 %v426, %v829
        %v831 = vpop.f32.mrb[0].mxu0
        %v832 = vadd.f32 %v430, %v831
        %833 = vmatprep.mubr.bf16.mxu0 %v538
        %834 = vmatmul.mubr.bf16.gmra.mrb[0].mxu0 %v537
        %v835 = vpop.f32.mrb[0].mxu0
        %v836 = vadd.f32 %v426, %v835
        %v837 = vpop.f32.mrb[0].mxu0
        %v838 = vadd.f32 %v430, %v837
        %v839 = vpop.f32.mrb[0].mxu0
        %v840 = vadd.f32 %v426, %v839
        %v841 = vpop.f32.mrb[0].mxu0
        %v842 = vadd.f32 %v430, %v841
        %843 = vmatprep.mubr.bf16.mxu0 %v540
        %844 = vmatmul.mubr.bf16.gmra.mrb[0].mxu0 %v539
        %v845 = vpop.f32.mrb[0].mxu0
        %v846 = vadd.f32 %v426, %v845
        %v847 = vpop.f32.mrb[0].mxu0
        %v848 = vadd.f32 %v430, %v847
        %v849 = vpop.f32.mrb[0].mxu0
        %v850 = vadd.f32 %v426, %v849
        %v851 = vpop.f32.mrb[0].mxu0
        %v852 = vadd.f32 %v430, %v851
        %853 = vmatprep.mubr.bf16.mxu0 %v542
        %854 = vmatmul.mubr.bf16.gmra.mrb[0].mxu0 %v541
        %v855 = vpop.f32.mrb[0].mxu0
        %v856 = vadd.f32 %v426, %v855
        %v857 = vpop.f32.mrb[0].mxu0
        %v858 = vadd.f32 %v430, %v857
        %v859 = vpop.f32.mrb[0].mxu0
        %v860 = vadd.f32 %v426, %v859
        %v861 = vpop.f32.mrb[0].mxu0
        %v862 = vadd.f32 %v430, %v861
        %863 = vmatprep.mubr.bf16.mxu0 %v544
        %864 = vmatmul.mubr.bf16.gmra.mrb[0].mxu0 %v543
        %v865 = vpop.f32.mrb[0].mxu0
        %v866 = vadd.f32 %v426, %v865
        %v867 = vpop.f32.mrb[0].mxu0
        %v868 = vadd.f32 %v430, %v867
        %v869 = vpop.f32.mrb[0].mxu0
        %v870 = vadd.f32 %v426, %v869
        %v871 = vpop.f32.mrb[0].mxu0
        %v872 = vadd.f32 %v430, %v871
        %873 = vmatprep.mubr.bf16.mxu0 %v546
        %874 = vmatmul.mubr.bf16.gmra.mrb[0].mxu0 %v545
        %v875 = vpop.f32.mrb[0].mxu0
        %v876 = vadd.f32 %v426, %v875
        %v877 = vpop.f32.mrb[0].mxu0
        %v878 = vadd.f32 %v430, %v877
        %v879 = vpop.f32.mrb[0].mxu0
        %v880 = vadd.f32 %v426, %v879
        %v881 = vpop.f32.mrb[0].mxu0
        %v882 = vadd.f32 %v430, %v881
        %883 = vmatprep.mubr.bf16.mxu0 %v548
        %884 = vmatmul.mubr.bf16.gmra.mrb[0].mxu0 %v547
        %v885 = vpop.f32.mrb[0].mxu0
        %v886 = vadd.f32 %v426, %v885
        %v887 = vpop.f32.mrb[0].mxu0
        %v888 = vadd.f32 %v430, %v887
        %v889 = vpop.f32.mrb[0].mxu0
        %v890 = vadd.f32 %v426, %v889
        %v891 = vpop.f32.mrb[0].mxu0
        %v892 = vadd.f32 %v430, %v891
        %893 = vmatprep.mubr.bf16.mxu0 %v550
        %894 = vmatmul.mubr.bf16.gmra.mrb[0].mxu0 %v549
        %v895 = vpop.f32.mrb[0].mxu0
        %v896 = vadd.f32 %v426, %v895
        %v897 = vpop.f32.mrb[0].mxu0
        %v898 = vadd.f32 %v430, %v897
        %v899 = vpop.f32.mrb[0].mxu0
        %v900 = vadd.f32 %v426, %v899
        %v901 = vpop.f32.mrb[0].mxu0
        %v902 = vadd.f32 %v430, %v901
        %903 = vmatprep.mubr.bf16.mxu0 %v552
        %904 = vmatmul.mubr.bf16.gmra.mrb[0].mxu0 %v551
        %v905 = vpop.f32.mrb[0].mxu0
        %v906 = vadd.f32 %v426, %v905
        %v907 = vpop.f32.mrb[0].mxu0
        %v908 = vadd.f32 %v430, %v907
        %v909 = vpop.f32.mrb[0].mxu0
        %v910 = vadd.f32 %v426, %v909
        %v911 = vpop.f32.mrb[0].mxu0
        %v912 = vadd.f32 %v430, %v911
        %913 = vmatprep.mubr.bf16.mxu0 %v554
        %914 = vmatmul.mubr.bf16.gmra.mrb[0].mxu0 %v553
        %v915 = vpop.f32.mrb[0].mxu0
        %v916 = vadd.f32 %v426, %v915
        %v917 = vpop.f32.mrb[0].mxu0
        %v918 = vadd.f32 %v430, %v917
        %v919 = vpop.f32.mrb[0].mxu0
        %v920 = vadd.f32 %v426, %v919
        %v921 = vpop.f32.mrb[0].mxu0
        %v922 = vadd.f32 %v430, %v921
        %923 = vmatprep.mubr.bf16.mxu0 %v556
        %924 = vmatmul.mubr.bf16.gmra.mrb[0].mxu0 %v555
        %v925 = vpop.f32.mrb[0].mxu0
        %v926 = vadd.f32 %v426, %v925
        %v927 = vpop.f32.mrb[0].mxu0
        %v928 = vadd.f32 %v430, %v927
        %v929 = vpop.f32.mrb[0].mxu0
        %v930 = vadd.f32 %v426, %v929
        %v931 = vpop.f32.mrb[0].mxu0
        %v932 = vadd.f32 %v430, %v931
        %933 = vmatprep.mubr.bf16.mxu0 %v558
        %934 = vmatmul.mubr.bf16.gmra.mrb[0].mxu0 %v557
        %v935 = vpop.f32.mrb[0].mxu0
        %v936 = vadd.f32 %v426, %v935
        %v937 = vpop.f32.mrb[0].mxu0
        %v938 = vadd.f32 %v430, %v937
        %v939 = vpop.f32.mrb[0].mxu0
        %v940 = vadd.f32 %v426, %v939
        %v941 = vpop.f32.mrb[0].mxu0
        %v942 = vadd.f32 %v430, %v941
        %943 = vdwg.mxu0
        %v944 = vmul.f32 %v786, 0.5
        %v945 = vmul.f32 %v788, 0.5
        %v946 = vmul.f32 %v790, 0.5
        %v947 = vmul.f32 %v792, 0.5
        %v948 = vmul.f32 %v796, 0.5
        %v949 = vmul.f32 %v798, 0.5
        %v950 = vmul.f32 %v800, 0.5
        %v951 = vmul.f32 %v802, 0.5
        %v952 = vmul.f32 %v806, 0.5
        %v953 = vmul.f32 %v808, 0.5
        %v954 = vmul.f32 %v810, 0.5
        %v955 = vmul.f32 %v812, 0.5
        %v956 = vmul.f32 %v816, 0.5
        %v957 = vmul.f32 %v818, 0.5
        %v958 = vmul.f32 %v820, 0.5
        %v959 = vmul.f32 %v822, 0.5
        %v960 = vmul.f32 %v826, 0.5
        %v961 = vmul.f32 %v828, 0.5
        %v962 = vmul.f32 %v830, 0.5
        %v963 = vmul.f32 %v832, 0.5
        %v964 = vmul.f32 %v836, 0.5
        %v965 = vmul.f32 %v838, 0.5
        %v966 = vmul.f32 %v840, 0.5
        %v967 = vmul.f32 %v842, 0.5
        %v968 = vmul.f32 %v846, 0.5
        %v969 = vmul.f32 %v848, 0.5
        %v970 = vmul.f32 %v850, 0.5
        %v971 = vmul.f32 %v852, 0.5
        %v972 = vmul.f32 %v856, 0.5
        %v973 = vmul.f32 %v858, 0.5
        %v974 = vmul.f32 %v860, 0.5
        %v975 = vmul.f32 %v862, 0.5
        %v976 = vmul.f32 %v866, 0.5
        %v977 = vmul.f32 %v868, 0.5
        %v978 = vmul.f32 %v870, 0.5
        %v979 = vmul.f32 %v872, 0.5
        %v980 = vmul.f32 %v876, 0.5
        %v981 = vmul.f32 %v878, 0.5
        %v982 = vmul.f32 %v880, 0.5
        %v983 = vmul.f32 %v882, 0.5
        %v984 = vmul.f32 %v886, 0.5
        %v985 = vmul.f32 %v888, 0.5
        %v986 = vmul.f32 %v890, 0.5
        %v987 = vmul.f32 %v892, 0.5
        %v988 = vmul.f32 %v896, 0.5
        %v989 = vmul.f32 %v898, 0.5
        %v990 = vmul.f32 %v900, 0.5
        %v991 = vmul.f32 %v902, 0.5
        %v992 = vmul.f32 %v906, 0.5
        %v993 = vmul.f32 %v908, 0.5
        %v994 = vmul.f32 %v910, 0.5
        %v995 = vmul.f32 %v912, 0.5
        %v996 = vmul.f32 %v916, 0.5
        %v997 = vmul.f32 %v918, 0.5
        %v998 = vmul.f32 %v920, 0.5
        %v999 = vmul.f32 %v922, 0.5
        %v1000 = vmul.f32 %v926, 0.5
        %v1001 = vmul.f32 %v928, 0.5
        %v1002 = vmul.f32 %v930, 0.5
        %v1003 = vmul.f32 %v932, 0.5
        %v1004 = vmul.f32 %v936, 0.5
        %v1005 = vmul.f32 %v938, 0.5
        %v1006 = vmul.f32 %v940, 0.5
        %v1007 = vmul.f32 %v942, 0.5
        %v1008 = vmul.f32 %v786, 0.70710677
        %v1009 = vmul.f32 %v788, 0.70710677
        %v1010 = vmul.f32 %v790, 0.70710677
        %v1011 = vmul.f32 %v792, 0.70710677
        %v1012 = vmul.f32 %v796, 0.70710677
        %v1013 = vmul.f32 %v798, 0.70710677
        %v1014 = vmul.f32 %v800, 0.70710677
        %v1015 = vmul.f32 %v802, 0.70710677
        %v1016 = vmul.f32 %v806, 0.70710677
        %v1017 = vmul.f32 %v808, 0.70710677
        %v1018 = vmul.f32 %v810, 0.70710677
        %v1019 = vmul.f32 %v812, 0.70710677
        %v1020 = vmul.f32 %v816, 0.70710677
        %v1021 = vmul.f32 %v818, 0.70710677
        %v1022 = vmul.f32 %v820, 0.70710677
        %v1023 = vmul.f32 %v822, 0.70710677
        %v1024 = vmul.f32 %v826, 0.70710677
        %v1025 = vmul.f32 %v828, 0.70710677
        %v1026 = vmul.f32 %v830, 0.70710677
        %v1027 = vmul.f32 %v832, 0.70710677
        %v1028 = vmul.f32 %v836, 0.70710677
        %v1029 = vmul.f32 %v838, 0.70710677
        %v1030 = vmul.f32 %v840, 0.70710677
        %v1031 = vmul.f32 %v842, 0.70710677
        %v1032 = vmul.f32 %v846, 0.70710677
        %v1033 = vmul.f32 %v848, 0.70710677
        %v1034 = vmul.f32 %v850, 0.70710677
        %v1035 = vmul.f32 %v852, 0.70710677
        %v1036 = vmul.f32 %v856, 0.70710677
        %v1037 = vmul.f32 %v858, 0.70710677
        %v1038 = vmul.f32 %v860, 0.70710677
        %v1039 = vmul.f32 %v862, 0.70710677
        %v1040 = vmul.f32 %v866, 0.70710677
        %v1041 = vmul.f32 %v868, 0.70710677
        %v1042 = vmul.f32 %v870, 0.70710677
        %v1043 = vmul.f32 %v872, 0.70710677
        %v1044 = vmul.f32 %v876, 0.70710677
        %v1045 = vmul.f32 %v878, 0.70710677
        %v1046 = vmul.f32 %v880, 0.70710677
        %v1047 = vmul.f32 %v882, 0.70710677
        %v1048 = vmul.f32 %v886, 0.70710677
        %v1049 = vmul.f32 %v888, 0.70710677
        %v1050 = vmul.f32 %v890, 0.70710677
        %v1051 = vmul.f32 %v892, 0.70710677
        %v1052 = vmul.f32 %v896, 0.70710677
        %v1053 = vmul.f32 %v898, 0.70710677
        %v1054 = vmul.f32 %v900, 0.70710677
        %v1055 = vmul.f32 %v902, 0.70710677
        %v1056 = vmul.f32 %v906, 0.70710677
        %v1057 = vmul.f32 %v908, 0.70710677
        %v1058 = vmul.f32 %v910, 0.70710677
        %v1059 = vmul.f32 %v912, 0.70710677
        %v1060 = vmul.f32 %v916, 0.70710677
        %v1061 = vmul.f32 %v918, 0.70710677
        %v1062 = vmul.f32 %v920, 0.70710677
        %v1063 = vmul.f32 %v922, 0.70710677
        %v1064 = vmul.f32 %v926, 0.70710677
        %v1065 = vmul.f32 %v928, 0.70710677
        %v1066 = vmul.f32 %v930, 0.70710677
        %v1067 = vmul.f32 %v932, 0.70710677
        %v1068 = vmul.f32 %v936, 0.70710677
        %v1069 = vmul.f32 %v938, 0.70710677
        %v1070 = vmul.f32 %v940, 0.70710677
        %v1071 = vmul.f32 %v942, 0.70710677
        %v1072 = verf.f32.pop %v1008
        %v1073 = verf.f32.pop %v1009
        %v1074 = verf.f32.pop %v1010
        %v1075 = verf.f32.pop %v1011
        %v1076 = verf.f32.pop %v1012
        %v1077 = verf.f32.pop %v1013
        %v1078 = verf.f32.pop %v1014
        %v1079 = verf.f32.pop %v1015
        %v1080 = verf.f32.pop %v1016
        %v1081 = verf.f32.pop %v1017
        %v1082 = verf.f32.pop %v1018
        %v1083 = verf.f32.pop %v1019
        %v1084 = verf.f32.pop %v1020
        %v1085 = verf.f32.pop %v1021
        %v1086 = verf.f32.pop %v1022
        %v1087 = verf.f32.pop %v1023
        %v1088 = verf.f32.pop %v1024
        %v1089 = verf.f32.pop %v1025
        %v1090 = verf.f32.pop %v1026
        %v1091 = verf.f32.pop %v1027
        %v1092 = verf.f32.pop %v1028
        %v1093 = verf.f32.pop %v1029
        %v1094 = verf.f32.pop %v1030
        %v1095 = verf.f32.pop %v1031
        %v1096 = verf.f32.pop %v1032
        %v1097 = verf.f32.pop %v1033
        %v1098 = verf.f32.pop %v1034
        %v1099 = verf.f32.pop %v1035
        %v1100 = verf.f32.pop %v1036
        %v1101 = verf.f32.pop %v1037
        %v1102 = verf.f32.pop %v1038
        %v1103 = verf.f32.pop %v1039
        %v1104 = verf.f32.pop %v1040
        %v1105 = verf.f32.pop %v1041
        %v1106 = verf.f32.pop %v1042
        %v1107 = verf.f32.pop %v1043
        %v1108 = verf.f32.pop %v1044
        %v1109 = verf.f32.pop %v1045
        %v1110 = verf.f32.pop %v1046
        %v1111 = verf.f32.pop %v1047
        %v1112 = verf.f32.pop %v1048
        %v1113 = verf.f32.pop %v1049
        %v1114 = verf.f32.pop %v1050
        %v1115 = verf.f32.pop %v1051
        %v1116 = verf.f32.pop %v1052
        %v1117 = verf.f32.pop %v1053
        %v1118 = verf.f32.pop %v1054
        %v1119 = verf.f32.pop %v1055
        %v1120 = verf.f32.pop %v1056
        %v1121 = verf.f32.pop %v1057
        %v1122 = verf.f32.pop %v1058
        %v1123 = verf.f32.pop %v1059
        %v1124 = verf.f32.pop %v1060
        %v1125 = verf.f32.pop %v1061
        %v1126 = verf.f32.pop %v1062
        %v1127 = verf.f32.pop %v1063
        %v1128 = verf.f32.pop %v1064
        %v1129 = verf.f32.pop %v1065
        %v1130 = verf.f32.pop %v1066
        %v1131 = verf.f32.pop %v1067
        %v1132 = verf.f32.pop %v1068
        %v1133 = verf.f32.pop %v1069
        %v1134 = verf.f32.pop %v1070
        %v1135 = verf.f32.pop %v1071
        %v1136 = vadd.f32 %v1072, 1.0
        %v1137 = vadd.f32 %v1073, 1.0
        %v1138 = vadd.f32 %v1074, 1.0
        %v1139 = vadd.f32 %v1075, 1.0
        %v1140 = vadd.f32 %v1076, 1.0
        %v1141 = vadd.f32 %v1077, 1.0
        %v1142 = vadd.f32 %v1078, 1.0
        %v1143 = vadd.f32 %v1079, 1.0
        %v1144 = vadd.f32 %v1080, 1.0
        %v1145 = vadd.f32 %v1081, 1.0
        %v1146 = vadd.f32 %v1082, 1.0
        %v1147 = vadd.f32 %v1083, 1.0
        %v1148 = vadd.f32 %v1084, 1.0
        %v1149 = vadd.f32 %v1085, 1.0
        %v1150 = vadd.f32 %v1086, 1.0
        %v1151 = vadd.f32 %v1087, 1.0
        %v1152 = vadd.f32 %v1088, 1.0
        %v1153 = vadd.f32 %v1089, 1.0
        %v1154 = vadd.f32 %v1090, 1.0
        %v1155 = vadd.f32 %v1091, 1.0
        %v1156 = vadd.f32 %v1092, 1.0
        %v1157 = vadd.f32 %v1093, 1.0
        %v1158 = vadd.f32 %v1094, 1.0
        %v1159 = vadd.f32 %v1095, 1.0
        %v1160 = vadd.f32 %v1096, 1.0
        %v1161 = vadd.f32 %v1097, 1.0
        %v1162 = vadd.f32 %v1098, 1.0
        %v1163 = vadd.f32 %v1099, 1.0
        %v1164 = vadd.f32 %v1100, 1.0
        %v1165 = vadd.f32 %v1101, 1.0
        %v1166 = vadd.f32 %v1102, 1.0
        %v1167 = vadd.f32 %v1103, 1.0
        %v1168 = vadd.f32 %v1104, 1.0
        %v1169 = vadd.f32 %v1105, 1.0
        %v1170 = vadd.f32 %v1106, 1.0
        %v1171 = vadd.f32 %v1107, 1.0
        %v1172 = vadd.f32 %v1108, 1.0
        %v1173 = vadd.f32 %v1109, 1.0
        %v1174 = vadd.f32 %v1110, 1.0
        %v1175 = vadd.f32 %v1111, 1.0
        %v1176 = vadd.f32 %v1112, 1.0
        %v1177 = vadd.f32 %v1113, 1.0
        %v1178 = vadd.f32 %v1114, 1.0
        %v1179 = vadd.f32 %v1115, 1.0
        %v1180 = vadd.f32 %v1116, 1.0
        %v1181 = vadd.f32 %v1117, 1.0
        %v1182 = vadd.f32 %v1118, 1.0
        %v1183 = vadd.f32 %v1119, 1.0
        %v1184 = vadd.f32 %v1120, 1.0
        %v1185 = vadd.f32 %v1121, 1.0
        %v1186 = vadd.f32 %v1122, 1.0
        %v1187 = vadd.f32 %v1123, 1.0
        %v1188 = vadd.f32 %v1124, 1.0
        %v1189 = vadd.f32 %v1125, 1.0
        %v1190 = vadd.f32 %v1126, 1.0
        %v1191 = vadd.f32 %v1127, 1.0
        %v1192 = vadd.f32 %v1128, 1.0
        %v1193 = vadd.f32 %v1129, 1.0
        %v1194 = vadd.f32 %v1130, 1.0
        %v1195 = vadd.f32 %v1131, 1.0
        %v1196 = vadd.f32 %v1132, 1.0
        %v1197 = vadd.f32 %v1133, 1.0
        %v1198 = vadd.f32 %v1134, 1.0
        %v1199 = vadd.f32 %v1135, 1.0
        %v1200 = vmul.f32 %v944, %v1136
        %v1201 = vmul.f32 %v945, %v1137
        %v1202 = vmul.f32 %v946, %v1138
        %v1203 = vmul.f32 %v947, %v1139
        %v1204 = vmul.f32 %v948, %v1140
        %v1205 = vmul.f32 %v949, %v1141
        %v1206 = vmul.f32 %v950, %v1142
        %v1207 = vmul.f32 %v951, %v1143
        %v1208 = vmul.f32 %v952, %v1144
        %v1209 = vmul.f32 %v953, %v1145
        %v1210 = vmul.f32 %v954, %v1146
        %v1211 = vmul.f32 %v955, %v1147
        %v1212 = vmul.f32 %v956, %v1148
        %v1213 = vmul.f32 %v957, %v1149
        %v1214 = vmul.f32 %v958, %v1150
        %v1215 = vmul.f32 %v959, %v1151
        %v1216 = vmul.f32 %v960, %v1152
        %v1217 = vmul.f32 %v961, %v1153
        %v1218 = vmul.f32 %v962, %v1154
        %v1219 = vmul.f32 %v963, %v1155
        %v1220 = vmul.f32 %v964, %v1156
        %v1221 = vmul.f32 %v965, %v1157
        %v1222 = vmul.f32 %v966, %v1158
        %v1223 = vmul.f32 %v967, %v1159
        %v1224 = vmul.f32 %v968, %v1160
        %v1225 = vmul.f32 %v969, %v1161
        %v1226 = vmul.f32 %v970, %v1162
        %v1227 = vmul.f32 %v971, %v1163
        %v1228 = vmul.f32 %v972, %v1164
        %v1229 = vmul.f32 %v973, %v1165
        %v1230 = vmul.f32 %v974, %v1166
        %v1231 = vmul.f32 %v975, %v1167
        %v1232 = vmul.f32 %v976, %v1168
        %v1233 = vmul.f32 %v977, %v1169
        %v1234 = vmul.f32 %v978, %v1170
        %v1235 = vmul.f32 %v979, %v1171
        %v1236 = vmul.f32 %v980, %v1172
        %v1237 = vmul.f32 %v981, %v1173
        %v1238 = vmul.f32 %v982, %v1174
        %v1239 = vmul.f32 %v983, %v1175
        %v1240 = vmul.f32 %v984, %v1176
        %v1241 = vmul.f32 %v985, %v1177
        %v1242 = vmul.f32 %v986, %v1178
        %v1243 = vmul.f32 %v987, %v1179
        %v1244 = vmul.f32 %v988, %v1180
        %v1245 = vmul.f32 %v989, %v1181
        %v1246 = vmul.f32 %v990, %v1182
        %v1247 = vmul.f32 %v991, %v1183
        %v1248 = vmul.f32 %v992, %v1184
        %v1249 = vmul.f32 %v993, %v1185
        %v1250 = vmul.f32 %v994, %v1186
        %v1251 = vmul.f32 %v995, %v1187
        %v1252 = vmul.f32 %v996, %v1188
        %v1253 = vmul.f32 %v997, %v1189
        %v1254 = vmul.f32 %v998, %v1190
        %v1255 = vmul.f32 %v999, %v1191
        %v1256 = vmul.f32 %v1000, %v1192
        %v1257 = vmul.f32 %v1001, %v1193
        %v1258 = vmul.f32 %v1002, %v1194
        %v1259 = vmul.f32 %v1003, %v1195
        %v1260 = vmul.f32 %v1004, %v1196
        %v1261 = vmul.f32 %v1005, %v1197
        %v1262 = vmul.f32 %v1006, %v1198
        %v1263 = vmul.f32 %v1007, %v1199
        %v1264 = vpack.c.bf16 %v1202, %v1200
        %v1265 = vpack.c.bf16 %v1203, %v1201
        %v1266 = vpack.c.bf16 %v1206, %v1204
        %v1267 = vpack.c.bf16 %v1207, %v1205
        %v1268 = vpack.c.bf16 %v1210, %v1208
        %v1269 = vpack.c.bf16 %v1211, %v1209
        %v1270 = vpack.c.bf16 %v1214, %v1212
        %v1271 = vpack.c.bf16 %v1215, %v1213
        %v1272 = vpack.c.bf16 %v1218, %v1216
        %v1273 = vpack.c.bf16 %v1219, %v1217
        %v1274 = vpack.c.bf16 %v1222, %v1220
        %v1275 = vpack.c.bf16 %v1223, %v1221
        %v1276 = vpack.c.bf16 %v1226, %v1224
        %v1277 = vpack.c.bf16 %v1227, %v1225
        %v1278 = vpack.c.bf16 %v1230, %v1228
        %v1279 = vpack.c.bf16 %v1231, %v1229
        %v1280 = vpack.c.bf16 %v1234, %v1232
        %v1281 = vpack.c.bf16 %v1235, %v1233
        %v1282 = vpack.c.bf16 %v1238, %v1236
        %v1283 = vpack.c.bf16 %v1239, %v1237
        %v1284 = vpack.c.bf16 %v1242, %v1240
        %v1285 = vpack.c.bf16 %v1243, %v1241
        %v1286 = vpack.c.bf16 %v1246, %v1244
        %v1287 = vpack.c.bf16 %v1247, %v1245
        %v1288 = vpack.c.bf16 %v1250, %v1248
        %v1289 = vpack.c.bf16 %v1251, %v1249
        %v1290 = vpack.c.bf16 %v1254, %v1252
        %v1291 = vpack.c.bf16 %v1255, %v1253
        %v1292 = vpack.c.bf16 %v1258, %v1256
        %v1293 = vpack.c.bf16 %v1259, %v1257
        %v1294 = vpack.c.bf16 %v1262, %v1260
        %v1295 = vpack.c.bf16 %v1263, %v1261
        %v1296 = vld [vmem:[#allocation7] sm:$0xf]
        %v1297 = vld [vmem:[#allocation7 + $0x4] sm:$0xf]
        %v1298 = vld [vmem:[#allocation7 + $0x8] sm:$0xf]
        %v1299 = vld [vmem:[#allocation7 + $0xc] sm:$0xf]
        %v1300 = vld [vmem:[#allocation7 + $0x10] sm:$0xf]
        %v1301 = vld [vmem:[#allocation7 + $0x14] sm:$0xf]
        %v1302 = vld [vmem:[#allocation7 + $0x18] sm:$0xf]
        %v1303 = vld [vmem:[#allocation7 + $0x1c] sm:$0xf]
        %v1304 = vld [vmem:[#allocation7 + $0x20] sm:$0xf]
        %v1305 = vld [vmem:[#allocation7 + $0x24] sm:$0xf]
        %v1306 = vld [vmem:[#allocation7 + $0x28] sm:$0xf]
        %v1307 = vld [vmem:[#allocation7 + $0x2c] sm:$0xf]
        %v1308 = vld [vmem:[#allocation7 + $0x30] sm:$0xf]
        %v1309 = vld [vmem:[#allocation7 + $0x34] sm:$0xf]
        %v1310 = vld [vmem:[#allocation7 + $0x38] sm:$0xf]
        %v1311 = vld [vmem:[#allocation7 + $0x3c] sm:$0xf]
        %v1312 = vld [vmem:[#allocation7 + $0x40] sm:$0xf]
        %v1313 = vld [vmem:[#allocation7 + $0x44] sm:$0xf]
        %v1314 = vld [vmem:[#allocation7 + $0x48] sm:$0xf]
        %v1315 = vld [vmem:[#allocation7 + $0x4c] sm:$0xf]
        %v1316 = vld [vmem:[#allocation7 + $0x50] sm:$0xf]
        %v1317 = vld [vmem:[#allocation7 + $0x54] sm:$0xf]
        %v1318 = vld [vmem:[#allocation7 + $0x58] sm:$0xf]
        %v1319 = vld [vmem:[#allocation7 + $0x5c] sm:$0xf]
        %v1320 = vld [vmem:[#allocation7 + $0x60] sm:$0xf]
        %v1321 = vld [vmem:[#allocation7 + $0x64] sm:$0xf]
        %v1322 = vld [vmem:[#allocation7 + $0x68] sm:$0xf]
        %v1323 = vld [vmem:[#allocation7 + $0x6c] sm:$0xf]
        %v1324 = vld [vmem:[#allocation7 + $0x70] sm:$0xf]
        %v1325 = vld [vmem:[#allocation7 + $0x74] sm:$0xf]
        %v1326 = vld [vmem:[#allocation7 + $0x78] sm:$0xf]
        %v1327 = vld [vmem:[#allocation7 + $0x7c] sm:$0xf]
        %v1328 = vld [vmem:[%s4] sm:$0x1]
        %v1329 = vunpack.c.l.bf16 %v1328
        %v1330 = vlaneseq
        %v1331 = vshrl.u32 %v1330, 7
        %v1332 = vsub.s32 0, %v1331
        %v1333 = vrot.slane %v1329, %v1332
        %v1366 = vunpack.c.l.b16 %v1296
        %v1367 = vunpack.c.l.b16 %v1297
        %v1368 = vunpack.c.l.b16 %v1298
        %v1369 = vunpack.c.l.b16 %v1299
        %v1370 = vunpack.c.l.b16 %v1300
        %v1371 = vunpack.c.l.b16 %v1301
        %v1372 = vunpack.c.l.b16 %v1302
        %v1373 = vunpack.c.l.b16 %v1303
        %v1374 = vunpack.c.l.b16 %v1304
        %v1375 = vunpack.c.l.b16 %v1305
        %v1376 = vunpack.c.l.b16 %v1306
        %v1377 = vunpack.c.l.b16 %v1307
        %v1378 = vunpack.c.l.b16 %v1308
        %v1379 = vunpack.c.l.b16 %v1309
        %v1380 = vunpack.c.l.b16 %v1310
        %v1381 = vunpack.c.l.b16 %v1311
        %v1382 = vunpack.c.l.b16 %v1312
        %v1383 = vunpack.c.l.b16 %v1313
        %v1384 = vunpack.c.l.b16 %v1314
        %v1385 = vunpack.c.l.b16 %v1315
        %v1386 = vunpack.c.l.b16 %v1316
        %v1387 = vunpack.c.l.b16 %v1317
        %v1388 = vunpack.c.l.b16 %v1318
        %v1389 = vunpack.c.l.b16 %v1319
        %v1390 = vunpack.c.l.b16 %v1320
        %v1391 = vunpack.c.l.b16 %v1321
        %v1392 = vunpack.c.l.b16 %v1322
        %v1393 = vunpack.c.l.b16 %v1323
        %v1394 = vunpack.c.l.b16 %v1324
        %v1395 = vunpack.c.l.b16 %v1325
        %v1396 = vunpack.c.l.b16 %v1326
        %v1397 = vunpack.c.l.b16 %v1327
        %v1398 = vpack.c.b16 %v1367, %v1366
        %v1399 = vpack.c.b16 %v1369, %v1368
        %v1400 = vpack.c.b16 %v1371, %v1370
        %v1401 = vpack.c.b16 %v1373, %v1372
        %v1402 = vpack.c.b16 %v1375, %v1374
        %v1403 = vpack.c.b16 %v1377, %v1376
        %v1404 = vpack.c.b16 %v1379, %v1378
        %v1405 = vpack.c.b16 %v1381, %v1380
        %v1406 = vpack.c.b16 %v1383, %v1382
        %v1407 = vpack.c.b16 %v1385, %v1384
        %v1408 = vpack.c.b16 %v1387, %v1386
        %v1409 = vpack.c.b16 %v1389, %v1388
        %v1410 = vpack.c.b16 %v1391, %v1390
        %v1411 = vpack.c.b16 %v1393, %v1392
        %v1412 = vpack.c.b16 %v1395, %v1394
        %v1413 = vpack.c.b16 %v1397, %v1396
        %1430 = vmatprep.subr.bf16.mxu0 0
        %1431 = vmatpush1.bf16.msra.mxu0 %v1398
        %1432 = vmatprep.subr.bf16.mxu0 0
        %1433 = vmatpush1.bf16.msra.mxu0 %v1399
        %1434 = vmatprep.subr.bf16.mxu0 0
        %1435 = vmatpush1.bf16.msra.mxu0 %v1400
        %1436 = vmatprep.subr.bf16.mxu0 0
        %1437 = vmatpush1.bf16.msra.mxu0 %v1401
        %1438 = vmatprep.subr.bf16.mxu0 0
        %1439 = vmatpush1.bf16.msra.mxu0 %v1402
        %1440 = vmatprep.subr.bf16.mxu0 0
        %1441 = vmatpush1.bf16.msra.mxu0 %v1403
        %1442 = vmatprep.subr.bf16.mxu0 0
        %1443 = vmatpush1.bf16.msra.mxu0 %v1404
        %1444 = vmatprep.subr.bf16.mxu0 0
        %1445 = vmatpush1.bf16.msra.mxu0 %v1405
        %1446 = vmatprep.subr.bf16.mxu0 0
        %1447 = vmatpush1.bf16.msra.mxu0 %v1406
        %1448 = vmatprep.subr.bf16.mxu0 0
        %1449 = vmatpush1.bf16.msra.mxu0 %v1407
        %1450 = vmatprep.subr.bf16.mxu0 0
        %1451 = vmatpush1.bf16.msra.mxu0 %v1408
        %1452 = vmatprep.subr.bf16.mxu0 0
        %1453 = vmatpush1.bf16.msra.mxu0 %v1409
        %1454 = vmatprep.subr.bf16.mxu0 0
        %1455 = vmatpush1.bf16.msra.mxu0 %v1410
        %1456 = vmatprep.subr.bf16.mxu0 0
        %1457 = vmatpush1.bf16.msra.mxu0 %v1411
        %1458 = vmatprep.subr.bf16.mxu0 0
        %1459 = vmatpush1.bf16.msra.mxu0 %v1412
        %1460 = vmatprep.subr.bf16.mxu0 0
        %1461 = vmatpush1.bf16.msra.mxu0 %v1413
        %1462 = vmatprep.mubr.bf16.mxu0 %v1265
        %1463 = vmatmul.mubr.bf16.gmra.mrb[0].mxu0 %v1264
        %v1464 = vpop.f32.mrb[0].mxu0
        %v1465 = vadd.f32 %v1333, %v1464
        %v1466 = vpop.f32.mrb[0].mxu0
        %v1467 = vpop.f32.mrb[0].mxu0
        %v1468 = vadd.f32 %v1333, %v1467
        %v1469 = vpop.f32.mrb[0].mxu0
        %1470 = vmatprep.mubr.bf16.mxu0 %v1267
        %1471 = vmatmul.mubr.bf16.gmra.mrb[0].mxu0 %v1266
        %v1472 = vpop.f32.mrb[0].mxu0
        %v1473 = vadd.f32 %v1333, %v1472
        %v1474 = vpop.f32.mrb[0].mxu0
        %v1475 = vpop.f32.mrb[0].mxu0
        %v1476 = vadd.f32 %v1333, %v1475
        %v1477 = vpop.f32.mrb[0].mxu0
        %1478 = vmatprep.mubr.bf16.mxu0 %v1269
        %1479 = vmatmul.mubr.bf16.gmra.mrb[0].mxu0 %v1268
        %v1480 = vpop.f32.mrb[0].mxu0
        %v1481 = vadd.f32 %v1333, %v1480
        %v1482 = vpop.f32.mrb[0].mxu0
        %v1483 = vpop.f32.mrb[0].mxu0
        %v1484 = vadd.f32 %v1333, %v1483
        %v1485 = vpop.f32.mrb[0].mxu0
        %1486 = vmatprep.mubr.bf16.mxu0 %v1271
        %1487 = vmatmul.mubr.bf16.gmra.mrb[0].mxu0 %v1270
        %v1488 = vpop.f32.mrb[0].mxu0
        %v1489 = vadd.f32 %v1333, %v1488
        %v1490 = vpop.f32.mrb[0].mxu0
        %v1491 = vpop.f32.mrb[0].mxu0
        %v1492 = vadd.f32 %v1333, %v1491
        %v1493 = vpop.f32.mrb[0].mxu0
        %1494 = vmatprep.mubr.bf16.mxu0 %v1273
        %1495 = vmatmul.mubr.bf16.gmra.mrb[0].mxu0 %v1272
        %v1496 = vpop.f32.mrb[0].mxu0
        %v1497 = vadd.f32 %v1333, %v1496
        %v1498 = vpop.f32.mrb[0].mxu0
        %v1499 = vpop.f32.mrb[0].mxu0
        %v1500 = vadd.f32 %v1333, %v1499
        %v1501 = vpop.f32.mrb[0].mxu0
        %1502 = vmatprep.mubr.bf16.mxu0 %v1275
        %1503 = vmatmul.mubr.bf16.gmra.mrb[0].mxu0 %v1274
        %v1504 = vpop.f32.mrb[0].mxu0
        %v1505 = vadd.f32 %v1333, %v1504
        %v1506 = vpop.f32.mrb[0].mxu0
        %v1507 = vpop.f32.mrb[0].mxu0
        %v1508 = vadd.f32 %v1333, %v1507
        %v1509 = vpop.f32.mrb[0].mxu0
        %1510 = vmatprep.mubr.bf16.mxu0 %v1277
        %1511 = vmatmul.mubr.bf16.gmra.mrb[0].mxu0 %v1276
        %v1512 = vpop.f32.mrb[0].mxu0
        %v1513 = vadd.f32 %v1333, %v1512
        %v1514 = vpop.f32.mrb[0].mxu0
        %v1515 = vpop.f32.mrb[0].mxu0
        %v1516 = vadd.f32 %v1333, %v1515
        %v1517 = vpop.f32.mrb[0].mxu0
        %1518 = vmatprep.mubr.bf16.mxu0 %v1279
        %1519 = vmatmul.mubr.bf16.gmra.mrb[0].mxu0 %v1278
        %v1520 = vpop.f32.mrb[0].mxu0
        %v1521 = vadd.f32 %v1333, %v1520
        %v1522 = vpop.f32.mrb[0].mxu0
        %v1523 = vpop.f32.mrb[0].mxu0
        %v1524 = vadd.f32 %v1333, %v1523
        %v1525 = vpop.f32.mrb[0].mxu0
        %1526 = vmatprep.mubr.bf16.mxu0 %v1281
        %1527 = vmatmul.mubr.bf16.gmra.mrb[0].mxu0 %v1280
        %v1528 = vpop.f32.mrb[0].mxu0
        %v1529 = vadd.f32 %v1333, %v1528
        %v1530 = vpop.f32.mrb[0].mxu0
        %v1531 = vpop.f32.mrb[0].mxu0
        %v1532 = vadd.f32 %v1333, %v1531
        %v1533 = vpop.f32.mrb[0].mxu0
        %1534 = vmatprep.mubr.bf16.mxu0 %v1283
        %1535 = vmatmul.mubr.bf16.gmra.mrb[0].mxu0 %v1282
        %v1536 = vpop.f32.mrb[0].mxu0
        %v1537 = vadd.f32 %v1333, %v1536
        %v1538 = vpop.f32.mrb[0].mxu0
        %v1539 = vpop.f32.mrb[0].mxu0
        %v1540 = vadd.f32 %v1333, %v1539
        %v1541 = vpop.f32.mrb[0].mxu0
        %1542 = vmatprep.mubr.bf16.mxu0 %v1285
        %1543 = vmatmul.mubr.bf16.gmra.mrb[0].mxu0 %v1284
        %v1544 = vpop.f32.mrb[0].mxu0
        %v1545 = vadd.f32 %v1333, %v1544
        %v1546 = vpop.f32.mrb[0].mxu0
        %v1547 = vpop.f32.mrb[0].mxu0
        %v1548 = vadd.f32 %v1333, %v1547
        %v1549 = vpop.f32.mrb[0].mxu0
        %1550 = vmatprep.mubr.bf16.mxu0 %v1287
        %1551 = vmatmul.mubr.bf16.gmra.mrb[0].mxu0 %v1286
        %v1552 = vpop.f32.mrb[0].mxu0
        %v1553 = vadd.f32 %v1333, %v1552
        %v1554 = vpop.f32.mrb[0].mxu0
        %v1555 = vpop.f32.mrb[0].mxu0
        %v1556 = vadd.f32 %v1333, %v1555
        %v1557 = vpop.f32.mrb[0].mxu0
        %1558 = vmatprep.mubr.bf16.mxu0 %v1289
        %1559 = vmatmul.mubr.bf16.gmra.mrb[0].mxu0 %v1288
        %v1560 = vpop.f32.mrb[0].mxu0
        %v1561 = vadd.f32 %v1333, %v1560
        %v1562 = vpop.f32.mrb[0].mxu0
        %v1563 = vpop.f32.mrb[0].mxu0
        %v1564 = vadd.f32 %v1333, %v1563
        %v1565 = vpop.f32.mrb[0].mxu0
        %1566 = vmatprep.mubr.bf16.mxu0 %v1291
        %1567 = vmatmul.mubr.bf16.gmra.mrb[0].mxu0 %v1290
        %v1568 = vpop.f32.mrb[0].mxu0
        %v1569 = vadd.f32 %v1333, %v1568
        %v1570 = vpop.f32.mrb[0].mxu0
        %v1571 = vpop.f32.mrb[0].mxu0
        %v1572 = vadd.f32 %v1333, %v1571
        %v1573 = vpop.f32.mrb[0].mxu0
        %1574 = vmatprep.mubr.bf16.mxu0 %v1293
        %1575 = vmatmul.mubr.bf16.gmra.mrb[0].mxu0 %v1292
        %v1576 = vpop.f32.mrb[0].mxu0
        %v1577 = vadd.f32 %v1333, %v1576
        %v1578 = vpop.f32.mrb[0].mxu0
        %v1579 = vpop.f32.mrb[0].mxu0
        %v1580 = vadd.f32 %v1333, %v1579
        %v1581 = vpop.f32.mrb[0].mxu0
        %1582 = vmatprep.mubr.bf16.mxu0 %v1295
        %1583 = vmatmul.mubr.bf16.gmra.mrb[0].mxu0 %v1294
        %v1584 = vpop.f32.mrb[0].mxu0
        %v1585 = vadd.f32 %v1333, %v1584
        %v1586 = vpop.f32.mrb[0].mxu0
        %v1587 = vpop.f32.mrb[0].mxu0
        %v1588 = vadd.f32 %v1333, %v1587
        %v1589 = vpop.f32.mrb[0].mxu0
        %1590 = vdwg.mxu0
        %1591 = vadd.xlane.f32.xlu0 %v1465
        %v1592 = vpop.xlane.xlu0 %1591
        %1593 = vadd.xlane.f32.xlu0 %v1468
        %v1594 = vpop.xlane.xlu0 %1593
        %1595 = vadd.xlane.f32.xlu0 %v1473
        %v1596 = vpop.xlane.xlu0 %1595
        %1597 = vadd.xlane.f32.xlu0 %v1476
        %v1598 = vpop.xlane.xlu0 %1597
        %1599 = vadd.xlane.f32.xlu0 %v1481
        %v1600 = vpop.xlane.xlu0 %1599
        %1601 = vadd.xlane.f32.xlu0 %v1484
        %v1602 = vpop.xlane.xlu0 %1601
        %1603 = vadd.xlane.f32.xlu0 %v1489
        %v1604 = vpop.xlane.xlu0 %1603
        %1605 = vadd.xlane.f32.xlu0 %v1492
        %v1606 = vpop.xlane.xlu0 %1605
        %1607 = vadd.xlane.f32.xlu0 %v1497
        %v1608 = vpop.xlane.xlu0 %1607
        %1609 = vadd.xlane.f32.xlu0 %v1500
        %v1610 = vpop.xlane.xlu0 %1609
        %1611 = vadd.xlane.f32.xlu0 %v1505
        %v1612 = vpop.xlane.xlu0 %1611
        %1613 = vadd.xlane.f32.xlu0 %v1508
        %v1614 = vpop.xlane.xlu0 %1613
        %1615 = vadd.xlane.f32.xlu0 %v1513
        %v1616 = vpop.xlane.xlu0 %1615
        %1617 = vadd.xlane.f32.xlu0 %v1516
        %v1618 = vpop.xlane.xlu0 %1617
        %1619 = vadd.xlane.f32.xlu0 %v1521
        %v1620 = vpop.xlane.xlu0 %1619
        %1621 = vadd.xlane.f32.xlu0 %v1524
        %v1622 = vpop.xlane.xlu0 %1621
        %1623 = vadd.xlane.f32.xlu0 %v1529
        %v1624 = vpop.xlane.xlu0 %1623
        %1625 = vadd.xlane.f32.xlu0 %v1532
        %v1626 = vpop.xlane.xlu0 %1625
        %1627 = vadd.xlane.f32.xlu0 %v1537
        %v1628 = vpop.xlane.xlu0 %1627
        %1629 = vadd.xlane.f32.xlu0 %v1540
        %v1630 = vpop.xlane.xlu0 %1629
        %1631 = vadd.xlane.f32.xlu0 %v1545
        %v1632 = vpop.xlane.xlu0 %1631
        %1633 = vadd.xlane.f32.xlu0 %v1548
        %v1634 = vpop.xlane.xlu0 %1633
        %1635 = vadd.xlane.f32.xlu0 %v1553
        %v1636 = vpop.xlane.xlu0 %1635
        %1637 = vadd.xlane.f32.xlu0 %v1556
        %v1638 = vpop.xlane.xlu0 %1637
        %1639 = vadd.xlane.f32.xlu0 %v1561
        %v1640 = vpop.xlane.xlu0 %1639
        %1641 = vadd.xlane.f32.xlu0 %v1564
        %v1642 = vpop.xlane.xlu0 %1641
        %1643 = vadd.xlane.f32.xlu0 %v1569
        %v1644 = vpop.xlane.xlu0 %1643
        %1645 = vadd.xlane.f32.xlu0 %v1572
        %v1646 = vpop.xlane.xlu0 %1645
        %1647 = vadd.xlane.f32.xlu0 %v1577
        %v1648 = vpop.xlane.xlu0 %1647
        %1649 = vadd.xlane.f32.xlu0 %v1580
        %v1650 = vpop.xlane.xlu0 %1649
        %1651 = vadd.xlane.f32.xlu0 %v1585
        %v1652 = vpop.xlane.xlu0 %1651
        %1653 = vadd.xlane.f32.xlu0 %v1588
        %v1654 = vpop.xlane.xlu0 %1653
        %v1655 = vrcp.pop 128.0
        %v1656 = vmul.f32 %v1592, %v1655
        %v1657 = vmul.f32 %v1594, %v1655
        %v1658 = vmul.f32 %v1596, %v1655
        %v1659 = vmul.f32 %v1598, %v1655
        %v1660 = vmul.f32 %v1600, %v1655
        %v1661 = vmul.f32 %v1602, %v1655
        %v1662 = vmul.f32 %v1604, %v1655
        %v1663 = vmul.f32 %v1606, %v1655
        %v1664 = vmul.f32 %v1608, %v1655
        %v1665 = vmul.f32 %v1610, %v1655
        %v1666 = vmul.f32 %v1612, %v1655
        %v1667 = vmul.f32 %v1614, %v1655
        %v1668 = vmul.f32 %v1616, %v1655
        %v1669 = vmul.f32 %v1618, %v1655
        %v1670 = vmul.f32 %v1620, %v1655
        %v1671 = vmul.f32 %v1622, %v1655
        %v1672 = vmul.f32 %v1624, %v1655
        %v1673 = vmul.f32 %v1626, %v1655
        %v1674 = vmul.f32 %v1628, %v1655
        %v1675 = vmul.f32 %v1630, %v1655
        %v1676 = vmul.f32 %v1632, %v1655
        %v1677 = vmul.f32 %v1634, %v1655
        %v1678 = vmul.f32 %v1636, %v1655
        %v1679 = vmul.f32 %v1638, %v1655
        %v1680 = vmul.f32 %v1640, %v1655
        %v1681 = vmul.f32 %v1642, %v1655
        %v1682 = vmul.f32 %v1644, %v1655
        %v1683 = vmul.f32 %v1646, %v1655
        %v1684 = vmul.f32 %v1648, %v1655
        %v1685 = vmul.f32 %v1650, %v1655
        %v1686 = vmul.f32 %v1652, %v1655
        %v1687 = vmul.f32 %v1654, %v1655
        %v1688 = vsub.f32 %v1465, %v1656
        %v1689 = vsub.f32 %v1468, %v1657
        %v1690 = vsub.f32 %v1473, %v1658
        %v1691 = vsub.f32 %v1476, %v1659
        %v1692 = vsub.f32 %v1481, %v1660
        %v1693 = vsub.f32 %v1484, %v1661
        %v1694 = vsub.f32 %v1489, %v1662
        %v1695 = vsub.f32 %v1492, %v1663
        %v1696 = vsub.f32 %v1497, %v1664
        %v1697 = vsub.f32 %v1500, %v1665
        %v1698 = vsub.f32 %v1505, %v1666
        %v1699 = vsub.f32 %v1508, %v1667
        %v1700 = vsub.f32 %v1513, %v1668
        %v1701 = vsub.f32 %v1516, %v1669
        %v1702 = vsub.f32 %v1521, %v1670
        %v1703 = vsub.f32 %v1524, %v1671
        %v1704 = vsub.f32 %v1529, %v1672
        %v1705 = vsub.f32 %v1532, %v1673
        %v1706 = vsub.f32 %v1537, %v1674
        %v1707 = vsub.f32 %v1540, %v1675
        %v1708 = vsub.f32 %v1545, %v1676
        %v1709 = vsub.f32 %v1548, %v1677
        %v1710 = vsub.f32 %v1553, %v1678
        %v1711 = vsub.f32 %v1556, %v1679
        %v1712 = vsub.f32 %v1561, %v1680
        %v1713 = vsub.f32 %v1564, %v1681
        %v1714 = vsub.f32 %v1569, %v1682
        %v1715 = vsub.f32 %v1572, %v1683
        %v1716 = vsub.f32 %v1577, %v1684
        %v1717 = vsub.f32 %v1580, %v1685
        %v1718 = vsub.f32 %v1585, %v1686
        %v1719 = vsub.f32 %v1588, %v1687
        %v1720 = vmul.f32 %v1688, %v1688
        %v1721 = vmul.f32 %v1689, %v1689
        %v1722 = vmul.f32 %v1690, %v1690
        %v1723 = vmul.f32 %v1691, %v1691
        %v1724 = vmul.f32 %v1692, %v1692
        %v1725 = vmul.f32 %v1693, %v1693
        %v1726 = vmul.f32 %v1694, %v1694
        %v1727 = vmul.f32 %v1695, %v1695
        %v1728 = vmul.f32 %v1696, %v1696
        %v1729 = vmul.f32 %v1697, %v1697
        %v1730 = vmul.f32 %v1698, %v1698
        %v1731 = vmul.f32 %v1699, %v1699
        %v1732 = vmul.f32 %v1700, %v1700
        %v1733 = vmul.f32 %v1701, %v1701
        %v1734 = vmul.f32 %v1702, %v1702
        %v1735 = vmul.f32 %v1703, %v1703
        %v1736 = vmul.f32 %v1704, %v1704
        %v1737 = vmul.f32 %v1705, %v1705
        %v1738 = vmul.f32 %v1706, %v1706
        %v1739 = vmul.f32 %v1707, %v1707
        %v1740 = vmul.f32 %v1708, %v1708
        %v1741 = vmul.f32 %v1709, %v1709
        %v1742 = vmul.f32 %v1710, %v1710
        %v1743 = vmul.f32 %v1711, %v1711
        %v1744 = vmul.f32 %v1712, %v1712
        %v1745 = vmul.f32 %v1713, %v1713
        %v1746 = vmul.f32 %v1714, %v1714
        %v1747 = vmul.f32 %v1715, %v1715
        %v1748 = vmul.f32 %v1716, %v1716
        %v1749 = vmul.f32 %v1717, %v1717
        %v1750 = vmul.f32 %v1718, %v1718
        %v1751 = vmul.f32 %v1719, %v1719
        %1752 = vadd.xlane.f32.xlu0 %v1720
        %v1753 = vpop.xlane.xlu0 %1752
        %1754 = vadd.xlane.f32.xlu0 %v1721
        %v1755 = vpop.xlane.xlu0 %1754
        %1756 = vadd.xlane.f32.xlu0 %v1722
        %v1757 = vpop.xlane.xlu0 %1756
        %1758 = vadd.xlane.f32.xlu0 %v1723
        %v1759 = vpop.xlane.xlu0 %1758
        %1760 = vadd.xlane.f32.xlu0 %v1724
        %v1761 = vpop.xlane.xlu0 %1760
        %1762 = vadd.xlane.f32.xlu0 %v1725
        %v1763 = vpop.xlane.xlu0 %1762
        %1764 = vadd.xlane.f32.xlu0 %v1726
        %v1765 = vpop.xlane.xlu0 %1764
        %1766 = vadd.xlane.f32.xlu0 %v1727
        %v1767 = vpop.xlane.xlu0 %1766
        %1768 = vadd.xlane.f32.xlu0 %v1728
        %v1769 = vpop.xlane.xlu0 %1768
        %1770 = vadd.xlane.f32.xlu0 %v1729
        %v1771 = vpop.xlane.xlu0 %1770
        %1772 = vadd.xlane.f32.xlu0 %v1730
        %v1773 = vpop.xlane.xlu0 %1772
        %1774 = vadd.xlane.f32.xlu0 %v1731
        %v1775 = vpop.xlane.xlu0 %1774
        %1776 = vadd.xlane.f32.xlu0 %v1732
        %v1777 = vpop.xlane.xlu0 %1776
        %1778 = vadd.xlane.f32.xlu0 %v1733
        %v1779 = vpop.xlane.xlu0 %1778
        %1780 = vadd.xlane.f32.xlu0 %v1734
        %v1781 = vpop.xlane.xlu0 %1780
        %1782 = vadd.xlane.f32.xlu0 %v1735
        %v1783 = vpop.xlane.xlu0 %1782
        %1784 = vadd.xlane.f32.xlu0 %v1736
        %v1785 = vpop.xlane.xlu0 %1784
        %1786 = vadd.xlane.f32.xlu0 %v1737
        %v1787 = vpop.xlane.xlu0 %1786
        %1788 = vadd.xlane.f32.xlu0 %v1738
        %v1789 = vpop.xlane.xlu0 %1788
        %1790 = vadd.xlane.f32.xlu0 %v1739
        %v1791 = vpop.xlane.xlu0 %1790
        %1792 = vadd.xlane.f32.xlu0 %v1740
        %v1793 = vpop.xlane.xlu0 %1792
        %1794 = vadd.xlane.f32.xlu0 %v1741
        %v1795 = vpop.xlane.xlu0 %1794
        %1796 = vadd.xlane.f32.xlu0 %v1742
        %v1797 = vpop.xlane.xlu0 %1796
        %1798 = vadd.xlane.f32.xlu0 %v1743
        %v1799 = vpop.xlane.xlu0 %1798
        %1800 = vadd.xlane.f32.xlu0 %v1744
        %v1801 = vpop.xlane.xlu0 %1800
        %1802 = vadd.xlane.f32.xlu0 %v1745
        %v1803 = vpop.xlane.xlu0 %1802
        %1804 = vadd.xlane.f32.xlu0 %v1746
        %v1805 = vpop.xlane.xlu0 %1804
        %1806 = vadd.xlane.f32.xlu0 %v1747
        %v1807 = vpop.xlane.xlu0 %1806
        %1808 = vadd.xlane.f32.xlu0 %v1748
        %v1809 = vpop.xlane.xlu0 %1808
        %1810 = vadd.xlane.f32.xlu0 %v1749
        %v1811 = vpop.xlane.xlu0 %1810
        %1812 = vadd.xlane.f32.xlu0 %v1750
        %v1813 = vpop.xlane.xlu0 %1812
        %1814 = vadd.xlane.f32.xlu0 %v1751
        %v1815 = vpop.xlane.xlu0 %1814
        %v1816 = vmul.f32 %v1753, %v1655
        %v1817 = vmul.f32 %v1755, %v1655
        %v1818 = vmul.f32 %v1757, %v1655
        %v1819 = vmul.f32 %v1759, %v1655
        %v1820 = vmul.f32 %v1761, %v1655
        %v1821 = vmul.f32 %v1763, %v1655
        %v1822 = vmul.f32 %v1765, %v1655
        %v1823 = vmul.f32 %v1767, %v1655
        %v1824 = vmul.f32 %v1769, %v1655
        %v1825 = vmul.f32 %v1771, %v1655
        %v1826 = vmul.f32 %v1773, %v1655
        %v1827 = vmul.f32 %v1775, %v1655
        %v1828 = vmul.f32 %v1777, %v1655
        %v1829 = vmul.f32 %v1779, %v1655
        %v1830 = vmul.f32 %v1781, %v1655
        %v1831 = vmul.f32 %v1783, %v1655
        %v1832 = vmul.f32 %v1785, %v1655
        %v1833 = vmul.f32 %v1787, %v1655
        %v1834 = vmul.f32 %v1789, %v1655
        %v1835 = vmul.f32 %v1791, %v1655
        %v1836 = vmul.f32 %v1793, %v1655
        %v1837 = vmul.f32 %v1795, %v1655
        %v1838 = vmul.f32 %v1797, %v1655
        %v1839 = vmul.f32 %v1799, %v1655
        %v1840 = vmul.f32 %v1801, %v1655
        %v1841 = vmul.f32 %v1803, %v1655
        %v1842 = vmul.f32 %v1805, %v1655
        %v1843 = vmul.f32 %v1807, %v1655
        %v1844 = vmul.f32 %v1809, %v1655
        %v1845 = vmul.f32 %v1811, %v1655
        %v1846 = vmul.f32 %v1813, %v1655
        %v1847 = vmul.f32 %v1815, %v1655
        %v1848 = vadd.f32 %v1816, 1e-05
        %v1849 = vadd.f32 %v1817, 1e-05
        %v1850 = vadd.f32 %v1818, 1e-05
        %v1851 = vadd.f32 %v1819, 1e-05
        %v1852 = vadd.f32 %v1820, 1e-05
        %v1853 = vadd.f32 %v1821, 1e-05
        %v1854 = vadd.f32 %v1822, 1e-05
        %v1855 = vadd.f32 %v1823, 1e-05
        %v1856 = vadd.f32 %v1824, 1e-05
        %v1857 = vadd.f32 %v1825, 1e-05
        %v1858 = vadd.f32 %v1826, 1e-05
        %v1859 = vadd.f32 %v1827, 1e-05
        %v1860 = vadd.f32 %v1828, 1e-05
        %v1861 = vadd.f32 %v1829, 1e-05
        %v1862 = vadd.f32 %v1830, 1e-05
        %v1863 = vadd.f32 %v1831, 1e-05
        %v1864 = vadd.f32 %v1832, 1e-05
        %v1865 = vadd.f32 %v1833, 1e-05
        %v1866 = vadd.f32 %v1834, 1e-05
        %v1867 = vadd.f32 %v1835, 1e-05
        %v1868 = vadd.f32 %v1836, 1e-05
        %v1869 = vadd.f32 %v1837, 1e-05
        %v1870 = vadd.f32 %v1838, 1e-05
        %v1871 = vadd.f32 %v1839, 1e-05
        %v1872 = vadd.f32 %v1840, 1e-05
        %v1873 = vadd.f32 %v1841, 1e-05
        %v1874 = vadd.f32 %v1842, 1e-05
        %v1875 = vadd.f32 %v1843, 1e-05
        %v1876 = vadd.f32 %v1844, 1e-05
        %v1877 = vadd.f32 %v1845, 1e-05
        %v1878 = vadd.f32 %v1846, 1e-05
        %v1879 = vadd.f32 %v1847, 1e-05
        %v1880 = vrsqrt.pop %v1848
        %v1881 = vrsqrt.pop %v1849
        %v1882 = vrsqrt.pop %v1850
        %v1883 = vrsqrt.pop %v1851
        %v1884 = vrsqrt.pop %v1852
        %v1885 = vrsqrt.pop %v1853
        %v1886 = vrsqrt.pop %v1854
        %v1887 = vrsqrt.pop %v1855
        %v1888 = vrsqrt.pop %v1856
        %v1889 = vrsqrt.pop %v1857
        %v1890 = vrsqrt.pop %v1858
        %v1891 = vrsqrt.pop %v1859
        %v1892 = vrsqrt.pop %v1860
        %v1893 = vrsqrt.pop %v1861
        %v1894 = vrsqrt.pop %v1862
        %v1895 = vrsqrt.pop %v1863
        %v1896 = vrsqrt.pop %v1864
        %v1897 = vrsqrt.pop %v1865
        %v1898 = vrsqrt.pop %v1866
        %v1899 = vrsqrt.pop %v1867
        %v1900 = vrsqrt.pop %v1868
        %v1901 = vrsqrt.pop %v1869
        %v1902 = vrsqrt.pop %v1870
        %v1903 = vrsqrt.pop %v1871
        %v1904 = vrsqrt.pop %v1872
        %v1905 = vrsqrt.pop %v1873
        %v1906 = vrsqrt.pop %v1874
        %v1907 = vrsqrt.pop %v1875
        %v1908 = vrsqrt.pop %v1876
        %v1909 = vrsqrt.pop %v1877
        %v1910 = vrsqrt.pop %v1878
        %v1911 = vrsqrt.pop %v1879
        %v1912 = vmul.f32 %v1688, %v1880
        %v1913 = vmul.f32 %v1689, %v1881
        %v1914 = vmul.f32 %v1690, %v1882
        %v1915 = vmul.f32 %v1691, %v1883
        %v1916 = vmul.f32 %v1692, %v1884
        %v1917 = vmul.f32 %v1693, %v1885
        %v1918 = vmul.f32 %v1694, %v1886
        %v1919 = vmul.f32 %v1695, %v1887
        %v1920 = vmul.f32 %v1696, %v1888
        %v1921 = vmul.f32 %v1697, %v1889
        %v1922 = vmul.f32 %v1698, %v1890
        %v1923 = vmul.f32 %v1699, %v1891
        %v1924 = vmul.f32 %v1700, %v1892
        %v1925 = vmul.f32 %v1701, %v1893
        %v1926 = vmul.f32 %v1702, %v1894
        %v1927 = vmul.f32 %v1703, %v1895
        %v1928 = vmul.f32 %v1704, %v1896
        %v1929 = vmul.f32 %v1705, %v1897
        %v1930 = vmul.f32 %v1706, %v1898
        %v1931 = vmul.f32 %v1707, %v1899
        %v1932 = vmul.f32 %v1708, %v1900
        %v1933 = vmul.f32 %v1709, %v1901
        %v1934 = vmul.f32 %v1710, %v1902
        %v1935 = vmul.f32 %v1711, %v1903
        %v1936 = vmul.f32 %v1712, %v1904
        %v1937 = vmul.f32 %v1713, %v1905
        %v1938 = vmul.f32 %v1714, %v1906
        %v1939 = vmul.f32 %v1715, %v1907
        %v1940 = vmul.f32 %v1716, %v1908
        %v1941 = vmul.f32 %v1717, %v1909
        %v1942 = vmul.f32 %v1718, %v1910
        %v1943 = vmul.f32 %v1719, %v1911
        %v1944 = vld [vmem:[%s5] sm:$0x1]
        %v1945 = vunpack.c.l.bf16 %v1944
        %v1946 = vlaneseq
        %v1947 = vshrl.u32 %v1946, 7
        %v1948 = vsub.s32 0, %v1947
        %v1949 = vrot.slane %v1945, %v1948
        %v1950 = vmul.f32 %v1912, %v1949
        %v1951 = vmul.f32 %v1913, %v1949
        %v1952 = vmul.f32 %v1914, %v1949
        %v1953 = vmul.f32 %v1915, %v1949
        %v1954 = vmul.f32 %v1916, %v1949
        %v1955 = vmul.f32 %v1917, %v1949
        %v1956 = vmul.f32 %v1918, %v1949
        %v1957 = vmul.f32 %v1919, %v1949
        %v1958 = vmul.f32 %v1920, %v1949
        %v1959 = vmul.f32 %v1921, %v1949
        %v1960 = vmul.f32 %v1922, %v1949
        %v1961 = vmul.f32 %v1923, %v1949
        %v1962 = vmul.f32 %v1924, %v1949
        %v1963 = vmul.f32 %v1925, %v1949
        %v1964 = vmul.f32 %v1926, %v1949
        %v1965 = vmul.f32 %v1927, %v1949
        %v1966 = vmul.f32 %v1928, %v1949
        %v1967 = vmul.f32 %v1929, %v1949
        %v1968 = vmul.f32 %v1930, %v1949
        %v1969 = vmul.f32 %v1931, %v1949
        %v1970 = vmul.f32 %v1932, %v1949
        %v1971 = vmul.f32 %v1933, %v1949
        %v1972 = vmul.f32 %v1934, %v1949
        %v1973 = vmul.f32 %v1935, %v1949
        %v1974 = vmul.f32 %v1936, %v1949
        %v1975 = vmul.f32 %v1937, %v1949
        %v1976 = vmul.f32 %v1938, %v1949
        %v1977 = vmul.f32 %v1939, %v1949
        %v1978 = vmul.f32 %v1940, %v1949
        %v1979 = vmul.f32 %v1941, %v1949
        %v1980 = vmul.f32 %v1942, %v1949
        %v1981 = vmul.f32 %v1943, %v1949
        %v1982 = vld [vmem:[%s6] sm:$0x1]
        %v1983 = vunpack.c.l.bf16 %v1982
        %v1984 = vlaneseq
        %v1985 = vshrl.u32 %v1984, 7
        %v1986 = vsub.s32 0, %v1985
        %v1987 = vrot.slane %v1983, %v1986
        %v1988 = vadd.f32 %v1950, %v1987
        %v1989 = vadd.f32 %v1951, %v1987
        %v1990 = vadd.f32 %v1952, %v1987
        %v1991 = vadd.f32 %v1953, %v1987
        %v1992 = vadd.f32 %v1954, %v1987
        %v1993 = vadd.f32 %v1955, %v1987
        %v1994 = vadd.f32 %v1956, %v1987
        %v1995 = vadd.f32 %v1957, %v1987
        %v1996 = vadd.f32 %v1958, %v1987
        %v1997 = vadd.f32 %v1959, %v1987
        %v1998 = vadd.f32 %v1960, %v1987
        %v1999 = vadd.f32 %v1961, %v1987
        %v2000 = vadd.f32 %v1962, %v1987
        %v2001 = vadd.f32 %v1963, %v1987
        %v2002 = vadd.f32 %v1964, %v1987
        %v2003 = vadd.f32 %v1965, %v1987
        %v2004 = vadd.f32 %v1966, %v1987
        %v2005 = vadd.f32 %v1967, %v1987
        %v2006 = vadd.f32 %v1968, %v1987
        %v2007 = vadd.f32 %v1969, %v1987
        %v2008 = vadd.f32 %v1970, %v1987
        %v2009 = vadd.f32 %v1971, %v1987
        %v2010 = vadd.f32 %v1972, %v1987
        %v2011 = vadd.f32 %v1973, %v1987
        %v2012 = vadd.f32 %v1974, %v1987
        %v2013 = vadd.f32 %v1975, %v1987
        %v2014 = vadd.f32 %v1976, %v1987
        %v2015 = vadd.f32 %v1977, %v1987
        %v2016 = vadd.f32 %v1978, %v1987
        %v2017 = vadd.f32 %v1979, %v1987
        %v2018 = vadd.f32 %v1980, %v1987
        %v2019 = vadd.f32 %v1981, %v1987
        %v2020 = vpack.c.bf16 %v1989, %v1988
        %v2021 = vpack.c.bf16 %v1991, %v1990
        %v2022 = vpack.c.bf16 %v1993, %v1992
        %v2023 = vpack.c.bf16 %v1995, %v1994
        %v2024 = vpack.c.bf16 %v1997, %v1996
        %v2025 = vpack.c.bf16 %v1999, %v1998
        %v2026 = vpack.c.bf16 %v2001, %v2000
        %v2027 = vpack.c.bf16 %v2003, %v2002
        %v2028 = vpack.c.bf16 %v2005, %v2004
        %v2029 = vpack.c.bf16 %v2007, %v2006
        %v2030 = vpack.c.bf16 %v2009, %v2008
        %v2031 = vpack.c.bf16 %v2011, %v2010
        %v2032 = vpack.c.bf16 %v2013, %v2012
        %v2033 = vpack.c.bf16 %v2015, %v2014
        %v2034 = vpack.c.bf16 %v2017, %v2016
        %v2035 = vpack.c.bf16 %v2019, %v2018
        %v2052 = vunpack.c.l.b16 %v2020
        %v2053 = vunpack.c.h.b16 %v2020
        %v2054 = vunpack.c.l.b16 %v2021
        %v2055 = vunpack.c.h.b16 %v2021
        %v2056 = vunpack.c.l.b16 %v2022
        %v2057 = vunpack.c.h.b16 %v2022
        %v2058 = vunpack.c.l.b16 %v2023
        %v2059 = vunpack.c.h.b16 %v2023
        %v2060 = vunpack.c.l.b16 %v2024
        %v2061 = vunpack.c.h.b16 %v2024
        %v2062 = vunpack.c.l.b16 %v2025
        %v2063 = vunpack.c.h.b16 %v2025
        %v2064 = vunpack.c.l.b16 %v2026
        %v2065 = vunpack.c.h.b16 %v2026
        %v2066 = vunpack.c.l.b16 %v2027
        %v2067 = vunpack.c.h.b16 %v2027
        %v2068 = vunpack.c.l.b16 %v2028
        %v2069 = vunpack.c.h.b16 %v2028
        %v2070 = vunpack.c.l.b16 %v2029
        %v2071 = vunpack.c.h.b16 %v2029
        %v2072 = vunpack.c.l.b16 %v2030
        %v2073 = vunpack.c.h.b16 %v2030
        %v2074 = vunpack.c.l.b16 %v2031
        %v2075 = vunpack.c.h.b16 %v2031
        %v2076 = vunpack.c.l.b16 %v2032
        %v2077 = vunpack.c.h.b16 %v2032
        %v2078 = vunpack.c.l.b16 %v2033
        %v2079 = vunpack.c.h.b16 %v2033
        %v2080 = vunpack.c.l.b16 %v2034
        %v2081 = vunpack.c.h.b16 %v2034
        %v2082 = vunpack.c.l.b16 %v2035
        %v2083 = vunpack.c.h.b16 %v2035
        %v2084 = vpack.c.b16 %v2052, %v2052
        %v2085 = vpack.c.b16 %v2053, %v2053
        %v2086 = vpack.c.b16 %v2054, %v2054
        %v2087 = vpack.c.b16 %v2055, %v2055
        %v2088 = vpack.c.b16 %v2056, %v2056
        %v2089 = vpack.c.b16 %v2057, %v2057
        %v2090 = vpack.c.b16 %v2058, %v2058
        %v2091 = vpack.c.b16 %v2059, %v2059
        %v2092 = vpack.c.b16 %v2060, %v2060
        %v2093 = vpack.c.b16 %v2061, %v2061
        %v2094 = vpack.c.b16 %v2062, %v2062
        %v2095 = vpack.c.b16 %v2063, %v2063
        %v2096 = vpack.c.b16 %v2064, %v2064
        %v2097 = vpack.c.b16 %v2065, %v2065
        %v2098 = vpack.c.b16 %v2066, %v2066
        %v2099 = vpack.c.b16 %v2067, %v2067
        %v2100 = vpack.c.b16 %v2068, %v2068
        %v2101 = vpack.c.b16 %v2069, %v2069
        %v2102 = vpack.c.b16 %v2070, %v2070
        %v2103 = vpack.c.b16 %v2071, %v2071
        %v2104 = vpack.c.b16 %v2072, %v2072
        %v2105 = vpack.c.b16 %v2073, %v2073
        %v2106 = vpack.c.b16 %v2074, %v2074
        %v2107 = vpack.c.b16 %v2075, %v2075
        %v2108 = vpack.c.b16 %v2076, %v2076
        %v2109 = vpack.c.b16 %v2077, %v2077
        %v2110 = vpack.c.b16 %v2078, %v2078
        %v2111 = vpack.c.b16 %v2079, %v2079
        %v2112 = vpack.c.b16 %v2080, %v2080
        %v2113 = vpack.c.b16 %v2081, %v2081
        %v2114 = vpack.c.b16 %v2082, %v2082
        %v2115 = vpack.c.b16 %v2083, %v2083
        %2148 = vst [vmem:[%s333] sm:$0xf] %v2084
        %2149 = vst [vmem:[%s333 + $0x4] sm:$0xf] %v2085
        %2150 = vst [vmem:[%s333 + $0x8] sm:$0xf] %v2086
        %2151 = vst [vmem:[%s333 + $0xc] sm:$0xf] %v2087
        %2152 = vst [vmem:[%s333 + $0x10] sm:$0xf] %v2088
        %2153 = vst [vmem:[%s333 + $0x14] sm:$0xf] %v2089
        %2154 = vst [vmem:[%s333 + $0x18] sm:$0xf] %v2090
        %2155 = vst [vmem:[%s333 + $0x1c] sm:$0xf] %v2091
        %2156 = vst [vmem:[%s333 + $0x20] sm:$0xf] %v2092
        %2157 = vst [vmem:[%s333 + $0x24] sm:$0xf] %v2093
        %2158 = vst [vmem:[%s333 + $0x28] sm:$0xf] %v2094
        %2159 = vst [vmem:[%s333 + $0x2c] sm:$0xf] %v2095
        %2160 = vst [vmem:[%s333 + $0x30] sm:$0xf] %v2096
        %2161 = vst [vmem:[%s333 + $0x34] sm:$0xf] %v2097
        %2162 = vst [vmem:[%s333 + $0x38] sm:$0xf] %v2098
        %2163 = vst [vmem:[%s333 + $0x3c] sm:$0xf] %v2099
        %2164 = vst [vmem:[%s333 + $0x40] sm:$0xf] %v2100
        %2165 = vst [vmem:[%s333 + $0x44] sm:$0xf] %v2101
        %2166 = vst [vmem:[%s333 + $0x48] sm:$0xf] %v2102
        %2167 = vst [vmem:[%s333 + $0x4c] sm:$0xf] %v2103
        %2168 = vst [vmem:[%s333 + $0x50] sm:$0xf] %v2104
        %2169 = vst [vmem:[%s333 + $0x54] sm:$0xf] %v2105
        %2170 = vst [vmem:[%s333 + $0x58] sm:$0xf] %v2106
        %2171 = vst [vmem:[%s333 + $0x5c] sm:$0xf] %v2107
        %2172 = vst [vmem:[%s333 + $0x60] sm:$0xf] %v2108
        %2173 = vst [vmem:[%s333 + $0x64] sm:$0xf] %v2109
        %2174 = vst [vmem:[%s333 + $0x68] sm:$0xf] %v2110
        %2175 = vst [vmem:[%s333 + $0x6c] sm:$0xf] %v2111
        %2176 = vst [vmem:[%s333 + $0x70] sm:$0xf] %v2112
        %2177 = vst [vmem:[%s333 + $0x74] sm:$0xf] %v2113
        %2178 = vst [vmem:[%s333 + $0x78] sm:$0xf] %v2114
        %2179 = vst [vmem:[%s333 + $0x7c] sm:$0xf] %v2115
        %s2180 = sand.u32 %s185, 1
        %s2181 = scalar_lea.sflag [#allocation4], %s2180
        %s2182 = sand.u32 %s185, 1
        %s2183 = smul.addr %s2182, 128
        %s2184 = scalar_lea.vmem [#allocation8], %s2183
        // Predicated region
        $region61: #{tpu_custom_call.1} parent=47 // pred_check
          %p2185 = pneg %p195
        $region62: #{tpu_custom_call.1} parent=47 // pred_check_branch
          %2187 = sbr.rel (%p2185) target = $region64
        $region63: #{tpu_custom_call.1} parent=47 // pred_region
          %s2188 = smul.u32 32, %s25
          %s2189 = ssub.s32 63, %s2188
          %p2190 = scmp.lt.s32.totalorder %s2189, 32
          %s2191 = scalar_select %p2190, %s2189, 32
          %s2192 = smul.u32 64, %s2191
          %s2194 = ssub.s32 2048, %s2192
          %2195 = vsyncadd %s2181, %s2194
          %p2196 = scmp.ne.s32.totalorder 0, %s2192
          %s2197 = smul.addr %s2188, 64
          %s2198 = scalar_lea.hbm %s7, %s2197
          %s2199 = smul.u32 4, %s2191
          %s2200 = sshll.u32 %s2184, 4
          %s2201 = int_to_ptr.vmem [resolvable:$true] %s2200
          %s2202 = sshll.u32 %s2199, 4
          %2206 = dma.vmem_to_hbm [thread:$0]  (%p2196), %s2201, %s2202, %s2198, %s2181, 64, 64, 4
        $region64: #{tpu_custom_call.1} parent=47 // pred_fallthru
          _
      $region48: #{tpu_custom_call.1} parent=5 // pred_fallthru
        _
      %p2207 = scmp.le.s32.totalorder 2, %s20
      // Predicated region
      $region65: #{tpu_custom_call.1} parent=5 // pred_check
        %p2208 = pneg %p2207
      $region66: #{tpu_custom_call.1} parent=5 // pred_check_branch
        %2210 = sbr.rel (%p2208) target = $region68
      $region67: #{tpu_custom_call.1} parent=5 // pred_region
        %s2211 = ssub.s32 %s20, 2
        // Predicated region
        $region69: #{tpu_custom_call.1} parent=67 // pred_check
          %p2212 = pneg %p201
        $region70: #{tpu_custom_call.1} parent=67 // pred_check_branch
          %2214 = sbr.rel (%p2212) target = $region72
        $region71: #{tpu_custom_call.1} parent=67 // pred_region
          %s2215 = sand.u32 %s186, 1
          %s2216 = scalar_lea.sflag [#allocation4], %s2215
          %s2217 = sand.u32 %s186, 1
          %s2218 = smul.addr %s2217, 128
          %s2219 = scalar_lea.vmem [#allocation8], %s2218
          %2220 = dma.done %s2216, 2048
        $region72: #{tpu_custom_call.1} parent=67 // pred_fallthru
          _
      $region68: #{tpu_custom_call.1} parent=5 // pred_fallthru
        _
    $region6: #{tpu_custom_call.1} parent=1 // loop_footer
      %s24 = sadd.s32 1, %s20
    $region7: #{tpu_custom_call.1} parent=1 // loop_footer_branch
      %19 = sbr.rel target = $region3
    $region8: #{tpu_custom_call.1} parent=1 // loop_exit
      _
    %2221 = vsyncpa [#allocation3], 1
    %s2222 = scalar_lea.sflag [#allocation3], 1
    %2223 = vsyncpa %s2222, 1
    %2224 = vsyncpa [#allocation6], 1
    %2225 = vsyncpa [#allocation4], 1
    %s2226 = scalar_lea.sflag [#allocation4], 1
    %2227 = vsyncpa %s2226, 1

</llo_original>
